<compile_context>
chip_gen: v5e
topology: v5e:2x2
jax: 0.10.0
libtpu: 0.0.40
codegen_flags: <defaults>
</compile_context>

<pallas_src>
import functools

import jax
import jax.numpy as jnp
from jax.experimental import pallas as pl
from jax.experimental.pallas import tpu as pltpu

# -------- synthetic config (mirrors cfg.TEST.PHOTOREALISTIC.*) --------------
STYLE_WEIGHT = 0.6
SKIP_CONNECTION_WEIGHT = 0.5
LAYERS = "r11,r21"
SKIP_CONNECTION_TYPE = "AWSC1"


# ----------------------- generation-aware tiling config ----------------------
def _tpu_vmem_capacity():
    try:
        info = pltpu.get_tpu_info()
        cap = getattr(info, "vmem_capacity_bytes", None)
        if cap:
            return int(cap)
    except Exception:
        pass
    return 64 * 1024 * 1024  # conservative default (v7x-sized)


_VMEM_CAP = _tpu_vmem_capacity()
if _VMEM_CAP >= 100 * 1024 * 1024:      # v5e / v6e: 128 MiB physical VMEM
    VMEM_LIMIT = 64 * 1024 * 1024
    TN_PREF = 1024
else:                                   # v7x: 64 MiB physical -> stay small
    VMEM_LIMIT = 32 * 1024 * 1024
    TN_PREF = 512


def _pick_lane_tile(n, pref, min_blocks=1):
    """Largest multiple-of-128 divisor of n that is <= pref; with min_blocks=2
    the tile is capped at n//2 (when possible) so parallel grid axes expose at
    least two blocks for the two v7x TensorCores."""
    if n % 128 != 0:
        return n                       # ragged: full-extent block
    cap = min(pref, n)
    if min_blocks > 1 and n >= min_blocks * 128:
        cap = min(cap, n // min_blocks)
    t = (cap // 128) * 128
    while t >= 128:
        if n % t == 0:
            return t
        t -= 128
    return n


def _pick_k_tile(k, pref=512):
    if k <= pref or k % 128 != 0:
        return k
    t = (min(pref, k) // 128) * 128
    while t >= 128:
        if k % t == 0:
            return t
        t -= 128
    return k


# -------- Pallas flipped matmul (+bias, optional ReLU), lane-dense output ----
def _mm_bias_kernel(w_ref, p_ref, b_ref, o_ref, acc_ref, *, relu):
    # (Cout, tk) @ (tk, tn) accumulated over the K grid axis in f32 scratch;
    # bias + (optional) ReLU fused into the last-K epilogue; bf16 store.
    k = pl.program_id(1)

    @pl.when(k == 0)
    def _():
        acc_ref[...] = jnp.zeros_like(acc_ref)

    acc_ref[...] += jnp.dot(w_ref[...], p_ref[...],
                            preferred_element_type=jnp.float32)

    @pl.when(k == pl.num_programs(1) - 1)
    def _():
        acc = acc_ref[...] + b_ref[...]
        if relu:
            acc = jnp.maximum(acc, 0.0)
        o_ref[...] = acc.astype(o_ref.dtype)


def pallas_matmul_bias(w, p, bias, relu=False, out_dtype=jnp.bfloat16):
    # w: (Cout, K), p: (K, M) bf16, bias: (Cout,) -> (Cout, M) out_dtype.
    # Output lane dim is M -> unmasked full-lane stores.
    Cout, K = w.shape
    K2, M = p.shape
    assert K == K2
    pad = (-M) % 128
    if pad:
        # TODO(synk): replace this pad/slice round trip with a masked tail
        # store (pltpu.store + lane mask); never triggered at these shapes.
        p = jnp.pad(p, ((0, 0), (0, pad)))
    Mp = M + pad
    tn = _pick_lane_tile(Mp, TN_PREF, min_blocks=2)
    tk = _pick_k_tile(K)
    bias2 = bias.reshape(Cout, 1).astype(jnp.float32)
    out = pl.pallas_call(
        functools.partial(_mm_bias_kernel, relu=relu),
        out_shape=jax.ShapeDtypeStruct((Cout, Mp), out_dtype),
        grid=(Mp // tn, K // tk),
        in_specs=[
            pl.BlockSpec((Cout, tk), lambda j, k: (0, k)),
            pl.BlockSpec((tk, tn), lambda j, k: (k, j)),
            pl.BlockSpec((Cout, 1), lambda j, k: (0, 0)),
        ],
        out_specs=pl.BlockSpec((Cout, tn), lambda j, k: (0, j)),
        scratch_shapes=[pltpu.VMEM((Cout, tn), jnp.float32)],
        compiler_params=pltpu.CompilerParams(
            dimension_semantics=("parallel", "arbitrary"),
            vmem_limit_bytes=VMEM_LIMIT),
    )(w.astype(jnp.bfloat16), p.astype(jnp.bfloat16), bias2)
    return out[:, :M] if pad else out


# ---------------------------- conv via (K, M) im2col --------------------------
def _im2col_km(x_cbhw, kh, kw, stride, pad):
    # x: (C, B, H, W) bf16 -> patches (C*kh*kw, B*Ho*Wo) bf16.
    # TODO(synk): move patch extraction into the conv kernel (DMA a
    # (C, tile+halo) slab and build the taps in VMEM) to avoid materializing
    # the kh*kw-expanded tensor in HBM entirely.
    C, B, H, W = x_cbhw.shape
    xp = jnp.pad(x_cbhw, ((0, 0), (0, 0), (pad, pad), (pad, pad)))
    Ho = (H + 2 * pad - kh) // stride + 1
    Wo = (W + 2 * pad - kw) // stride + 1
    taps = []
    for dy in range(kh):
        for dx in range(kw):
            taps.append(
                xp[:, :, dy:dy + Ho * stride:stride, dx:dx + Wo * stride:stride])
    pat = jnp.stack(taps, axis=1)                     # (C, kh*kw, B, Ho, Wo) bf16
    return pat.reshape(C * kh * kw, B * Ho * Wo), Ho, Wo, B


def conv2d_cbhw(x, w, b, stride=1, pad=1, relu=False, out_dtype=jnp.bfloat16):
    # x: (Cin, B, H, W) CBHW; w: (Cout, Cin, kh, kw); b: (Cout,)
    Cout, Cin, kh, kw = w.shape
    patches, Ho, Wo, B = _im2col_km(x.astype(jnp.bfloat16), kh, kw, stride, pad)
    wmat = w.reshape(Cout, Cin * kh * kw)             # K order matches patches
    out = pallas_matmul_bias(wmat, patches, b, relu=relu, out_dtype=out_dtype)
    return out.reshape(Cout, B, Ho, Wo)


# ------------- MAST attention transform + fused style-weight blend ------------
def _mast_blend_kernel(cm_ref, sm_ref, cf_ref, sf_ref, o_ref,
                       m_sc, l_sc, acc_sc, cfn_sc, *, w, eps, ns_valid, tns):
    # Flash-style online softmax over style-position tiles (grid axis 2).
    # cf/sf stream in as bf16; f32 only for stats / accumulator.
    j = pl.program_id(2)

    @pl.when(j == 0)
    def _():
        m_sc[...] = jnp.full(m_sc.shape, -jnp.inf, m_sc.dtype)
        l_sc[...] = jnp.zeros(l_sc.shape, l_sc.dtype)
        acc_sc[...] = jnp.zeros(acc_sc.shape, acc_sc.dtype)
        # normalized content tile is invariant along j -> compute once, cache
        cfc = cf_ref[...].astype(jnp.float32) - cm_ref[0]          # (C, tnc)
        cfn_sc[...] = (cfc * jax.lax.rsqrt(
            jnp.sum(cfc * cfc, axis=0, keepdims=True) + eps)).astype(jnp.bfloat16)

    sfc = sf_ref[...].astype(jnp.float32) - sm_ref[0]              # (C, tns)
    sfn = sfc * jax.lax.rsqrt(jnp.sum(sfc * sfc, axis=0, keepdims=True) + eps)

    # scores (tns, tnc): contract over channels on the MXU (bf16 in, f32 acc).
    # TODO(synk): for VGG-sized C, pre-transpose the style operand once per
    # tile if the Mosaic lowering emits a per-step vxpose here.
    s = jax.lax.dot_general(
        sfn.astype(jnp.bfloat16), cfn_sc[...],
        (((0,), (0,)), ((), ())), preferred_element_type=jnp.float32)
    if ns_valid is not None:
        row = jax.lax.broadcasted_iota(jnp.int32, (tns, 1), 0) + j * tns
        s = jnp.where(row < ns_valid, s, -jnp.inf)   # mask padded style cols

    m_prev = m_sc[...]                                # (1, tnc)
    m_new = jnp.maximum(m_prev, jnp.max(s, axis=0, keepdims=True))
    alpha = jnp.exp(m_prev - m_new)
    p = jnp.exp(s - m_new)                            # (tns, tnc)
    l_sc[...] = alpha * l_sc[...] + jnp.sum(p, axis=0, keepdims=True)
    acc_sc[...] = alpha * acc_sc[...] + jnp.dot(
        sf_ref[...], p.astype(jnp.bfloat16),
        preferred_element_type=jnp.float32)           # (C, tnc)
    m_sc[...] = m_new

    @pl.when(j == pl.num_programs(2) - 1)
    def _():
        styled = acc_sc[...] * pl.reciprocal(l_sc[...], approx=True)
        # fused blend: w * MAST(cf, sf) + (1 - w) * cf   (no extra HBM pass)
        blended = w * styled + (1.0 - w) * cf_ref[...].astype(jnp.float32)
        o_ref[...] = blended.astype(o_ref.dtype)


def mast_blend(cf_cbhw, sf_cbhw, style_weight, eps=1e-5):
    # cf: (C, B, Hc, Wc); sf: (C, B, Hs, Ws) bf16 -> blended csf, same layout,
    # streamed to/from the kernel in the native (C, B*N) layout (no transposes).
    # TODO(synk): segmentation-guided matching (content/style seg paths) is not
    # implemented; unguided attention matching only.
    C, B, Hc, Wc = cf_cbhw.shape
    Hs, Ws = sf_cbhw.shape[2], sf_cbhw.shape[3]
    Nc, Ns = Hc * Wc, Hs * Ws
    cf3 = cf_cbhw.reshape(C, B, Nc)
    sf3 = sf_cbhw.reshape(C, B, Ns)

    # per-batch per-channel means: tiny (B, C, 1) tensors.
    # TODO(synk): fuse these reductions into the encoder conv epilogue to avoid
    # one extra HBM read of each feature map.
    cmean = jnp.transpose(jnp.mean(cf3.astype(jnp.float32), axis=2), (1, 0))[:, :, None]
    smean = jnp.transpose(jnp.mean(sf3.astype(jnp.float32), axis=2), (1, 0))[:, :, None]

    # pad per-batch position axis to a lane multiple; style pad masked in-kernel
    pc = (-Nc) % 128
    ps = (-Ns) % 128
    if pc:
        cf3 = jnp.pad(cf3, ((0, 0), (0, 0), (0, pc)))
    if ps:
        sf3 = jnp.pad(sf3, ((0, 0), (0, 0), (0, ps)))
    Npc, Nps = Nc + pc, Ns + ps
    cf2 = cf3.reshape(C, B * Npc).astype(jnp.bfloat16)
    sf2 = sf3.reshape(C, B * Nps).astype(jnp.bfloat16)

    tnc = _pick_lane_tile(Npc, TN_PREF, min_blocks=2)
    tns = _pick_lane_tile(Nps, TN_PREF, min_blocks=1)
    nci, nsj = Npc // tnc, Nps // tns

    out = pl.pallas_call(
        functools.partial(_mast_blend_kernel, w=float(style_weight),
                          eps=float(eps), ns_valid=(Ns if ps else None), tns=tns),
        out_shape=jax.ShapeDtypeStruct((C, B * Npc), jnp.bfloat16),
        grid=(B, nci, nsj),
        in_specs=[
            pl.BlockSpec((1, C, 1), lambda b, i, j: (b, 0, 0)),
            pl.BlockSpec((1, C, 1), lambda b, i, j: (b, 0, 0)),
            pl.BlockSpec((C, tnc), lambda b, i, j: (0, b * nci + i)),
            pl.BlockSpec((C, tns), lambda b, i, j: (0, b * nsj + j)),
        ],
        out_specs=pl.BlockSpec((C, tnc), lambda b, i, j: (0, b * nci + i)),
        scratch_shapes=[
            pltpu.VMEM((1, tnc), jnp.float32),    # running max
            pltpu.VMEM((1, tnc), jnp.float32),    # running denom
            pltpu.VMEM((C, tnc), jnp.float32),    # running value accumulator
            pltpu.VMEM((C, tnc), jnp.bfloat16),   # cached normalized content
        ],
        compiler_params=pltpu.CompilerParams(
            dimension_semantics=("parallel", "parallel", "arbitrary"),
            vmem_limit_bytes=VMEM_LIMIT),
    )(cmean, smean, cf2, sf2)

    out = out.reshape(C, B, Npc)
    if pc:
        out = out[:, :, :Nc]
    return out.reshape(C, B, Hc, Wc)


# ------------------------- encoder / decoder / model -------------------------
def init_params(key):
    ks = jax.random.split(key, 8)
    p = {}
    p["enc_w1"] = 0.1 * jax.random.normal(ks[0], (16, 3, 3, 3), jnp.float32)
    p["enc_b1"] = 0.05 * jax.random.normal(ks[1], (16,), jnp.float32)
    p["enc_w2"] = 0.1 * jax.random.normal(ks[2], (32, 16, 3, 3), jnp.float32)
    p["enc_b2"] = 0.05 * jax.random.normal(ks[3], (32,), jnp.float32)
    p["dec_w1"] = 0.1 * jax.random.normal(ks[4], (16, 32, 3, 3), jnp.float32)
    p["dec_b1"] = 0.05 * jax.random.normal(ks[5], (16,), jnp.float32)
    p["dec_w2"] = 0.1 * jax.random.normal(ks[6], (3, 16, 3, 3), jnp.float32)
    p["dec_b2"] = 0.05 * jax.random.normal(ks[7], (3,), jnp.float32)
    return p


def encoder(p, x_cbhw):
    # 'r11': conv3x3 s1 + ReLU ; 'r21': conv3x3 s2 + ReLU (downsample x2)
    r11 = conv2d_cbhw(x_cbhw, p["enc_w1"], p["enc_b1"], stride=1, pad=1, relu=True)
    r21 = conv2d_cbhw(r11, p["enc_w2"], p["enc_b2"], stride=2, pad=1, relu=True)
    return {"r11": r11, "r21": r21}


def upsample_nearest2x_cbhw(x):
    return jnp.repeat(jnp.repeat(x, 2, axis=2), 2, axis=3)


def decoder_awsc1(p, csf, skip_weight):
    # DecoderAWSC1: decode deepest blended feature, additively fuse the shallower
    # blended feature with a fixed skip-connection weight (AWSC1).
    x = conv2d_cbhw(csf["r21"], p["dec_w1"], p["dec_b1"], stride=1, pad=1, relu=True)
    x = upsample_nearest2x_cbhw(x)                    # (16, B, 16, 16) bf16
    # AWSC1 additive weighted skip: plain XLA so it fuses with the upsample and
    # the next conv's patch extraction (no standalone kernel / HBM boundary).
    x = x + skip_weight * csf["r11"]
    return conv2d_cbhw(x, p["dec_w2"], p["dec_b2"], stride=1, pad=1, relu=False,
                       out_dtype=jnp.float32)


def nst_forward(p, content, style):
    # content/style: NCHW (B, 3, H, W); one layout change in, one out.
    c = jnp.transpose(content, (1, 0, 2, 3)).astype(jnp.bfloat16)
    s = jnp.transpose(style, (1, 0, 2, 3)).astype(jnp.bfloat16)
    cf = encoder(p, c)
    sf = encoder(p, s)
    csf = {}
    for layer in LAYERS.split(","):
        if STYLE_WEIGHT > 0.0:
            # blend w*MAST + (1-w)*cf is fused into the MAST kernel epilogue
            csf[layer] = mast_blend(cf[layer], sf[layer], STYLE_WEIGHT)
        else:
            csf[layer] = cf[layer]     # explicit conditional (no truthiness bug)
    out_cbhw = decoder_awsc1(p, csf, SKIP_CONNECTION_WEIGHT)
    return jnp.transpose(out_cbhw, (1, 0, 2, 3)).astype(jnp.float32)  # NCHW


if __name__ == "__main__":
    key = jax.random.PRNGKey(0)
    kc, ks, kp = jax.random.split(key, 3)
    content = jax.random.uniform(kc, (2, 3, 16, 16), dtype=jnp.float32)
    style = jax.random.uniform(ks, (2, 3, 16, 16), dtype=jnp.float32)
    params = init_params(kp)

    fwd = jax.jit(nst_forward)
    out = fwd(params, content, style)
    out = jax.block_until_ready(out)
    assert out.shape == (2, 3, 16, 16) and out.dtype == jnp.float32
    assert bool(jnp.all(jnp.isfinite(out)))
    print("KERNEL_OK")
</pallas_src>

<mosaic_0001>
module attributes {stable_mosaic.version = 11 : i64} {
  func.func @_mm_bias_kernel(%arg0: i32, %arg1: i32, %arg2: memref<16x27xbf16, #tpu.memory_space<vmem>>, %arg3: memref<27x256xbf16, #tpu.memory_space<vmem>>, %arg4: memref<16x1xf32, #tpu.memory_space<vmem>>, %arg5: memref<16x256xbf16, #tpu.memory_space<vmem>>, %arg6: memref<16x256xf32, #tpu.memory_space<vmem>>) attributes {dimension_semantics = [#tpu.dimension_semantics<parallel>, #tpu.dimension_semantics<arbitrary>], iteration_bounds = array<i64: 2, 1>, scalar_prefetch = 0 : i64, scratch_operands = 1 : i64, tpu.core_type = #tpu.core_type<tc>, window_params = [{transform_indices = @transform_0, window_bounds = array<i64: 16, 27>}, {transform_indices = @transform_1, window_bounds = array<i64: 27, 256>}, {pipeline_mode = #tpu.pipeline_mode<synchronous>, transform_indices = @transform_2, window_bounds = array<i64: 16, 1>}, {transform_indices = @transform_3, window_bounds = array<i64: 16, 256>}]} {
    %c0_i32 = arith.constant 0 : i32
    %0 = arith.cmpi eq, %arg1, %c0_i32 : i32
    %1 = arith.extui %0 : i1 to i32
    %c0_i32_0 = arith.constant 0 : i32
    %2 = arith.cmpi ne, %1, %c0_i32_0 : i32
    scf.if %2 {
      %cst_10 = arith.constant 0.000000e+00 : f32
      %12 = vector.broadcast %cst_10 : f32 to vector<16x256xf32>
      %c0_11 = arith.constant 0 : index
      %c0_12 = arith.constant 0 : index
      %13 = vector.load %arg6[%c0_11, %c0_12] : memref<16x256xf32, #tpu.memory_space<vmem>>, vector<16x256xf32>
      tpu.vector_store %arg6[%c0_11, %c0_12], %12 {strides = array<i32>} : memref<16x256xf32, #tpu.memory_space<vmem>>, vector<16x256xf32>,
    } else {
    }
    %c0 = arith.constant 0 : index
    %c0_1 = arith.constant 0 : index
    %3 = vector.load %arg6[%c0, %c0_1] : memref<16x256xf32, #tpu.memory_space<vmem>>, vector<16x256xf32>
    %c0_2 = arith.constant 0 : index
    %c0_3 = arith.constant 0 : index
    %4 = vector.load %arg2[%c0_2, %c0_3] : memref<16x27xbf16, #tpu.memory_space<vmem>>, vector<16x27xbf16>
    %c0_4 = arith.constant 0 : index
    %c0_5 = arith.constant 0 : index
    %5 = vector.load %arg3[%c0_4, %c0_5] : memref<27x256xbf16, #tpu.memory_space<vmem>>, vector<27x256xbf16>
    %cst = arith.constant dense<0.000000e+00> : vector<16x256xf32>
    %6 = tpu.matmul %4, %5, %cst {dimension_numbers = #tpu.dot_dimension_numbers<[1], [0], [0], [1], [0, 0, 1, 1], [], []>} : vector<16x27xbf16>, vector<27x256xbf16>, vector<16x256xf32> -> vector<16x256xf32>
    %7 = arith.addf %3, %6 : vector<16x256xf32>
    %c0_6 = arith.constant 0 : index
    %c0_7 = arith.constant 0 : index
    %8 = vector.load %arg6[%c0_6, %c0_7] : memref<16x256xf32, #tpu.memory_space<vmem>>, vector<16x256xf32>
    tpu.vector_store %arg6[%c0_6, %c0_7], %7 {strides = array<i32>} : memref<16x256xf32, #tpu.memory_space<vmem>>, vector<16x256xf32>,
    %c0_i32_8 = arith.constant 0 : i32
    %9 = arith.cmpi eq, %arg1, %c0_i32_8 : i32
    %10 = arith.extui %9 : i1 to i32
    %c0_i32_9 = arith.constant 0 : i32
    %11 = arith.cmpi ne, %10, %c0_i32_9 : i32
    scf.if %11 {
      %c0_10 = arith.constant 0 : index
      %c0_11 = arith.constant 0 : index
      %12 = vector.load %arg6[%c0_10, %c0_11] : memref<16x256xf32, #tpu.memory_space<vmem>>, vector<16x256xf32>
      %c0_12 = arith.constant 0 : index
      %c0_13 = arith.constant 0 : index
      %13 = vector.load %arg4[%c0_12, %c0_13] : memref<16x1xf32, #tpu.memory_space<vmem>>, vector<16x1xf32>
      %14 = vector.broadcast %13 : vector<16x1xf32> to vector<16x256xf32>
      %15 = arith.addf %12, %14 : vector<16x256xf32>
      %cst_14 = arith.constant 0.000000e+00 : f32
      %16 = vector.broadcast %cst_14 : f32 to vector<16x256xf32>
      %17 = arith.maximumf %15, %16 : vector<16x256xf32>
      %18 = arith.truncf %17 : vector<16x256xf32> to vector<16x256xbf16>
      %c0_15 = arith.constant 0 : index
      %c0_16 = arith.constant 0 : index
      %19 = vector.load %arg5[%c0_15, %c0_16] : memref<16x256xbf16, #tpu.memory_space<vmem>>, vector<16x256xbf16>
      tpu.vector_store %arg5[%c0_15, %c0_16], %18 {strides = array<i32>} : memref<16x256xbf16, #tpu.memory_space<vmem>>, vector<16x256xbf16>,
    } else {
    }
    return
  }
  func.func @transform_0(%arg0: i32, %arg1: i32) -> (i32, i32) {
    %c0_i32 = arith.constant 0 : i32
    %c0_i32_0 = arith.constant 0 : i32
    return %c0_i32, %arg1 : i32, i32
  }
  func.func @transform_1(%arg0: i32, %arg1: i32) -> (i32, i32) {
    %c0_i32 = arith.constant 0 : i32
    return %arg1, %arg0 : i32, i32
  }
  func.func @transform_2(%arg0: i32, %arg1: i32) -> (i32, i32) {
    %c0_i32 = arith.constant 0 : i32
    %c0_i32_0 = arith.constant 0 : i32
    %c0_i32_1 = arith.constant 0 : i32
    return %c0_i32, %c0_i32_0 : i32, i32
  }
  func.func @transform_3(%arg0: i32, %arg1: i32) -> (i32, i32) {
    %c0_i32 = arith.constant 0 : i32
    %c0_i32_0 = arith.constant 0 : i32
    return %c0_i32, %arg0 : i32, i32
  }
}

module attributes {stable_mosaic.version = 11 : i64} {
  func.func @_mm_bias_kernel(%arg0: i32, %arg1: i32, %arg2: memref<32x144xbf16, #tpu.memory_space<vmem>>, %arg3: memref<144x128xbf16, #tpu.memory_space<vmem>>, %arg4: memref<32x1xf32, #tpu.memory_space<vmem>>, %arg5: memref<32x128xbf16, #tpu.memory_space<vmem>>, %arg6: memref<32x128xf32, #tpu.memory_space<vmem>>) attributes {dimension_semantics = [#tpu.dimension_semantics<parallel>, #tpu.dimension_semantics<arbitrary>], iteration_bounds = array<i64: 1, 1>, scalar_prefetch = 0 : i64, scratch_operands = 1 : i64, tpu.core_type = #tpu.core_type<tc>, window_params = [{transform_indices = @transform_0, window_bounds = array<i64: 32, 144>}, {transform_indices = @transform_1, window_bounds = array<i64: 144, 128>}, {pipeline_mode = #tpu.pipeline_mode<synchronous>, transform_indices = @transform_2, window_bounds = array<i64: 32, 1>}, {transform_indices = @transform_3, window_bounds = array<i64: 32, 128>}]} {
    %c0_i32 = arith.constant 0 : i32
    %0 = arith.cmpi eq, %arg1, %c0_i32 : i32
    %1 = arith.extui %0 : i1 to i32
    %c0_i32_0 = arith.constant 0 : i32
    %2 = arith.cmpi ne, %1, %c0_i32_0 : i32
    scf.if %2 {
      %cst_10 = arith.constant 0.000000e+00 : f32
      %12 = vector.broadcast %cst_10 : f32 to vector<32x128xf32>
      %c0_11 = arith.constant 0 : index
      %c0_12 = arith.constant 0 : index
      %13 = vector.load %arg6[%c0_11, %c0_12] : memref<32x128xf32, #tpu.memory_space<vmem>>, vector<32x128xf32>
      tpu.vector_store %arg6[%c0_11, %c0_12], %12 {strides = array<i32>} : memref<32x128xf32, #tpu.memory_space<vmem>>, vector<32x128xf32>,
    } else {
    }
    %c0 = arith.constant 0 : index
    %c0_1 = arith.constant 0 : index
    %3 = vector.load %arg6[%c0, %c0_1] : memref<32x128xf32, #tpu.memory_space<vmem>>, vector<32x128xf32>
    %c0_2 = arith.constant 0 : index
    %c0_3 = arith.constant 0 : index
    %4 = vector.load %arg2[%c0_2, %c0_3] : memref<32x144xbf16, #tpu.memory_space<vmem>>, vector<32x144xbf16>
    %c0_4 = arith.constant 0 : index
    %c0_5 = arith.constant 0 : index
    %5 = vector.load %arg3[%c0_4, %c0_5] : memref<144x128xbf16, #tpu.memory_space<vmem>>, vector<144x128xbf16>
    %cst = arith.constant dense<0.000000e+00> : vector<32x128xf32>
    %6 = tpu.matmul %4, %5, %cst {dimension_numbers = #tpu.dot_dimension_numbers<[1], [0], [0], [1], [0, 0, 1, 1], [], []>} : vector<32x144xbf16>, vector<144x128xbf16>, vector<32x128xf32> -> vector<32x128xf32>
    %7 = arith.addf %3, %6 : vector<32x128xf32>
    %c0_6 = arith.constant 0 : index
    %c0_7 = arith.constant 0 : index
    %8 = vector.load %arg6[%c0_6, %c0_7] : memref<32x128xf32, #tpu.memory_space<vmem>>, vector<32x128xf32>
    tpu.vector_store %arg6[%c0_6, %c0_7], %7 {strides = array<i32>} : memref<32x128xf32, #tpu.memory_space<vmem>>, vector<32x128xf32>,
    %c0_i32_8 = arith.constant 0 : i32
    %9 = arith.cmpi eq, %arg1, %c0_i32_8 : i32
    %10 = arith.extui %9 : i1 to i32
    %c0_i32_9 = arith.constant 0 : i32
    %11 = arith.cmpi ne, %10, %c0_i32_9 : i32
    scf.if %11 {
      %c0_10 = arith.constant 0 : index
      %c0_11 = arith.constant 0 : index
      %12 = vector.load %arg6[%c0_10, %c0_11] : memref<32x128xf32, #tpu.memory_space<vmem>>, vector<32x128xf32>
      %c0_12 = arith.constant 0 : index
      %c0_13 = arith.constant 0 : index
      %13 = vector.load %arg4[%c0_12, %c0_13] : memref<32x1xf32, #tpu.memory_space<vmem>>, vector<32x1xf32>
      %14 = vector.broadcast %13 : vector<32x1xf32> to vector<32x128xf32>
      %15 = arith.addf %12, %14 : vector<32x128xf32>
      %cst_14 = arith.constant 0.000000e+00 : f32
      %16 = vector.broadcast %cst_14 : f32 to vector<32x128xf32>
      %17 = arith.maximumf %15, %16 : vector<32x128xf32>
      %18 = arith.truncf %17 : vector<32x128xf32> to vector<32x128xbf16>
      %c0_15 = arith.constant 0 : index
      %c0_16 = arith.constant 0 : index
      %19 = vector.load %arg5[%c0_15, %c0_16] : memref<32x128xbf16, #tpu.memory_space<vmem>>, vector<32x128xbf16>
      tpu.vector_store %arg5[%c0_15, %c0_16], %18 {strides = array<i32>} : memref<32x128xbf16, #tpu.memory_space<vmem>>, vector<32x128xbf16>,
    } else {
    }
    return
  }
  func.func @transform_0(%arg0: i32, %arg1: i32) -> (i32, i32) {
    %c0_i32 = arith.constant 0 : i32
    %c0_i32_0 = arith.constant 0 : i32
    return %c0_i32, %arg1 : i32, i32
  }
  func.func @transform_1(%arg0: i32, %arg1: i32) -> (i32, i32) {
    %c0_i32 = arith.constant 0 : i32
    return %arg1, %arg0 : i32, i32
  }
  func.func @transform_2(%arg0: i32, %arg1: i32) -> (i32, i32) {
    %c0_i32 = arith.constant 0 : i32
    %c0_i32_0 = arith.constant 0 : i32
    %c0_i32_1 = arith.constant 0 : i32
    return %c0_i32, %c0_i32_0 : i32, i32
  }
  func.func @transform_3(%arg0: i32, %arg1: i32) -> (i32, i32) {
    %c0_i32 = arith.constant 0 : i32
    %c0_i32_0 = arith.constant 0 : i32
    return %c0_i32, %arg0 : i32, i32
  }
}

module attributes {stable_mosaic.version = 11 : i64} {
  func.func @_mast_blend_kernel(%arg0: i32, %arg1: i32, %arg2: i32, %arg3: memref<1x32x1xf32, #tpu.memory_space<vmem>>, %arg4: memref<1x32x1xf32, #tpu.memory_space<vmem>>, %arg5: memref<32x128xbf16, #tpu.memory_space<vmem>>, %arg6: memref<32x128xbf16, #tpu.memory_space<vmem>>, %arg7: memref<32x128xbf16, #tpu.memory_space<vmem>>, %arg8: memref<1x128xf32, #tpu.memory_space<vmem>>, %arg9: memref<1x128xf32, #tpu.memory_space<vmem>>, %arg10: memref<32x128xf32, #tpu.memory_space<vmem>>, %arg11: memref<32x128xbf16, #tpu.memory_space<vmem>>) attributes {dimension_semantics = [#tpu.dimension_semantics<parallel>, #tpu.dimension_semantics<parallel>, #tpu.dimension_semantics<arbitrary>], iteration_bounds = array<i64: 2, 1, 1>, scalar_prefetch = 0 : i64, scratch_operands = 4 : i64, tpu.core_type = #tpu.core_type<tc>, window_params = [{transform_indices = @transform_0, window_bounds = array<i64: 1, 32, 1>}, {transform_indices = @transform_1, window_bounds = array<i64: 1, 32, 1>}, {transform_indices = @transform_2, window_bounds = array<i64: 32, 128>}, {transform_indices = @transform_3, window_bounds = array<i64: 32, 128>}, {transform_indices = @transform_4, window_bounds = array<i64: 32, 128>}]} {
    %c0_i32 = arith.constant 0 : i32
    %0 = arith.cmpi eq, %arg2, %c0_i32 : i32
    %1 = arith.extui %0 : i1 to i32
    %c0_i32_0 = arith.constant 0 : i32
    %2 = arith.cmpi ne, %1, %c0_i32_0 : i32
    scf.if %2 {
      %cst_29 = arith.constant 0xFF800000 : f32
      %57 = vector.broadcast %cst_29 : f32 to vector<1x128xf32>
      %c0_30 = arith.constant 0 : index
      %c0_31 = arith.constant 0 : index
      %58 = vector.load %arg8[%c0_30, %c0_31] : memref<1x128xf32, #tpu.memory_space<vmem>>, vector<1x128xf32>
      tpu.vector_store %arg8[%c0_30, %c0_31], %57 {strides = array<i32>} : memref<1x128xf32, #tpu.memory_space<vmem>>, vector<1x128xf32>,
      %cst_32 = arith.constant 0.000000e+00 : f32
      %59 = vector.broadcast %cst_32 : f32 to vector<1x128xf32>
      %c0_33 = arith.constant 0 : index
      %c0_34 = arith.constant 0 : index
      %60 = vector.load %arg9[%c0_33, %c0_34] : memref<1x128xf32, #tpu.memory_space<vmem>>, vector<1x128xf32>
      tpu.vector_store %arg9[%c0_33, %c0_34], %59 {strides = array<i32>} : memref<1x128xf32, #tpu.memory_space<vmem>>, vector<1x128xf32>,
      %cst_35 = arith.constant 0.000000e+00 : f32
      %61 = vector.broadcast %cst_35 : f32 to vector<32x128xf32>
      %c0_36 = arith.constant 0 : index
      %c0_37 = arith.constant 0 : index
      %62 = vector.load %arg10[%c0_36, %c0_37] : memref<32x128xf32, #tpu.memory_space<vmem>>, vector<32x128xf32>
      tpu.vector_store %arg10[%c0_36, %c0_37], %61 {strides = array<i32>} : memref<32x128xf32, #tpu.memory_space<vmem>>, vector<32x128xf32>,
      %c0_38 = arith.constant 0 : index
      %c0_39 = arith.constant 0 : index
      %63 = vector.load %arg5[%c0_38, %c0_39] : memref<32x128xbf16, #tpu.memory_space<vmem>>, vector<32x128xbf16>
      %64 = arith.extf %63 : vector<32x128xbf16> to vector<32x128xf32>
      %c0_40 = arith.constant 0 : index
      %c0_41 = arith.constant 0 : index
      %c0_42 = arith.constant 0 : index
      %65 = vector.load %arg3[%c0_40, %c0_41, %c0_42] : memref<1x32x1xf32, #tpu.memory_space<vmem>>, vector<1x32x1xf32>
      %66 = vector.shape_cast %65 : vector<1x32x1xf32> to vector<32x1xf32>
      %67 = vector.broadcast %66 : vector<32x1xf32> to vector<32x128xf32>
      %68 = arith.subf %64, %67 : vector<32x128xf32>
      %69 = arith.mulf %68, %68 : vector<32x128xf32>
      %cst_43 = arith.constant dense<0.000000e+00> : vector<128xf32>
      %70 = vector.multi_reduction <add>, %69, %cst_43 [0] : vector<32x128xf32> to vector<128xf32>
      %71 = vector.shape_cast %70 : vector<128xf32> to vector<1x128xf32>
      %cst_44 = arith.constant 9.99999974E-6 : f32
      %72 = vector.broadcast %cst_44 : f32 to vector<1x128xf32>
      %73 = arith.addf %71, %72 : vector<1x128xf32>
      %74 = math.rsqrt %73 : vector<1x128xf32>
      %75 = vector.broadcast %74 : vector<1x128xf32> to vector<32x128xf32>
      %76 = arith.mulf %68, %75 : vector<32x128xf32>
      %77 = arith.truncf %76 : vector<32x128xf32> to vector<32x128xbf16>
      %c0_45 = arith.constant 0 : index
      %c0_46 = arith.constant 0 : index
      %78 = vector.load %arg11[%c0_45, %c0_46] : memref<32x128xbf16, #tpu.memory_space<vmem>>, vector<32x128xbf16>
      tpu.vector_store %arg11[%c0_45, %c0_46], %77 {strides = array<i32>} : memref<32x128xbf16, #tpu.memory_space<vmem>>, vector<32x128xbf16>,
    } else {
    }
    %c0 = arith.constant 0 : index
    %c0_1 = arith.constant 0 : index
    %3 = vector.load %arg6[%c0, %c0_1] : memref<32x128xbf16, #tpu.memory_space<vmem>>, vector<32x128xbf16>
    %4 = arith.extf %3 : vector<32x128xbf16> to vector<32x128xf32>
    %c0_2 = arith.constant 0 : index
    %c0_3 = arith.constant 0 : index
    %c0_4 = arith.constant 0 : index
    %5 = vector.load %arg4[%c0_2, %c0_3, %c0_4] : memref<1x32x1xf32, #tpu.memory_space<vmem>>, vector<1x32x1xf32>
    %6 = vector.shape_cast %5 : vector<1x32x1xf32> to vector<32x1xf32>
    %7 = vector.broadcast %6 : vector<32x1xf32> to vector<32x128xf32>
    %8 = arith.subf %4, %7 : vector<32x128xf32>
    %9 = arith.mulf %8, %8 : vector<32x128xf32>
    %cst = arith.constant dense<0.000000e+00> : vector<128xf32>
    %10 = vector.multi_reduction <add>, %9, %cst [0] : vector<32x128xf32> to vector<128xf32>
    %11 = vector.shape_cast %10 : vector<128xf32> to vector<1x128xf32>
    %cst_5 = arith.constant 9.99999974E-6 : f32
    %12 = vector.broadcast %cst_5 : f32 to vector<1x128xf32>
    %13 = arith.addf %11, %12 : vector<1x128xf32>
    %14 = math.rsqrt %13 : vector<1x128xf32>
    %15 = vector.broadcast %14 : vector<1x128xf32> to vector<32x128xf32>
    %16 = arith.mulf %8, %15 : vector<32x128xf32>
    %17 = arith.truncf %16 : vector<32x128xf32> to vector<32x128xbf16>
    %c0_6 = arith.constant 0 : index
    %c0_7 = arith.constant 0 : index
    %18 = vector.load %arg11[%c0_6, %c0_7] : memref<32x128xbf16, #tpu.memory_space<vmem>>, vector<32x128xbf16>
    %cst_8 = arith.constant dense<0.000000e+00> : vector<128x128xf32>
    %19 = tpu.matmul %17, %18, %cst_8 {dimension_numbers = #tpu.dot_dimension_numbers<[0], [0], [1], [1], [0, 1, 1, 1], [], []>} : vector<32x128xbf16>, vector<32x128xbf16>, vector<128x128xf32> -> vector<128x128xf32>
    %20 = tpu.iota {dimensions = array<i32: 0>} : vector<128x1xi32>
    %c128_i32 = arith.constant 128 : i32
    %21 = arith.muli %arg2, %c128_i32 : i32
    %22 = vector.broadcast %21 : i32 to vector<128x1xi32>
    %23 = arith.addi %20, %22 : vector<128x1xi32>
    %c64_i32 = arith.constant 64 : i32
    %24 = vector.broadcast %c64_i32 : i32 to vector<128x1xi32>
    %25 = arith.cmpi slt, %23, %24 : vector<128x1xi32>
    %cst_9 = arith.constant 0xFF800000 : f32
    %26 = vector.shape_cast %25 : vector<128x1xi1> to vector<128x1xi1>
    %27 = vector.broadcast %26 : vector<128x1xi1> to vector<128x128xi1>
    %28 = vector.broadcast %cst_9 : f32 to vector<128x128xf32>
    %29 = arith.select %27, %19, %28 : vector<128x128xi1>, vector<128x128xf32>
    %c0_10 = arith.constant 0 : index
    %c0_11 = arith.constant 0 : index
    %30 = vector.load %arg8[%c0_10, %c0_11] : memref<1x128xf32, #tpu.memory_space<vmem>>, vector<1x128xf32>
    %cst_12 = arith.constant dense<0xFF800000> : vector<128xf32>
    %31 = vector.multi_reduction <maximumf>, %29, %cst_12 [0] : vector<128x128xf32> to vector<128xf32>
    %32 = vector.shape_cast %31 : vector<128xf32> to vector<1x128xf32>
    %33 = arith.maximumf %30, %32 : vector<1x128xf32>
    %34 = arith.subf %30, %33 : vector<1x128xf32>
    %35 = math.exp %34 : vector<1x128xf32>
    %36 = vector.broadcast %33 : vector<1x128xf32> to vector<128x128xf32>
    %37 = arith.subf %29, %36 : vector<128x128xf32>
    %38 = math.exp %37 : vector<128x128xf32>
    %c0_13 = arith.constant 0 : index
    %c0_14 = arith.constant 0 : index
    %39 = vector.load %arg9[%c0_13, %c0_14] : memref<1x128xf32, #tpu.memory_space<vmem>>, vector<1x128xf32>
    %40 = arith.mulf %35, %39 : vector<1x128xf32>
    %cst_15 = arith.constant dense<0.000000e+00> : vector<128xf32>
    %41 = vector.multi_reduction <add>, %38, %cst_15 [0] : vector<128x128xf32> to vector<128xf32>
    %42 = vector.shape_cast %41 : vector<128xf32> to vector<1x128xf32>
    %43 = arith.addf %40, %42 : vector<1x128xf32>
    %c0_16 = arith.constant 0 : index
    %c0_17 = arith.constant 0 : index
    %44 = vector.load %arg9[%c0_16, %c0_17] : memref<1x128xf32, #tpu.memory_space<vmem>>, vector<1x128xf32>
    tpu.vector_store %arg9[%c0_16, %c0_17], %43 {strides = array<i32>} : memref<1x128xf32, #tpu.memory_space<vmem>>, vector<1x128xf32>,
    %c0_18 = arith.constant 0 : index
    %c0_19 = arith.constant 0 : index
    %45 = vector.load %arg10[%c0_18, %c0_19] : memref<32x128xf32, #tpu.memory_space<vmem>>, vector<32x128xf32>
    %46 = vector.broadcast %35 : vector<1x128xf32> to vector<32x128xf32>
    %47 = arith.mulf %46, %45 : vector<32x128xf32>
    %c0_20 = arith.constant 0 : index
    %c0_21 = arith.constant 0 : index
    %48 = vector.load %arg6[%c0_20, %c0_21] : memref<32x128xbf16, #tpu.memory_space<vmem>>, vector<32x128xbf16>
    %49 = arith.truncf %38 : vector<128x128xf32> to vector<128x128xbf16>
    %cst_22 = arith.constant dense<0.000000e+00> : vector<32x128xf32>
    %50 = tpu.matmul %48, %49, %cst_22 {dimension_numbers = #tpu.dot_dimension_numbers<[1], [0], [0], [1], [0, 0, 1, 1], [], []>} : vector<32x128xbf16>, vector<128x128xbf16>, vector<32x128xf32> -> vector<32x128xf32>
    %51 = arith.addf %47, %50 : vector<32x128xf32>
    %c0_23 = arith.constant 0 : index
    %c0_24 = arith.constant 0 : index
    %52 = vector.load %arg10[%c0_23, %c0_24] : memref<32x128xf32, #tpu.memory_space<vmem>>, vector<32x128xf32>
    tpu.vector_store %arg10[%c0_23, %c0_24], %51 {strides = array<i32>} : memref<32x128xf32, #tpu.memory_space<vmem>>, vector<32x128xf32>,
    %c0_25 = arith.constant 0 : index
    %c0_26 = arith.constant 0 : index
    %53 = vector.load %arg8[%c0_25, %c0_26] : memref<1x128xf32, #tpu.memory_space<vmem>>, vector<1x128xf32>
    tpu.vector_store %arg8[%c0_25, %c0_26], %33 {strides = array<i32>} : memref<1x128xf32, #tpu.memory_space<vmem>>, vector<1x128xf32>,
    %c0_i32_27 = arith.constant 0 : i32
    %54 = arith.cmpi eq, %arg2, %c0_i32_27 : i32
    %55 = arith.extui %54 : i1 to i32
    %c0_i32_28 = arith.constant 0 : i32
    %56 = arith.cmpi ne, %55, %c0_i32_28 : i32
    scf.if %56 {
      %c0_29 = arith.constant 0 : index
      %c0_30 = arith.constant 0 : index
      %57 = vector.load %arg10[%c0_29, %c0_30] : memref<32x128xf32, #tpu.memory_space<vmem>>, vector<32x128xf32>
      %c0_31 = arith.constant 0 : index
      %c0_32 = arith.constant 0 : index
      %58 = vector.load %arg9[%c0_31, %c0_32] : memref<1x128xf32, #tpu.memory_space<vmem>>, vector<1x128xf32>
      %59 = tpu.reciprocal %58 {approx = true} : vector<1x128xf32> -> vector<1x128xf32>
      %60 = vector.broadcast %59 : vector<1x128xf32> to vector<32x128xf32>
      %61 = arith.mulf %57, %60 : vector<32x128xf32>
      %cst_33 = arith.constant 6.000000e-01 : f32
      %62 = vector.broadcast %cst_33 : f32 to vector<32x128xf32>
      %63 = arith.mulf %62, %61 : vector<32x128xf32>
      %c0_34 = arith.constant 0 : index
      %c0_35 = arith.constant 0 : index
      %64 = vector.load %arg5[%c0_34, %c0_35] : memref<32x128xbf16, #tpu.memory_space<vmem>>, vector<32x128xbf16>
      %65 = arith.extf %64 : vector<32x128xbf16> to vector<32x128xf32>
      %cst_36 = arith.constant 4.000000e-01 : f32
      %66 = vector.broadcast %cst_36 : f32 to vector<32x128xf32>
      %67 = arith.mulf %66, %65 : vector<32x128xf32>
      %68 = arith.addf %63, %67 : vector<32x128xf32>
      %69 = arith.truncf %68 : vector<32x128xf32> to vector<32x128xbf16>
      %c0_37 = arith.constant 0 : index
      %c0_38 = arith.constant 0 : index
      %70 = vector.load %arg7[%c0_37, %c0_38] : memref<32x128xbf16, #tpu.memory_space<vmem>>, vector<32x128xbf16>
      tpu.vector_store %arg7[%c0_37, %c0_38], %69 {strides = array<i32>} : memref<32x128xbf16, #tpu.memory_space<vmem>>, vector<32x128xbf16>,
    } else {
    }
    return
  }
  func.func @transform_0(%arg0: i32, %arg1: i32, %arg2: i32) -> (i32, i32, i32) {
    %c0_i32 = arith.constant 0 : i32
    %c0_i32_0 = arith.constant 0 : i32
    %c0_i32_1 = arith.constant 0 : i32
    return %arg0, %c0_i32, %c0_i32_0 : i32, i32, i32
  }
  func.func @transform_1(%arg0: i32, %arg1: i32, %arg2: i32) -> (i32, i32, i32) {
    %c0_i32 = arith.constant 0 : i32
    %c0_i32_0 = arith.constant 0 : i32
    %c0_i32_1 = arith.constant 0 : i32
    return %arg0, %c0_i32, %c0_i32_0 : i32, i32, i32
  }
  func.func @transform_2(%arg0: i32, %arg1: i32, %arg2: i32) -> (i32, i32) {
    %c1_i32 = arith.constant 1 : i32
    %0 = arith.muli %arg0, %c1_i32 : i32
    %1 = arith.addi %0, %arg1 : i32
    %c0_i32 = arith.constant 0 : i32
    %c0_i32_0 = arith.constant 0 : i32
    return %c0_i32, %1 : i32, i32
  }
  func.func @transform_3(%arg0: i32, %arg1: i32, %arg2: i32) -> (i32, i32) {
    %c1_i32 = arith.constant 1 : i32
    %0 = arith.muli %arg0, %c1_i32 : i32
    %1 = arith.addi %0, %arg2 : i32
    %c0_i32 = arith.constant 0 : i32
    %c0_i32_0 = arith.constant 0 : i32
    return %c0_i32, %1 : i32, i32
  }
  func.func @transform_4(%arg0: i32, %arg1: i32, %arg2: i32) -> (i32, i32) {
    %c1_i32 = arith.constant 1 : i32
    %0 = arith.muli %arg0, %c1_i32 : i32
    %1 = arith.addi %0, %arg1 : i32
    %c0_i32 = arith.constant 0 : i32
    %c0_i32_0 = arith.constant 0 : i32
    return %c0_i32, %1 : i32, i32
  }
}

module attributes {stable_mosaic.version = 11 : i64} {
  func.func @_mm_bias_kernel(%arg0: i32, %arg1: i32, %arg2: memref<16x288xbf16, #tpu.memory_space<vmem>>, %arg3: memref<288x128xbf16, #tpu.memory_space<vmem>>, %arg4: memref<16x1xf32, #tpu.memory_space<vmem>>, %arg5: memref<16x128xbf16, #tpu.memory_space<vmem>>, %arg6: memref<16x128xf32, #tpu.memory_space<vmem>>) attributes {dimension_semantics = [#tpu.dimension_semantics<parallel>, #tpu.dimension_semantics<arbitrary>], iteration_bounds = array<i64: 1, 1>, scalar_prefetch = 0 : i64, scratch_operands = 1 : i64, tpu.core_type = #tpu.core_type<tc>, window_params = [{transform_indices = @transform_0, window_bounds = array<i64: 16, 288>}, {transform_indices = @transform_1, window_bounds = array<i64: 288, 128>}, {pipeline_mode = #tpu.pipeline_mode<synchronous>, transform_indices = @transform_2, window_bounds = array<i64: 16, 1>}, {transform_indices = @transform_3, window_bounds = array<i64: 16, 128>}]} {
    %c0_i32 = arith.constant 0 : i32
    %0 = arith.cmpi eq, %arg1, %c0_i32 : i32
    %1 = arith.extui %0 : i1 to i32
    %c0_i32_0 = arith.constant 0 : i32
    %2 = arith.cmpi ne, %1, %c0_i32_0 : i32
    scf.if %2 {
      %cst_10 = arith.constant 0.000000e+00 : f32
      %12 = vector.broadcast %cst_10 : f32 to vector<16x128xf32>
      %c0_11 = arith.constant 0 : index
      %c0_12 = arith.constant 0 : index
      %13 = vector.load %arg6[%c0_11, %c0_12] : memref<16x128xf32, #tpu.memory_space<vmem>>, vector<16x128xf32>
      tpu.vector_store %arg6[%c0_11, %c0_12], %12 {strides = array<i32>} : memref<16x128xf32, #tpu.memory_space<vmem>>, vector<16x128xf32>,
    } else {
    }
    %c0 = arith.constant 0 : index
    %c0_1 = arith.constant 0 : index
    %3 = vector.load %arg6[%c0, %c0_1] : memref<16x128xf32, #tpu.memory_space<vmem>>, vector<16x128xf32>
    %c0_2 = arith.constant 0 : index
    %c0_3 = arith.constant 0 : index
    %4 = vector.load %arg2[%c0_2, %c0_3] : memref<16x288xbf16, #tpu.memory_space<vmem>>, vector<16x288xbf16>
    %c0_4 = arith.constant 0 : index
    %c0_5 = arith.constant 0 : index
    %5 = vector.load %arg3[%c0_4, %c0_5] : memref<288x128xbf16, #tpu.memory_space<vmem>>, vector<288x128xbf16>
    %cst = arith.constant dense<0.000000e+00> : vector<16x128xf32>
    %6 = tpu.matmul %4, %5, %cst {dimension_numbers = #tpu.dot_dimension_numbers<[1], [0], [0], [1], [0, 0, 1, 1], [], []>} : vector<16x288xbf16>, vector<288x128xbf16>, vector<16x128xf32> -> vector<16x128xf32>
    %7 = arith.addf %3, %6 : vector<16x128xf32>
    %c0_6 = arith.constant 0 : index
    %c0_7 = arith.constant 0 : index
    %8 = vector.load %arg6[%c0_6, %c0_7] : memref<16x128xf32, #tpu.memory_space<vmem>>, vector<16x128xf32>
    tpu.vector_store %arg6[%c0_6, %c0_7], %7 {strides = array<i32>} : memref<16x128xf32, #tpu.memory_space<vmem>>, vector<16x128xf32>,
    %c0_i32_8 = arith.constant 0 : i32
    %9 = arith.cmpi eq, %arg1, %c0_i32_8 : i32
    %10 = arith.extui %9 : i1 to i32
    %c0_i32_9 = arith.constant 0 : i32
    %11 = arith.cmpi ne, %10, %c0_i32_9 : i32
    scf.if %11 {
      %c0_10 = arith.constant 0 : index
      %c0_11 = arith.constant 0 : index
      %12 = vector.load %arg6[%c0_10, %c0_11] : memref<16x128xf32, #tpu.memory_space<vmem>>, vector<16x128xf32>
      %c0_12 = arith.constant 0 : index
      %c0_13 = arith.constant 0 : index
      %13 = vector.load %arg4[%c0_12, %c0_13] : memref<16x1xf32, #tpu.memory_space<vmem>>, vector<16x1xf32>
      %14 = vector.broadcast %13 : vector<16x1xf32> to vector<16x128xf32>
      %15 = arith.addf %12, %14 : vector<16x128xf32>
      %cst_14 = arith.constant 0.000000e+00 : f32
      %16 = vector.broadcast %cst_14 : f32 to vector<16x128xf32>
      %17 = arith.maximumf %15, %16 : vector<16x128xf32>
      %18 = arith.truncf %17 : vector<16x128xf32> to vector<16x128xbf16>
      %c0_15 = arith.constant 0 : index
      %c0_16 = arith.constant 0 : index
      %19 = vector.load %arg5[%c0_15, %c0_16] : memref<16x128xbf16, #tpu.memory_space<vmem>>, vector<16x128xbf16>
      tpu.vector_store %arg5[%c0_15, %c0_16], %18 {strides = array<i32>} : memref<16x128xbf16, #tpu.memory_space<vmem>>, vector<16x128xbf16>,
    } else {
    }
    return
  }
  func.func @transform_0(%arg0: i32, %arg1: i32) -> (i32, i32) {
    %c0_i32 = arith.constant 0 : i32
    %c0_i32_0 = arith.constant 0 : i32
    return %c0_i32, %arg1 : i32, i32
  }
  func.func @transform_1(%arg0: i32, %arg1: i32) -> (i32, i32) {
    %c0_i32 = arith.constant 0 : i32
    return %arg1, %arg0 : i32, i32
  }
  func.func @transform_2(%arg0: i32, %arg1: i32) -> (i32, i32) {
    %c0_i32 = arith.constant 0 : i32
    %c0_i32_0 = arith.constant 0 : i32
    %c0_i32_1 = arith.constant 0 : i32
    return %c0_i32, %c0_i32_0 : i32, i32
  }
  func.func @transform_3(%arg0: i32, %arg1: i32) -> (i32, i32) {
    %c0_i32 = arith.constant 0 : i32
    %c0_i32_0 = arith.constant 0 : i32
    return %c0_i32, %arg0 : i32, i32
  }
}

module attributes {stable_mosaic.version = 11 : i64} {
  func.func @_mast_blend_kernel(%arg0: i32, %arg1: i32, %arg2: i32, %arg3: memref<1x16x1xf32, #tpu.memory_space<vmem>>, %arg4: memref<1x16x1xf32, #tpu.memory_space<vmem>>, %arg5: memref<16x128xbf16, #tpu.memory_space<vmem>>, %arg6: memref<16x256xbf16, #tpu.memory_space<vmem>>, %arg7: memref<16x128xbf16, #tpu.memory_space<vmem>>, %arg8: memref<1x128xf32, #tpu.memory_space<vmem>>, %arg9: memref<1x128xf32, #tpu.memory_space<vmem>>, %arg10: memref<16x128xf32, #tpu.memory_space<vmem>>, %arg11: memref<16x128xbf16, #tpu.memory_space<vmem>>) attributes {dimension_semantics = [#tpu.dimension_semantics<parallel>, #tpu.dimension_semantics<parallel>, #tpu.dimension_semantics<arbitrary>], iteration_bounds = array<i64: 2, 2, 1>, scalar_prefetch = 0 : i64, scratch_operands = 4 : i64, tpu.core_type = #tpu.core_type<tc>, window_params = [{transform_indices = @transform_0, window_bounds = array<i64: 1, 16, 1>}, {transform_indices = @transform_1, window_bounds = array<i64: 1, 16, 1>}, {transform_indices = @transform_2, window_bounds = array<i64: 16, 128>}, {transform_indices = @transform_3, window_bounds = array<i64: 16, 256>}, {transform_indices = @transform_4, window_bounds = array<i64: 16, 128>}]} {
    %c0_i32 = arith.constant 0 : i32
    %0 = arith.cmpi eq, %arg2, %c0_i32 : i32
    %1 = arith.extui %0 : i1 to i32
    %c0_i32_0 = arith.constant 0 : i32
    %2 = arith.cmpi ne, %1, %c0_i32_0 : i32
    scf.if %2 {
      %cst_28 = arith.constant 0xFF800000 : f32
      %47 = vector.broadcast %cst_28 : f32 to vector<1x128xf32>
      %c0_29 = arith.constant 0 : index
      %c0_30 = arith.constant 0 : index
      %48 = vector.load %arg8[%c0_29, %c0_30] : memref<1x128xf32, #tpu.memory_space<vmem>>, vector<1x128xf32>
      tpu.vector_store %arg8[%c0_29, %c0_30], %47 {strides = array<i32>} : memref<1x128xf32, #tpu.memory_space<vmem>>, vector<1x128xf32>,
      %cst_31 = arith.constant 0.000000e+00 : f32
      %49 = vector.broadcast %cst_31 : f32 to vector<1x128xf32>
      %c0_32 = arith.constant 0 : index
      %c0_33 = arith.constant 0 : index
      %50 = vector.load %arg9[%c0_32, %c0_33] : memref<1x128xf32, #tpu.memory_space<vmem>>, vector<1x128xf32>
      tpu.vector_store %arg9[%c0_32, %c0_33], %49 {strides = array<i32>} : memref<1x128xf32, #tpu.memory_space<vmem>>, vector<1x128xf32>,
      %cst_34 = arith.constant 0.000000e+00 : f32
      %51 = vector.broadcast %cst_34 : f32 to vector<16x128xf32>
      %c0_35 = arith.constant 0 : index
      %c0_36 = arith.constant 0 : index
      %52 = vector.load %arg10[%c0_35, %c0_36] : memref<16x128xf32, #tpu.memory_space<vmem>>, vector<16x128xf32>
      tpu.vector_store %arg10[%c0_35, %c0_36], %51 {strides = array<i32>} : memref<16x128xf32, #tpu.memory_space<vmem>>, vector<16x128xf32>,
      %c0_37 = arith.constant 0 : index
      %c0_38 = arith.constant 0 : index
      %53 = vector.load %arg5[%c0_37, %c0_38] : memref<16x128xbf16, #tpu.memory_space<vmem>>, vector<16x128xbf16>
      %54 = arith.extf %53 : vector<16x128xbf16> to vector<16x128xf32>
      %c0_39 = arith.constant 0 : index
      %c0_40 = arith.constant 0 : index
      %c0_41 = arith.constant 0 : index
      %55 = vector.load %arg3[%c0_39, %c0_40, %c0_41] : memref<1x16x1xf32, #tpu.memory_space<vmem>>, vector<1x16x1xf32>
      %56 = vector.shape_cast %55 : vector<1x16x1xf32> to vector<16x1xf32>
      %57 = vector.broadcast %56 : vector<16x1xf32> to vector<16x128xf32>
      %58 = arith.subf %54, %57 : vector<16x128xf32>
      %59 = arith.mulf %58, %58 : vector<16x128xf32>
      %cst_42 = arith.constant dense<0.000000e+00> : vector<128xf32>
      %60 = vector.multi_reduction <add>, %59, %cst_42 [0] : vector<16x128xf32> to vector<128xf32>
      %61 = vector.shape_cast %60 : vector<128xf32> to vector<1x128xf32>
      %cst_43 = arith.constant 9.99999974E-6 : f32
      %62 = vector.broadcast %cst_43 : f32 to vector<1x128xf32>
      %63 = arith.addf %61, %62 : vector<1x128xf32>
      %64 = math.rsqrt %63 : vector<1x128xf32>
      %65 = vector.broadcast %64 : vector<1x128xf32> to vector<16x128xf32>
      %66 = arith.mulf %58, %65 : vector<16x128xf32>
      %67 = arith.truncf %66 : vector<16x128xf32> to vector<16x128xbf16>
      %c0_44 = arith.constant 0 : index
      %c0_45 = arith.constant 0 : index
      %68 = vector.load %arg11[%c0_44, %c0_45] : memref<16x128xbf16, #tpu.memory_space<vmem>>, vector<16x128xbf16>
      tpu.vector_store %arg11[%c0_44, %c0_45], %67 {strides = array<i32>} : memref<16x128xbf16, #tpu.memory_space<vmem>>, vector<16x128xbf16>,
    } else {
    }
    %c0 = arith.constant 0 : index
    %c0_1 = arith.constant 0 : index
    %3 = vector.load %arg6[%c0, %c0_1] : memref<16x256xbf16, #tpu.memory_space<vmem>>, vector<16x256xbf16>
    %4 = arith.extf %3 : vector<16x256xbf16> to vector<16x256xf32>
    %c0_2 = arith.constant 0 : index
    %c0_3 = arith.constant 0 : index
    %c0_4 = arith.constant 0 : index
    %5 = vector.load %arg4[%c0_2, %c0_3, %c0_4] : memref<1x16x1xf32, #tpu.memory_space<vmem>>, vector<1x16x1xf32>
    %6 = vector.shape_cast %5 : vector<1x16x1xf32> to vector<16x1xf32>
    %7 = vector.broadcast %6 : vector<16x1xf32> to vector<16x256xf32>
    %8 = arith.subf %4, %7 : vector<16x256xf32>
    %9 = arith.mulf %8, %8 : vector<16x256xf32>
    %cst = arith.constant dense<0.000000e+00> : vector<256xf32>
    %10 = vector.multi_reduction <add>, %9, %cst [0] : vector<16x256xf32> to vector<256xf32>
    %11 = vector.shape_cast %10 : vector<256xf32> to vector<1x256xf32>
    %cst_5 = arith.constant 9.99999974E-6 : f32
    %12 = vector.broadcast %cst_5 : f32 to vector<1x256xf32>
    %13 = arith.addf %11, %12 : vector<1x256xf32>
    %14 = math.rsqrt %13 : vector<1x256xf32>
    %15 = vector.broadcast %14 : vector<1x256xf32> to vector<16x256xf32>
    %16 = arith.mulf %8, %15 : vector<16x256xf32>
    %17 = arith.truncf %16 : vector<16x256xf32> to vector<16x256xbf16>
    %c0_6 = arith.constant 0 : index
    %c0_7 = arith.constant 0 : index
    %18 = vector.load %arg11[%c0_6, %c0_7] : memref<16x128xbf16, #tpu.memory_space<vmem>>, vector<16x128xbf16>
    %cst_8 = arith.constant dense<0.000000e+00> : vector<256x128xf32>
    %19 = tpu.matmul %17, %18, %cst_8 {dimension_numbers = #tpu.dot_dimension_numbers<[0], [0], [1], [1], [0, 1, 1, 1], [], []>} : vector<16x256xbf16>, vector<16x128xbf16>, vector<256x128xf32> -> vector<256x128xf32>
    %c0_9 = arith.constant 0 : index
    %c0_10 = arith.constant 0 : index
    %20 = vector.load %arg8[%c0_9, %c0_10] : memref<1x128xf32, #tpu.memory_space<vmem>>, vector<1x128xf32>
    %cst_11 = arith.constant dense<0xFF800000> : vector<128xf32>
    %21 = vector.multi_reduction <maximumf>, %19, %cst_11 [0] : vector<256x128xf32> to vector<128xf32>
    %22 = vector.shape_cast %21 : vector<128xf32> to vector<1x128xf32>
    %23 = arith.maximumf %20, %22 : vector<1x128xf32>
    %24 = arith.subf %20, %23 : vector<1x128xf32>
    %25 = math.exp %24 : vector<1x128xf32>
    %26 = vector.broadcast %23 : vector<1x128xf32> to vector<256x128xf32>
    %27 = arith.subf %19, %26 : vector<256x128xf32>
    %28 = math.exp %27 : vector<256x128xf32>
    %c0_12 = arith.constant 0 : index
    %c0_13 = arith.constant 0 : index
    %29 = vector.load %arg9[%c0_12, %c0_13] : memref<1x128xf32, #tpu.memory_space<vmem>>, vector<1x128xf32>
    %30 = arith.mulf %25, %29 : vector<1x128xf32>
    %cst_14 = arith.constant dense<0.000000e+00> : vector<128xf32>
    %31 = vector.multi_reduction <add>, %28, %cst_14 [0] : vector<256x128xf32> to vector<128xf32>
    %32 = vector.shape_cast %31 : vector<128xf32> to vector<1x128xf32>
    %33 = arith.addf %30, %32 : vector<1x128xf32>
    %c0_15 = arith.constant 0 : index
    %c0_16 = arith.constant 0 : index
    %34 = vector.load %arg9[%c0_15, %c0_16] : memref<1x128xf32, #tpu.memory_space<vmem>>, vector<1x128xf32>
    tpu.vector_store %arg9[%c0_15, %c0_16], %33 {strides = array<i32>} : memref<1x128xf32, #tpu.memory_space<vmem>>, vector<1x128xf32>,
    %c0_17 = arith.constant 0 : index
    %c0_18 = arith.constant 0 : index
    %35 = vector.load %arg10[%c0_17, %c0_18] : memref<16x128xf32, #tpu.memory_space<vmem>>, vector<16x128xf32>
    %36 = vector.broadcast %25 : vector<1x128xf32> to vector<16x128xf32>
    %37 = arith.mulf %36, %35 : vector<16x128xf32>
    %c0_19 = arith.constant 0 : index
    %c0_20 = arith.constant 0 : index
    %38 = vector.load %arg6[%c0_19, %c0_20] : memref<16x256xbf16, #tpu.memory_space<vmem>>, vector<16x256xbf16>
    %39 = arith.truncf %28 : vector<256x128xf32> to vector<256x128xbf16>
    %cst_21 = arith.constant dense<0.000000e+00> : vector<16x128xf32>
    %40 = tpu.matmul %38, %39, %cst_21 {dimension_numbers = #tpu.dot_dimension_numbers<[1], [0], [0], [1], [0, 0, 1, 1], [], []>} : vector<16x256xbf16>, vector<256x128xbf16>, vector<16x128xf32> -> vector<16x128xf32>
    %41 = arith.addf %37, %40 : vector<16x128xf32>
    %c0_22 = arith.constant 0 : index
    %c0_23 = arith.constant 0 : index
    %42 = vector.load %arg10[%c0_22, %c0_23] : memref<16x128xf32, #tpu.memory_space<vmem>>, vector<16x128xf32>
    tpu.vector_store %arg10[%c0_22, %c0_23], %41 {strides = array<i32>} : memref<16x128xf32, #tpu.memory_space<vmem>>, vector<16x128xf32>,
    %c0_24 = arith.constant 0 : index
    %c0_25 = arith.constant 0 : index
    %43 = vector.load %arg8[%c0_24, %c0_25] : memref<1x128xf32, #tpu.memory_space<vmem>>, vector<1x128xf32>
    tpu.vector_store %arg8[%c0_24, %c0_25], %23 {strides = array<i32>} : memref<1x128xf32, #tpu.memory_space<vmem>>, vector<1x128xf32>,
    %c0_i32_26 = arith.constant 0 : i32
    %44 = arith.cmpi eq, %arg2, %c0_i32_26 : i32
    %45 = arith.extui %44 : i1 to i32
    %c0_i32_27 = arith.constant 0 : i32
    %46 = arith.cmpi ne, %45, %c0_i32_27 : i32
    scf.if %46 {
      %c0_28 = arith.constant 0 : index
      %c0_29 = arith.constant 0 : index
      %47 = vector.load %arg10[%c0_28, %c0_29] : memref<16x128xf32, #tpu.memory_space<vmem>>, vector<16x128xf32>
      %c0_30 = arith.constant 0 : index
      %c0_31 = arith.constant 0 : index
      %48 = vector.load %arg9[%c0_30, %c0_31] : memref<1x128xf32, #tpu.memory_space<vmem>>, vector<1x128xf32>
      %49 = tpu.reciprocal %48 {approx = true} : vector<1x128xf32> -> vector<1x128xf32>
      %50 = vector.broadcast %49 : vector<1x128xf32> to vector<16x128xf32>
      %51 = arith.mulf %47, %50 : vector<16x128xf32>
      %cst_32 = arith.constant 6.000000e-01 : f32
      %52 = vector.broadcast %cst_32 : f32 to vector<16x128xf32>
      %53 = arith.mulf %52, %51 : vector<16x128xf32>
      %c0_33 = arith.constant 0 : index
      %c0_34 = arith.constant 0 : index
      %54 = vector.load %arg5[%c0_33, %c0_34] : memref<16x128xbf16, #tpu.memory_space<vmem>>, vector<16x128xbf16>
      %55 = arith.extf %54 : vector<16x128xbf16> to vector<16x128xf32>
      %cst_35 = arith.constant 4.000000e-01 : f32
      %56 = vector.broadcast %cst_35 : f32 to vector<16x128xf32>
      %57 = arith.mulf %56, %55 : vector<16x128xf32>
      %58 = arith.addf %53, %57 : vector<16x128xf32>
      %59 = arith.truncf %58 : vector<16x128xf32> to vector<16x128xbf16>
      %c0_36 = arith.constant 0 : index
      %c0_37 = arith.constant 0 : index
      %60 = vector.load %arg7[%c0_36, %c0_37] : memref<16x128xbf16, #tpu.memory_space<vmem>>, vector<16x128xbf16>
      tpu.vector_store %arg7[%c0_36, %c0_37], %59 {strides = array<i32>} : memref<16x128xbf16, #tpu.memory_space<vmem>>, vector<16x128xbf16>,
    } else {
    }
    return
  }
  func.func @transform_0(%arg0: i32, %arg1: i32, %arg2: i32) -> (i32, i32, i32) {
    %c0_i32 = arith.constant 0 : i32
    %c0_i32_0 = arith.constant 0 : i32
    %c0_i32_1 = arith.constant 0 : i32
    return %arg0, %c0_i32, %c0_i32_0 : i32, i32, i32
  }
  func.func @transform_1(%arg0: i32, %arg1: i32, %arg2: i32) -> (i32, i32, i32) {
    %c0_i32 = arith.constant 0 : i32
    %c0_i32_0 = arith.constant 0 : i32
    %c0_i32_1 = arith.constant 0 : i32
    return %arg0, %c0_i32, %c0_i32_0 : i32, i32, i32
  }
  func.func @transform_2(%arg0: i32, %arg1: i32, %arg2: i32) -> (i32, i32) {
    %c2_i32 = arith.constant 2 : i32
    %0 = arith.muli %arg0, %c2_i32 : i32
    %1 = arith.addi %0, %arg1 : i32
    %c0_i32 = arith.constant 0 : i32
    %c0_i32_0 = arith.constant 0 : i32
    return %c0_i32, %1 : i32, i32
  }
  func.func @transform_3(%arg0: i32, %arg1: i32, %arg2: i32) -> (i32, i32) {
    %c1_i32 = arith.constant 1 : i32
    %0 = arith.muli %arg0, %c1_i32 : i32
    %1 = arith.addi %0, %arg2 : i32
    %c0_i32 = arith.constant 0 : i32
    %c0_i32_0 = arith.constant 0 : i32
    return %c0_i32, %1 : i32, i32
  }
  func.func @transform_4(%arg0: i32, %arg1: i32, %arg2: i32) -> (i32, i32) {
    %c2_i32 = arith.constant 2 : i32
    %0 = arith.muli %arg0, %c2_i32 : i32
    %1 = arith.addi %0, %arg1 : i32
    %c0_i32 = arith.constant 0 : i32
    %c0_i32_0 = arith.constant 0 : i32
    return %c0_i32, %1 : i32, i32
  }
}

module attributes {stable_mosaic.version = 11 : i64} {
  func.func @_mm_bias_kernel(%arg0: i32, %arg1: i32, %arg2: memref<3x144xbf16, #tpu.memory_space<vmem>>, %arg3: memref<144x256xbf16, #tpu.memory_space<vmem>>, %arg4: memref<3x1xf32, #tpu.memory_space<vmem>>, %arg5: memref<3x256xf32, #tpu.memory_space<vmem>>, %arg6: memref<3x256xf32, #tpu.memory_space<vmem>>) attributes {dimension_semantics = [#tpu.dimension_semantics<parallel>, #tpu.dimension_semantics<arbitrary>], iteration_bounds = array<i64: 2, 1>, scalar_prefetch = 0 : i64, scratch_operands = 1 : i64, tpu.core_type = #tpu.core_type<tc>, window_params = [{transform_indices = @transform_0, window_bounds = array<i64: 3, 144>}, {transform_indices = @transform_1, window_bounds = array<i64: 144, 256>}, {pipeline_mode = #tpu.pipeline_mode<synchronous>, transform_indices = @transform_2, window_bounds = array<i64: 3, 1>}, {transform_indices = @transform_3, window_bounds = array<i64: 3, 256>}]} {
    %c0_i32 = arith.constant 0 : i32
    %0 = arith.cmpi eq, %arg1, %c0_i32 : i32
    %1 = arith.extui %0 : i1 to i32
    %c0_i32_0 = arith.constant 0 : i32
    %2 = arith.cmpi ne, %1, %c0_i32_0 : i32
    scf.if %2 {
      %cst_10 = arith.constant 0.000000e+00 : f32
      %12 = vector.broadcast %cst_10 : f32 to vector<3x256xf32>
      %c0_11 = arith.constant 0 : index
      %c0_12 = arith.constant 0 : index
      %13 = vector.load %arg6[%c0_11, %c0_12] : memref<3x256xf32, #tpu.memory_space<vmem>>, vector<3x256xf32>
      tpu.vector_store %arg6[%c0_11, %c0_12], %12 {strides = array<i32>} : memref<3x256xf32, #tpu.memory_space<vmem>>, vector<3x256xf32>,
    } else {
    }
    %c0 = arith.constant 0 : index
    %c0_1 = arith.constant 0 : index
    %3 = vector.load %arg6[%c0, %c0_1] : memref<3x256xf32, #tpu.memory_space<vmem>>, vector<3x256xf32>
    %c0_2 = arith.constant 0 : index
    %c0_3 = arith.constant 0 : index
    %4 = vector.load %arg2[%c0_2, %c0_3] : memref<3x144xbf16, #tpu.memory_space<vmem>>, vector<3x144xbf16>
    %c0_4 = arith.constant 0 : index
    %c0_5 = arith.constant 0 : index
    %5 = vector.load %arg3[%c0_4, %c0_5] : memref<144x256xbf16, #tpu.memory_space<vmem>>, vector<144x256xbf16>
    %cst = arith.constant dense<0.000000e+00> : vector<3x256xf32>
    %6 = tpu.matmul %4, %5, %cst {dimension_numbers = #tpu.dot_dimension_numbers<[1], [0], [0], [1], [0, 0, 1, 1], [], []>} : vector<3x144xbf16>, vector<144x256xbf16>, vector<3x256xf32> -> vector<3x256xf32>
    %7 = arith.addf %3, %6 : vector<3x256xf32>
    %c0_6 = arith.constant 0 : index
    %c0_7 = arith.constant 0 : index
    %8 = vector.load %arg6[%c0_6, %c0_7] : memref<3x256xf32, #tpu.memory_space<vmem>>, vector<3x256xf32>
    tpu.vector_store %arg6[%c0_6, %c0_7], %7 {strides = array<i32>} : memref<3x256xf32, #tpu.memory_space<vmem>>, vector<3x256xf32>,
    %c0_i32_8 = arith.constant 0 : i32
    %9 = arith.cmpi eq, %arg1, %c0_i32_8 : i32
    %10 = arith.extui %9 : i1 to i32
    %c0_i32_9 = arith.constant 0 : i32
    %11 = arith.cmpi ne, %10, %c0_i32_9 : i32
    scf.if %11 {
      %c0_10 = arith.constant 0 : index
      %c0_11 = arith.constant 0 : index
      %12 = vector.load %arg6[%c0_10, %c0_11] : memref<3x256xf32, #tpu.memory_space<vmem>>, vector<3x256xf32>
      %c0_12 = arith.constant 0 : index
      %c0_13 = arith.constant 0 : index
      %13 = vector.load %arg4[%c0_12, %c0_13] : memref<3x1xf32, #tpu.memory_space<vmem>>, vector<3x1xf32>
      %14 = vector.broadcast %13 : vector<3x1xf32> to vector<3x256xf32>
      %15 = arith.addf %12, %14 : vector<3x256xf32>
      %c0_14 = arith.constant 0 : index
      %c0_15 = arith.constant 0 : index
      %16 = vector.load %arg5[%c0_14, %c0_15] : memref<3x256xf32, #tpu.memory_space<vmem>>, vector<3x256xf32>
      tpu.vector_store %arg5[%c0_14, %c0_15], %15 {strides = array<i32>} : memref<3x256xf32, #tpu.memory_space<vmem>>, vector<3x256xf32>,
    } else {
    }
    return
  }
  func.func @transform_0(%arg0: i32, %arg1: i32) -> (i32, i32) {
    %c0_i32 = arith.constant 0 : i32
    %c0_i32_0 = arith.constant 0 : i32
    return %c0_i32, %arg1 : i32, i32
  }
  func.func @transform_1(%arg0: i32, %arg1: i32) -> (i32, i32) {
    %c0_i32 = arith.constant 0 : i32
    return %arg1, %arg0 : i32, i32
  }
  func.func @transform_2(%arg0: i32, %arg1: i32) -> (i32, i32) {
    %c0_i32 = arith.constant 0 : i32
    %c0_i32_0 = arith.constant 0 : i32
    %c0_i32_1 = arith.constant 0 : i32
    return %c0_i32, %c0_i32_0 : i32, i32
  }
  func.func @transform_3(%arg0: i32, %arg1: i32) -> (i32, i32) {
    %c0_i32 = arith.constant 0 : i32
    %c0_i32_0 = arith.constant 0 : i32
    return %c0_i32, %arg0 : i32, i32
  }
}

</mosaic_0001>

<llo_original>
// kernel: nst_forward.10
$region0: #{nst_forward.10}
  #allocation0 [shape = 'u32[]', space=smem, size = 0x4, offset = 0x4, fixed_abs, tag = 'smem constant byte address 0x4 - core index']
  #allocation1 [shape = 'u32[72,128]{1,0:T(1,128)}', space=vmem, size = 0x9000, scoped, tag = 'internal scratch']
  #allocation2 [shape = 'f32[16,256]{1,0:T(8,128)}', space=vmem, size = 0x4000, scoped, tag = 'scratch operand']
  %s0 = inlined_call_operand.vmem [shape: bf16[16,27], index: 0, kind: input, shape index: {}]
  %s1 = inlined_call_operand.vmem [shape: bf16[27,512], index: 1, kind: input, shape index: {}]
  %s2 = inlined_call_operand.vmem [shape: f32[16,1], index: 2, kind: input, shape index: {}]
  %s3 = inlined_call_operand.vmem [shape: bf16[16,512], index: 3, kind: output, shape index: {}]
  %s4 = sld [smem:[#allocation0]]
  $region125: #{nst_forward.10} parent=0
    _
  %s6 = ssub.s32 1, %s4
  %s7 = scalar_select 0, %s6, %s4
  $region1: #{nst_forward.10} parent=0
    #allocation3 [shape = 'u8[32768]{0}', space=vmem, size = 0x8000, scoped, tag = 'input window, operand 1']
    #allocation4 [shape = 'u8[16384]{0}', space=vmem, size = 0x4000, scoped, tag = 'output window, operand 0']
    loop: start=0, step=1, limit=4
    $region2: #{nst_forward.10} parent=1 // loop_pre_header
      _
    $region3: #{nst_forward.10} parent=1 // loop_header
      %s9 = sphi 0, %s13
      %p10 = scmp.ge.s32.totalorder %s9, 4
      %s16 = sphi 0, %s28
      %s17 = sphi 0, %s24
      %s18 = sphi 0, %s16
      %s19 = sphi 0, %s17
      %s20 = sphi 0, %s18
      %s21 = sphi 0, %s19
      %s31 = sphi 0, %s33
      %s34 = sphi 0, %s31
      %s35 = sphi 0, %s34
      %s51 = sphi 0, %s35
      %s59 = sphi 0, %s61
      %s62 = sphi 0, %s59
      %s63 = sphi 0, %s62
      %s79 = sphi 0, %s63
      %s83 = sphi 0, %s83
      %s85 = sphi 0, %s83
      %s86 = sphi 0, %s85
      %s100 = sphi 0, %s86
      %s106 = sphi 0, %s108
      %s109 = sphi 0, %s106
      %s110 = sphi 0, %s109
      %s126 = sphi 0, %s110
    $region4: #{nst_forward.10} parent=1 // loop_header_branch
      %12 = sbr.rel (%p10) target = $region8
    $region5: #{nst_forward.10} parent=1 // loop_body
      %s14 = ssub.s32 %s9, 1
      %s15 = ssub.s32 %s9, 2
      %s22 = sadd.s32 1, %s17
      %p23 = scmp.ge.s32.totalorder %s22, 1
      %s24 = scalar_select %p23, 0, %s22
      %s25 = sadd.s32 1, %s16
      %s26 = scalar_select %p23, %s25, %s16
      %p27 = scmp.ge.s32.totalorder %s26, 2
      %s28 = scalar_select %p27, 0, %s26
      %s29 = ssub.s32 %s17, %s24
      %p30 = scmp.eq.s32.totalorder %s29, 0
      %s32 = sadd.s32 %s31, 1
      %s33 = scalar_select %p30, %s31, %s32
      %p36 = pneg %p30
      %p37 = scmp.eq.s32.totalorder %s9, 1
      %p38 = por %p36, %p37
      %p39 = scmp.ne.s32.totalorder %s31, %s34
      %p40 = scmp.eq.s32.totalorder %s9, 0
      %p41 = por %p39, %p40
      %p42 = scmp.ne.s32.totalorder %s31, %s34
      %p43 = scmp.eq.s32.totalorder %s14, 1
      %p44 = por %p42, %p43
      %p45 = scmp.ne.s32.totalorder %s34, %s35
      %p46 = scmp.eq.s32.totalorder %s14, 0
      %p47 = por %p45, %p46
      %p48 = scmp.ne.s32.totalorder %s34, %s35
      %p49 = scmp.eq.s32.totalorder %s15, 1
      %p50 = por %p48, %p49
      %p52 = scmp.ne.s32.totalorder %s35, %s51
      %p53 = scmp.eq.s32.totalorder %s15, 0
      %p54 = por %p52, %p53
      %s55 = ssub.s32 %s17, %s24
      %s56 = ssub.s32 %s16, %s28
      %s57 = sor.u32 %s55, %s56
      %p58 = scmp.eq.s32.totalorder %s57, 0
      %s60 = sadd.s32 %s59, 1
      %s61 = scalar_select %p58, %s59, %s60
      %p64 = pneg %p58
      %p65 = scmp.eq.s32.totalorder %s9, 1
      %p66 = por %p64, %p65
      %p67 = scmp.ne.s32.totalorder %s59, %s62
      %p68 = scmp.eq.s32.totalorder %s9, 0
      %p69 = por %p67, %p68
      %p70 = scmp.ne.s32.totalorder %s59, %s62
      %p71 = scmp.eq.s32.totalorder %s14, 1
      %p72 = por %p70, %p71
      %p73 = scmp.ne.s32.totalorder %s62, %s63
      %p74 = scmp.eq.s32.totalorder %s14, 0
      %p75 = por %p73, %p74
      %p76 = scmp.ne.s32.totalorder %s62, %s63
      %p77 = scmp.eq.s32.totalorder %s15, 1
      %p78 = por %p76, %p77
      %p80 = scmp.ne.s32.totalorder %s63, %s79
      %p81 = scmp.eq.s32.totalorder %s15, 0
      %p82 = por %p80, %p81
      %s84 = sadd.s32 %s83, 1
      %p87 = scmp.eq.s32.totalorder %s9, 1
      %p88 = scmp.ne.s32.totalorder %s83, %s85
      %p89 = scmp.eq.s32.totalorder %s9, 0
      %p90 = por %p88, %p89
      %p91 = scmp.ne.s32.totalorder %s83, %s85
      %p92 = scmp.eq.s32.totalorder %s14, 1
      %p93 = por %p91, %p92
      %p94 = scmp.ne.s32.totalorder %s85, %s86
      %p95 = scmp.eq.s32.totalorder %s14, 0
      %p96 = por %p94, %p95
      %p97 = scmp.ne.s32.totalorder %s85, %s86
      %p98 = scmp.eq.s32.totalorder %s15, 1
      %p99 = por %p97, %p98
      %p101 = scmp.ne.s32.totalorder %s86, %s100
      %p102 = scmp.eq.s32.totalorder %s15, 0
      %p103 = por %p101, %p102
      %s104 = ssub.s32 %s16, %s28
      %p105 = scmp.eq.s32.totalorder %s104, 0
      %s107 = sadd.s32 %s106, 1
      %s108 = scalar_select %p105, %s106, %s107
      %p111 = pneg %p105
      %p112 = scmp.eq.s32.totalorder %s9, 1
      %p113 = por %p111, %p112
      %p114 = scmp.ne.s32.totalorder %s106, %s109
      %p115 = scmp.eq.s32.totalorder %s9, 0
      %p116 = por %p114, %p115
      %p117 = scmp.ne.s32.totalorder %s106, %s109
      %p118 = scmp.eq.s32.totalorder %s14, 1
      %p119 = por %p117, %p118
      %p120 = scmp.ne.s32.totalorder %s109, %s110
      %p121 = scmp.eq.s32.totalorder %s14, 0
      %p122 = por %p120, %p121
      %p123 = scmp.ne.s32.totalorder %s109, %s110
      %p124 = scmp.eq.s32.totalorder %s15, 1
      %p125 = por %p123, %p124
      %p127 = scmp.ne.s32.totalorder %s110, %s126
      %p128 = scmp.eq.s32.totalorder %s15, 0
      %p129 = por %p127, %p128
      %p130 = scmp.le.s32.totalorder 1, %s9
      %p131 = scmp.lt.s32.totalorder %s9, 3
      %p132 = pnand %p130, %p131
      %p133 = pneg %p132
      // Predicated region
      $region9: #{nst_forward.10} parent=5 // pred_check
        _
      $region10: #{nst_forward.10} parent=5 // pred_check_branch
        %135 = sbr.rel (%p132) target = $region12
      $region11: #{nst_forward.10} parent=5 // pred_region
        %s136 = ssub.s32 %s9, 1
        // Predicated region
        $region13: #{nst_forward.10} parent=11 // pred_check
          %p137 = pneg %p47
        $region14: #{nst_forward.10} parent=11 // pred_check_branch
          %139 = sbr.rel (%p137) target = $region16
        $region15: #{nst_forward.10} parent=11 // pred_region
          %p140 = scmp.lt.s32.totalorder %s19, 0
          %s141 = scalar_select %p140, %s19, 0
          %s142 = smul.addr %s141, 4
          %s143 = scalar_lea.vmem %s0, %s142
        $region16: #{nst_forward.10} parent=11 // pred_fallthru
          _
        // Predicated region
        $region17: #{nst_forward.10} parent=11 // pred_check
          %p144 = pneg %p96
        $region18: #{nst_forward.10} parent=11 // pred_check_branch
          %146 = sbr.rel (%p144) target = $region20
        $region19: #{nst_forward.10} parent=11 // pred_region
          _
        $region20: #{nst_forward.10} parent=11 // pred_fallthru
          _
      $region12: #{nst_forward.10} parent=5 // pred_fallthru
        _
      %p147 = scmp.lt.s32.totalorder %s9, 2
      // Predicated region
      $region21: #{nst_forward.10} parent=5 // pred_check
        %p148 = pneg %p147
      $region22: #{nst_forward.10} parent=5 // pred_check_branch
        %150 = sbr.rel (%p148) target = $region24
      $region23: #{nst_forward.10} parent=5 // pred_region
        // Predicated region
        $region25: #{nst_forward.10} parent=23 // pred_check
          %p151 = pneg %p69
        $region26: #{nst_forward.10} parent=23 // pred_check_branch
          %153 = sbr.rel (%p151) target = $region28
        $region27: #{nst_forward.10} parent=23 // pred_region
          %s154 = sand.u32 %s59, 1
          %s155 = sand.u32 %s59, 1
          %s156 = smul.addr %s155, 32
          %s157 = scalar_lea.vmem [#allocation3], %s156
          %s158 = smul.u32 4, %s17
          %s159 = smul.u32 2, %s16
          %s160 = smul.addr %s158, 4
          %s161 = sadd.s32 %s159, %s160
          %s162 = smul.addr %s161, 4
          %s163 = scalar_lea.vmem %s1, %s162
          // Predicated region
          $region29: #{nst_forward.10} parent=27 // pred_check
            _
          $region30: #{nst_forward.10} parent=27 // pred_check_branch
            %165 = sbr.rel (0) target = $region32
          $region31: #{nst_forward.10} parent=27 // pred_region
            // Predicated region
            $region33: #{nst_forward.10} parent=31 // pred_check
              _
            $region34: #{nst_forward.10} parent=31 // pred_check_branch
              %167 = sbr.rel (0) target = $region36
            $region35: #{nst_forward.10} parent=31 // pred_region
              // Predicated region
              $region48: #{nst_forward.10} parent=35 // pred_check
                _
              $region49: #{nst_forward.10} parent=35 // pred_check_branch
                %189 = sbr.rel (0) target = $region51
              $region50: #{nst_forward.10} parent=35 // pred_region
                loop: start=0, step=1, limit=1
                $region52: #{nst_forward.10} parent=50 // loop_pre_header
                  _
                $region53: #{nst_forward.10} parent=50 // loop_header
                  %s191 = sphi 0, %s195
                  %p192 = scmp.ge.s32.totalorder %s191, 1
                  %s196 = sphi %s163, %s163
                  %s197 = sphi %s157, %s157
                $region54: #{nst_forward.10} parent=50 // loop_header_branch
                  %194 = sbr.rel (%p192) target = $region58
                $region55: #{nst_forward.10} parent=50 // loop_body
                  %v198 = vld [vmem:[%s196] sm:$0xff]
                  %199 = vst [vmem:[%s197] sm:$0xff] %v198
                  %v200 = vld [vmem:[%s196 + $0x10] sm:$0xff]
                  %201 = vst [vmem:[%s197 + $0x8] sm:$0xff] %v200
                  %v202 = vld [vmem:[%s196 + $0x20] sm:$0xff]
                  %203 = vst [vmem:[%s197 + $0x10] sm:$0xff] %v202
                  %v204 = vld [vmem:[%s196 + $0x30] sm:$0xff]
                  %205 = vst [vmem:[%s197 + $0x18] sm:$0xff] %v204
                $region56: #{nst_forward.10} parent=50 // loop_footer
                  %s195 = sadd.s32 1, %s191
                $region57: #{nst_forward.10} parent=50 // loop_footer_branch
                  %190 = sbr.rel target = $region53
                $region58: #{nst_forward.10} parent=50 // loop_exit
                  _
              $region51: #{nst_forward.10} parent=35 // pred_fallthru
                _
              // Predicated region
              $region59: #{nst_forward.10} parent=35 // pred_check
                _
              $region60: #{nst_forward.10} parent=35 // pred_check_branch
                %207 = sbr.rel target = $region62
              $region61: #{nst_forward.10} parent=35 // pred_region
                _
              $region62: #{nst_forward.10} parent=35 // pred_fallthru
                _
            $region36: #{nst_forward.10} parent=31 // pred_fallthru
              _
            // Predicated region
            $region37: #{nst_forward.10} parent=31 // pred_check
              _
            $region38: #{nst_forward.10} parent=31 // pred_check_branch
              %169 = sbr.rel target = $region40
            $region39: #{nst_forward.10} parent=31 // pred_region
              %s171 = ssub.s32 256, 1
              loop: start=0, step=1, limit=1
              $region41: #{nst_forward.10} parent=39 // loop_pre_header
                _
              $region42: #{nst_forward.10} parent=39 // loop_header
                %s173 = sphi 0, %s177
                %p174 = scmp.ge.s32.totalorder %s173, 1
                %s178 = sphi %s163, %s163
                %s179 = sphi %s157, %s157
              $region43: #{nst_forward.10} parent=39 // loop_header_branch
                %176 = sbr.rel (%p174) target = $region47
              $region44: #{nst_forward.10} parent=39 // loop_body
                %v180 = vld [vmem:[%s178] sm:%s171]
                %181 = vst [vmem:[%s179] sm:%s171] %v180
                %v182 = vld [vmem:[%s178 + $0x10] sm:%s171]
                %183 = vst [vmem:[%s179 + $0x8] sm:%s171] %v182
                %v184 = vld [vmem:[%s178 + $0x20] sm:%s171]
                %185 = vst [vmem:[%s179 + $0x10] sm:%s171] %v184
                %v186 = vld [vmem:[%s178 + $0x30] sm:%s171]
                %187 = vst [vmem:[%s179 + $0x18] sm:%s171] %v186
              $region45: #{nst_forward.10} parent=39 // loop_footer
                %s177 = sadd.s32 1, %s173
              $region46: #{nst_forward.10} parent=39 // loop_footer_branch
                %172 = sbr.rel target = $region42
              $region47: #{nst_forward.10} parent=39 // loop_exit
                _
            $region40: #{nst_forward.10} parent=31 // pred_fallthru
              _
          $region32: #{nst_forward.10} parent=27 // pred_fallthru
            _
          %208 = vnop
        $region28: #{nst_forward.10} parent=23 // pred_fallthru
          _
      $region24: #{nst_forward.10} parent=5 // pred_fallthru
        _
      %p209 = scmp.le.s32.totalorder 1, %s9
      %p210 = scmp.lt.s32.totalorder %s9, 3
      %p211 = pnand %p209, %p210
      %p212 = pneg %p211
      // Predicated region
      $region63: #{nst_forward.10} parent=5 // pred_check
        _
      $region64: #{nst_forward.10} parent=5 // pred_check_branch
        %214 = sbr.rel (%p211) target = $region66
      $region65: #{nst_forward.10} parent=5 // pred_region
        %s215 = ssub.s32 %s9, 1
        %s216 = sand.u32 %s62, 1
        %s217 = sand.u32 %s62, 1
        %s218 = smul.addr %s217, 32
        %s219 = scalar_lea.vmem [#allocation3], %s218
        // Predicated region
        $region67: #{nst_forward.10} parent=65 // pred_check
          %p220 = pneg %p75
        $region68: #{nst_forward.10} parent=65 // pred_check_branch
          %222 = sbr.rel (%p220) target = $region70
        $region69: #{nst_forward.10} parent=65 // pred_region
          _
        $region70: #{nst_forward.10} parent=65 // pred_fallthru
          _
        %p223 = scmp.lt.s32.totalorder %s19, 0
        %s224 = scalar_select %p223, %s19, 0
        %s225 = smul.addr %s224, 4
        %s226 = scalar_lea.vmem %s0, %s225
        %p227 = pneg %p47
        %p228 = pneg %p44
        %s229 = sand.u32 %s62, 1
        %s230 = sand.u32 %s62, 1
        %s231 = smul.addr %s230, 32
        %s232 = scalar_lea.vmem [#allocation3], %s231
        %p233 = pneg %p75
        %p234 = pneg %p72
        %p235 = pneg %p96
        %p236 = pneg %p93
        %p237 = pneg %p122
        %p238 = pneg %p119
        %s239 = sand.u32 %s109, 1
        %s240 = sand.u32 %s109, 1
        %s241 = smul.addr %s240, 16
        %s242 = scalar_lea.vmem [#allocation4], %s241
        %p243 = scmp.lt.s32.totalorder %s19, 0
        %s244 = scalar_select %p243, %s19, 0
        %s245 = smul.addr %s244, 4
        %s246 = scalar_lea.vmem %s0, %s245
        %s247 = smul.u32 4, %s19
        %s248 = smul.u32 2, %s18
        %s249 = smul.u32 2, %s18
        %p251 = scmp.eq.s32.totalorder %s19, 0
        // Predicated region
        $region71: #{nst_forward.10} parent=65 // pred_check
          %p252 = pneg %p251
        $region72: #{nst_forward.10} parent=65 // pred_check_branch
          %254 = sbr.rel (%p252) target = $region74
        $region73: #{nst_forward.10} parent=65 // pred_region
          %255 = vst [vmem:[#allocation2] sm:$0xff] 0.0
          %256 = vst [vmem:[#allocation2 + $0x8] sm:$0xff] 0.0
          %257 = vst [vmem:[#allocation2 + $0x10] sm:$0xff] 0.0
          %258 = vst [vmem:[#allocation2 + $0x18] sm:$0xff] 0.0
        $region74: #{nst_forward.10} parent=65 // pred_fallthru
          _
        %v259 = vld [vmem:[#allocation2] sm:$0xff]
        %v260 = vld [vmem:[#allocation2 + $0x8] sm:$0xff]
        %v261 = vld [vmem:[#allocation2 + $0x10] sm:$0xff]
        %v262 = vld [vmem:[#allocation2 + $0x18] sm:$0xff]
        %v263 = vld [vmem:[%s246] sm:$0xf]
        %v264 = vld [vmem:[%s246 + $0x4] sm:$0xf]
        %v265 = vld [vmem:[%s219] sm:$0xff]
        %v266 = vld [vmem:[%s219 + $0x8] sm:$0xff]
        %v267 = vld [vmem:[%s219 + $0x10] sm:$0xff]
        %v268 = vld [vmem:[%s219 + $0x18] sm:$0x33]
        %v271 = vunpack.c.l.b16 %v263
        %v272 = vunpack.c.l.b16 %v264
        %v273 = vpack.c.b16 %v272, %v271
        %v278 = vunpack.c.l.b16 %v265
        %v279 = vunpack.c.h.b16 %v265
        %v280 = vunpack.c.l.b16 %v266
        %v281 = vunpack.c.h.b16 %v266
        %v282 = vunpack.c.l.b16 %v267
        %v283 = vunpack.c.h.b16 %v267
        %v284 = vunpack.c.l.b16 %v268
        %v285 = vunpack.c.h.b16 %v268
        %v286 = vpack.c.b16 %v280, %v278
        %v287 = vpack.c.b16 %v281, %v279
        %v288 = vpack.c.b16 %v284, %v282
        %v289 = vpack.c.b16 %v285, %v283
        %vm292 = vcmask 220160
        %v294 = vsel %vm292, %v273, 0
        %vm296 = vcmask 1044480
        %vm297 = vcmask 1045504
        %v298 = vsel %vm296, 4294967295, 65535
        %v299 = vsel %vm297, %v298, 0
        %v301 = vand.u32 %v288, %v299
        %v304 = vand.u32 %v289, %v299
        %306 = vmatpush.bf16.msra.mxu0 0
        %307 = vmatpush.bf16.msra.mxu0 0
        %308 = vmatpush.bf16.msra.mxu0 0
        %309 = vmatpush.bf16.msra.mxu0 0
        %310 = vmatpush.bf16.msra.mxu0 0
        %311 = vmatpush.bf16.msra.mxu0 0
        %312 = vmatpush.bf16.msra.mxu0 %v301
        %313 = vmatpush.bf16.msra.mxu0 %v286
        %314 = vmatmul.bf16.gmra.mxu0 %v294
        %v315 = vpop.f32.mrf.mxu0
        %v316 = vadd.f32 0.0, %v315
        %v317 = vpop.f32.mrf.mxu0
        %v318 = vadd.f32 0.0, %v317
        %319 = vdwg.mxu0
        %320 = vmatpush.bf16.msra.mxu0 0
        %321 = vmatpush.bf16.msra.mxu0 0
        %322 = vmatpush.bf16.msra.mxu0 0
        %323 = vmatpush.bf16.msra.mxu0 0
        %324 = vmatpush.bf16.msra.mxu0 0
        %325 = vmatpush.bf16.msra.mxu0 0
        %326 = vmatpush.bf16.msra.mxu0 %v304
        %327 = vmatpush.bf16.msra.mxu0 %v287
        %328 = vmatmul.bf16.gmra.mxu0 %v294
        %v329 = vpop.f32.mrf.mxu0
        %v330 = vadd.f32 0.0, %v329
        %v331 = vpop.f32.mrf.mxu0
        %v332 = vadd.f32 0.0, %v331
        %333 = vdwg.mxu0
        %v334 = vadd.f32 %v259, %v316
        %v335 = vadd.f32 %v260, %v330
        %v336 = vadd.f32 %v261, %v318
        %v337 = vadd.f32 %v262, %v332
        %338 = vst [vmem:[#allocation2] sm:$0xff] %v334
        %339 = vst [vmem:[#allocation2 + $0x8] sm:$0xff] %v335
        %340 = vst [vmem:[#allocation2 + $0x10] sm:$0xff] %v336
        %341 = vst [vmem:[#allocation2 + $0x18] sm:$0xff] %v337
        // Predicated region
        $region75: #{nst_forward.10} parent=65 // pred_check
          %p342 = pneg %p251
        $region76: #{nst_forward.10} parent=65 // pred_check_branch
          %344 = sbr.rel (%p342) target = $region78
        $region77: #{nst_forward.10} parent=65 // pred_region
          %v345 = vld [vmem:[#allocation2] sm:$0xff]
          %v346 = vld [vmem:[#allocation2 + $0x8] sm:$0xff]
          %v347 = vld [vmem:[#allocation2 + $0x10] sm:$0xff]
          %v348 = vld [vmem:[#allocation2 + $0x18] sm:$0xff]
          %v349 = vld [vmem:[%s2] sm:$0xff]
          %v350 = vld [vmem:[%s2 + $0x8] sm:$0xff]
          %352 = vset.pattern.permute.xlu0 0
          %353 = vperm.xlu0 %352, %v349
          %v354 = vpop.permute.xlu0 %353
          %357 = vset.pattern.permute.xlu0 0
          %358 = vperm.xlu0 %357, %v350
          %v359 = vpop.permute.xlu0 %358
          %v361 = vadd.f32 %v345, %v354
          %v362 = vadd.f32 %v346, %v354
          %v363 = vadd.f32 %v347, %v359
          %v364 = vadd.f32 %v348, %v359
          %v365 = vmax.f32 %v361, 0.0
          %v366 = vmax.f32 %v362, 0.0
          %v367 = vmax.f32 %v363, 0.0
          %v368 = vmax.f32 %v364, 0.0
          %v369 = vpack.c.bf16 %v366, %v365
          %v370 = vpack.c.bf16 %v368, %v367
          %371 = vst [vmem:[%s242] sm:$0xff] %v369
          %372 = vst [vmem:[%s242 + $0x8] sm:$0xff] %v370
        $region78: #{nst_forward.10} parent=65 // pred_fallthru
          _
        %s373 = sand.u32 %s109, 1
        %s374 = sand.u32 %s109, 1
        %s375 = smul.addr %s374, 16
        %s376 = scalar_lea.vmem [#allocation4], %s375
        // Predicated region
        $region79: #{nst_forward.10} parent=65 // pred_check
          %p377 = pneg %p119
        $region80: #{nst_forward.10} parent=65 // pred_check_branch
          %379 = sbr.rel (%p377) target = $region82
        $region81: #{nst_forward.10} parent=65 // pred_region
          %s380 = smul.u32 2, %s18
          %s381 = smul.addr %s380, 4
          %s382 = scalar_lea.vmem %s3, %s381
          // Predicated region
          $region83: #{nst_forward.10} parent=81 // pred_check
            _
          $region84: #{nst_forward.10} parent=81 // pred_check_branch
            %384 = sbr.rel (0) target = $region86
          $region85: #{nst_forward.10} parent=81 // pred_region
            // Predicated region
            $region87: #{nst_forward.10} parent=85 // pred_check
              _
            $region88: #{nst_forward.10} parent=85 // pred_check_branch
              %386 = sbr.rel (0) target = $region90
            $region89: #{nst_forward.10} parent=85 // pred_region
              // Predicated region
              $region102: #{nst_forward.10} parent=89 // pred_check
                _
              $region103: #{nst_forward.10} parent=89 // pred_check_branch
                %404 = sbr.rel (0) target = $region105
              $region104: #{nst_forward.10} parent=89 // pred_region
                loop: start=0, step=1, limit=1
                $region106: #{nst_forward.10} parent=104 // loop_pre_header
                  _
                $region107: #{nst_forward.10} parent=104 // loop_header
                  %s406 = sphi 0, %s410
                  %p407 = scmp.ge.s32.totalorder %s406, 1
                  %s411 = sphi %s376, %s376
                  %s412 = sphi %s382, %s382
                $region108: #{nst_forward.10} parent=104 // loop_header_branch
                  %409 = sbr.rel (%p407) target = $region112
                $region109: #{nst_forward.10} parent=104 // loop_body
                  %v413 = vld [vmem:[%s411] sm:$0xff]
                  %414 = vst [vmem:[%s412] sm:$0xff] %v413
                  %v415 = vld [vmem:[%s411 + $0x8] sm:$0xff]
                  %416 = vst [vmem:[%s412 + $0x10] sm:$0xff] %v415
                $region110: #{nst_forward.10} parent=104 // loop_footer
                  %s410 = sadd.s32 1, %s406
                $region111: #{nst_forward.10} parent=104 // loop_footer_branch
                  %405 = sbr.rel target = $region107
                $region112: #{nst_forward.10} parent=104 // loop_exit
                  _
              $region105: #{nst_forward.10} parent=89 // pred_fallthru
                _
              // Predicated region
              $region113: #{nst_forward.10} parent=89 // pred_check
                _
              $region114: #{nst_forward.10} parent=89 // pred_check_branch
                %418 = sbr.rel target = $region116
              $region115: #{nst_forward.10} parent=89 // pred_region
                _
              $region116: #{nst_forward.10} parent=89 // pred_fallthru
                _
            $region90: #{nst_forward.10} parent=85 // pred_fallthru
              _
            // Predicated region
            $region91: #{nst_forward.10} parent=85 // pred_check
              _
            $region92: #{nst_forward.10} parent=85 // pred_check_branch
              %388 = sbr.rel target = $region94
            $region93: #{nst_forward.10} parent=85 // pred_region
              %s390 = ssub.s32 256, 1
              loop: start=0, step=1, limit=1
              $region95: #{nst_forward.10} parent=93 // loop_pre_header
                _
              $region96: #{nst_forward.10} parent=93 // loop_header
                %s392 = sphi 0, %s396
                %p393 = scmp.ge.s32.totalorder %s392, 1
                %s397 = sphi %s376, %s376
                %s398 = sphi %s382, %s382
              $region97: #{nst_forward.10} parent=93 // loop_header_branch
                %395 = sbr.rel (%p393) target = $region101
              $region98: #{nst_forward.10} parent=93 // loop_body
                %v399 = vld [vmem:[%s397] sm:%s390]
                %400 = vst [vmem:[%s398] sm:%s390] %v399
                %v401 = vld [vmem:[%s397 + $0x8] sm:%s390]
                %402 = vst [vmem:[%s398 + $0x10] sm:%s390] %v401
              $region99: #{nst_forward.10} parent=93 // loop_footer
                %s396 = sadd.s32 1, %s392
              $region100: #{nst_forward.10} parent=93 // loop_footer_branch
                %391 = sbr.rel target = $region96
              $region101: #{nst_forward.10} parent=93 // loop_exit
                _
            $region94: #{nst_forward.10} parent=85 // pred_fallthru
              _
          $region86: #{nst_forward.10} parent=81 // pred_fallthru
            _
          %419 = vnop
        $region82: #{nst_forward.10} parent=65 // pred_fallthru
          _
      $region66: #{nst_forward.10} parent=5 // pred_fallthru
        _
      %p420 = scmp.le.s32.totalorder 2, %s9
      // Predicated region
      $region117: #{nst_forward.10} parent=5 // pred_check
        %p421 = pneg %p420
      $region118: #{nst_forward.10} parent=5 // pred_check_branch
        %423 = sbr.rel (%p421) target = $region120
      $region119: #{nst_forward.10} parent=5 // pred_region
        %s424 = ssub.s32 %s9, 2
        // Predicated region
        $region121: #{nst_forward.10} parent=119 // pred_check
          %p425 = pneg %p125
        $region122: #{nst_forward.10} parent=119 // pred_check_branch
          %427 = sbr.rel (%p425) target = $region124
        $region123: #{nst_forward.10} parent=119 // pred_region
          %s428 = sand.u32 %s110, 1
          %s429 = sand.u32 %s110, 1
          %s430 = smul.addr %s429, 16
          %s431 = scalar_lea.vmem [#allocation4], %s430
        $region124: #{nst_forward.10} parent=119 // pred_fallthru
          _
      $region120: #{nst_forward.10} parent=5 // pred_fallthru
        _
    $region6: #{nst_forward.10} parent=1 // loop_footer
      %s13 = sadd.s32 1, %s9
    $region7: #{nst_forward.10} parent=1 // loop_footer_branch
      %8 = sbr.rel target = $region3
    $region8: #{nst_forward.10} parent=1 // loop_exit
      _

// kernel: nst_forward.11
$region0: #{nst_forward.11}
  #allocation0 [shape = 'u32[]', space=smem, size = 0x4, offset = 0x4, fixed_abs, tag = 'smem constant byte address 0x4 - core index']
  #allocation1 [shape = 'u32[72,128]{1,0:T(1,128)}', space=vmem, size = 0x9000, scoped, tag = 'internal scratch']
  #allocation2 [shape = 'f32[32,128]{1,0:T(8,128)}', space=vmem, size = 0x4000, scoped, tag = 'scratch operand']
  %s0 = inlined_call_operand.vmem [shape: bf16[32,144], index: 0, kind: input, shape index: {}]
  %s1 = inlined_call_operand.vmem [shape: bf16[144,128], index: 1, kind: input, shape index: {}]
  %s2 = inlined_call_operand.vmem [shape: f32[32,1], index: 2, kind: input, shape index: {}]
  %s3 = inlined_call_operand.vmem [shape: bf16[32,128], index: 3, kind: output, shape index: {}]
  %s4 = sld [smem:[#allocation0]]
  $region30: #{nst_forward.11} parent=0
    _
  %s6 = ssub.s32 1, %s4
  %s7 = scalar_select 0, %s6, %s4
  // Predicated region
  $region2: #{nst_forward.11} parent=0 // pred_check
    _
  $region3: #{nst_forward.11} parent=0 // pred_check_branch
    %9 = sbr.rel (0) target = $region5
  $region4: #{nst_forward.11} parent=0 // pred_region
    _
  $region5: #{nst_forward.11} parent=0 // pred_fallthru
    _
  // Predicated region
  $region6: #{nst_forward.11} parent=0 // pred_check
    _
  $region7: #{nst_forward.11} parent=0 // pred_check_branch
    %11 = sbr.rel (0) target = $region9
  $region8: #{nst_forward.11} parent=0 // pred_region
    _
  $region9: #{nst_forward.11} parent=0 // pred_fallthru
    _
  // Predicated region
  $region10: #{nst_forward.11} parent=0 // pred_check
    _
  $region11: #{nst_forward.11} parent=0 // pred_check_branch
    %13 = sbr.rel (0) target = $region13
  $region12: #{nst_forward.11} parent=0 // pred_region
    _
  $region13: #{nst_forward.11} parent=0 // pred_fallthru
    _
  %p15 = scmp.eq.s32.totalorder 0, 0
  // Predicated region
  $region14: #{nst_forward.11} parent=0 // pred_check
    %p16 = pneg %p15
  $region15: #{nst_forward.11} parent=0 // pred_check_branch
    %18 = sbr.rel (%p16) target = $region17
  $region16: #{nst_forward.11} parent=0 // pred_region
    %19 = vst [vmem:[#allocation2] sm:$0xff] 0.0
    %20 = vst [vmem:[#allocation2 + $0x8] sm:$0xff] 0.0
    %21 = vst [vmem:[#allocation2 + $0x10] sm:$0xff] 0.0
    %22 = vst [vmem:[#allocation2 + $0x18] sm:$0xff] 0.0
  $region17: #{nst_forward.11} parent=0 // pred_fallthru
    _
  %v23 = vld [vmem:[#allocation2] sm:$0xff]
  %v24 = vld [vmem:[#allocation2 + $0x8] sm:$0xff]
  %v25 = vld [vmem:[#allocation2 + $0x10] sm:$0xff]
  %v26 = vld [vmem:[#allocation2 + $0x18] sm:$0xff]
  %v27 = vld [vmem:[%s0] sm:$0xff]
  %v28 = vld [vmem:[%s0 + $0x8] sm:$0xff]
  %v29 = vld [vmem:[%s0 + $0x10] sm:$0xff]
  %v30 = vld [vmem:[%s0 + $0x18] sm:$0xff]
  %v31 = vld [vmem:[%s1] sm:$0xf]
  %v32 = vld [vmem:[%s1 + $0x4] sm:$0xf]
  %v33 = vld [vmem:[%s1 + $0x8] sm:$0xf]
  %v34 = vld [vmem:[%s1 + $0xc] sm:$0xf]
  %v35 = vld [vmem:[%s1 + $0x10] sm:$0xf]
  %v36 = vld [vmem:[%s1 + $0x14] sm:$0xf]
  %v37 = vld [vmem:[%s1 + $0x18] sm:$0xf]
  %v38 = vld [vmem:[%s1 + $0x1c] sm:$0xf]
  %v39 = vld [vmem:[%s1 + $0x20] sm:$0xf]
  %v40 = vld [vmem:[%s1 + $0x24] sm:$0xf]
  %v41 = vld [vmem:[%s1 + $0x28] sm:$0xf]
  %v42 = vld [vmem:[%s1 + $0x2c] sm:$0xf]
  %v43 = vld [vmem:[%s1 + $0x30] sm:$0xf]
  %v44 = vld [vmem:[%s1 + $0x34] sm:$0xf]
  %v45 = vld [vmem:[%s1 + $0x38] sm:$0xf]
  %v46 = vld [vmem:[%s1 + $0x3c] sm:$0xf]
  %v47 = vld [vmem:[%s1 + $0x40] sm:$0xf]
  %v48 = vld [vmem:[%s1 + $0x44] sm:$0xf]
  %v53 = vunpack.c.l.b16 %v27
  %v54 = vunpack.c.h.b16 %v27
  %v55 = vunpack.c.l.b16 %v28
  %v56 = vunpack.c.h.b16 %v28
  %v57 = vunpack.c.l.b16 %v29
  %v58 = vunpack.c.h.b16 %v29
  %v59 = vunpack.c.l.b16 %v30
  %v60 = vunpack.c.h.b16 %v30
  %v61 = vpack.c.b16 %v55, %v53
  %v62 = vpack.c.b16 %v56, %v54
  %v63 = vpack.c.b16 %v59, %v57
  %v64 = vpack.c.b16 %v60, %v58
  %v85 = vunpack.c.l.b16 %v31
  %v86 = vunpack.c.l.b16 %v32
  %v87 = vunpack.c.l.b16 %v33
  %v88 = vunpack.c.l.b16 %v34
  %v89 = vunpack.c.l.b16 %v35
  %v90 = vunpack.c.l.b16 %v36
  %v91 = vunpack.c.l.b16 %v37
  %v92 = vunpack.c.l.b16 %v38
  %v93 = vunpack.c.l.b16 %v39
  %v94 = vunpack.c.l.b16 %v40
  %v95 = vunpack.c.l.b16 %v41
  %v96 = vunpack.c.l.b16 %v42
  %v97 = vunpack.c.l.b16 %v43
  %v98 = vunpack.c.l.b16 %v44
  %v99 = vunpack.c.l.b16 %v45
  %v100 = vunpack.c.l.b16 %v46
  %v101 = vunpack.c.l.b16 %v47
  %v102 = vunpack.c.l.b16 %v48
  %v103 = vpack.c.b16 %v86, %v85
  %v104 = vpack.c.b16 %v88, %v87
  %v105 = vpack.c.b16 %v90, %v89
  %v106 = vpack.c.b16 %v92, %v91
  %v107 = vpack.c.b16 %v94, %v93
  %v108 = vpack.c.b16 %v96, %v95
  %v109 = vpack.c.b16 %v98, %v97
  %v110 = vpack.c.b16 %v100, %v99
  %v111 = vpack.c.b16 %v102, %v101
  %vm121 = vcmask 130048
  %v123 = vsel %vm121, %v62, 0
  %v126 = vsel %vm121, %v64, 0
  %128 = vmatpush.bf16.msra.mxu0 %v110
  %129 = vmatpush.bf16.msra.mxu0 %v109
  %130 = vmatpush.bf16.msra.mxu0 %v108
  %131 = vmatpush.bf16.msra.mxu0 %v107
  %132 = vmatpush.bf16.msra.mxu0 %v106
  %133 = vmatpush.bf16.msra.mxu0 %v105
  %134 = vmatpush.bf16.msra.mxu0 %v104
  %135 = vmatpush.bf16.msra.mxu0 %v103
  %136 = vmatmul.bf16.gmra.mxu0 %v61
  %v137 = vpop.f32.mrf.mxu0
  %v138 = vadd.f32 0.0, %v137
  %v139 = vpop.f32.mrf.mxu0
  %v140 = vadd.f32 0.0, %v139
  %141 = vmatmul.bf16.gmra.mxu0 %v63
  %v142 = vpop.f32.mrf.mxu0
  %v143 = vadd.f32 0.0, %v142
  %v144 = vpop.f32.mrf.mxu0
  %v145 = vadd.f32 0.0, %v144
  %146 = vdwg.mxu0
  %147 = vmatpush.bf16.msra.mxu0 0
  %148 = vmatpush.bf16.msra.mxu0 0
  %149 = vmatpush.bf16.msra.mxu0 0
  %150 = vmatpush.bf16.msra.mxu0 0
  %151 = vmatpush.bf16.msra.mxu0 0
  %152 = vmatpush.bf16.msra.mxu0 0
  %153 = vmatpush.bf16.msra.mxu0 0
  %154 = vmatpush.bf16.msra.mxu0 %v111
  %155 = vmatmul.bf16.gmra.mxu0 %v123
  %v156 = vpop.f32.mrf.mxu0
  %v157 = vadd.f32 %v138, %v156
  %v158 = vpop.f32.mrf.mxu0
  %v159 = vadd.f32 %v140, %v158
  %160 = vmatmul.bf16.gmra.mxu0 %v126
  %v161 = vpop.f32.mrf.mxu0
  %v162 = vadd.f32 %v143, %v161
  %v163 = vpop.f32.mrf.mxu0
  %v164 = vadd.f32 %v145, %v163
  %165 = vdwg.mxu0
  %v166 = vadd.f32 %v23, %v157
  %v167 = vadd.f32 %v24, %v159
  %v168 = vadd.f32 %v25, %v162
  %v169 = vadd.f32 %v26, %v164
  %170 = vst [vmem:[#allocation2] sm:$0xff] %v166
  %171 = vst [vmem:[#allocation2 + $0x8] sm:$0xff] %v167
  %172 = vst [vmem:[#allocation2 + $0x10] sm:$0xff] %v168
  %173 = vst [vmem:[#allocation2 + $0x18] sm:$0xff] %v169
  // Predicated region
  $region18: #{nst_forward.11} parent=0 // pred_check
    %p174 = pneg %p15
  $region19: #{nst_forward.11} parent=0 // pred_check_branch
    %176 = sbr.rel (%p174) target = $region21
  $region20: #{nst_forward.11} parent=0 // pred_region
    %v177 = vld [vmem:[#allocation2] sm:$0xff]
    %v178 = vld [vmem:[#allocation2 + $0x8] sm:$0xff]
    %v179 = vld [vmem:[#allocation2 + $0x10] sm:$0xff]
    %v180 = vld [vmem:[#allocation2 + $0x18] sm:$0xff]
    %v181 = vld [vmem:[%s2] sm:$0xff]
    %v182 = vld [vmem:[%s2 + $0x8] sm:$0xff]
    %v183 = vld [vmem:[%s2 + $0x10] sm:$0xff]
    %v184 = vld [vmem:[%s2 + $0x18] sm:$0xff]
    %186 = vset.pattern.permute.xlu0 0
    %187 = vperm.xlu0 %186, %v181
    %v188 = vpop.permute.xlu0 %187
    %191 = vset.pattern.permute.xlu0 0
    %192 = vperm.xlu0 %191, %v182
    %v193 = vpop.permute.xlu0 %192
    %196 = vset.pattern.permute.xlu0 0
    %197 = vperm.xlu0 %196, %v183
    %v198 = vpop.permute.xlu0 %197
    %201 = vset.pattern.permute.xlu0 0
    %202 = vperm.xlu0 %201, %v184
    %v203 = vpop.permute.xlu0 %202
    %v205 = vadd.f32 %v177, %v188
    %v206 = vadd.f32 %v178, %v193
    %v207 = vadd.f32 %v179, %v198
    %v208 = vadd.f32 %v180, %v203
    %v209 = vmax.f32 %v205, 0.0
    %v210 = vmax.f32 %v206, 0.0
    %v211 = vmax.f32 %v207, 0.0
    %v212 = vmax.f32 %v208, 0.0
    %v213 = vpack.c.bf16 %v209, %v209
    %v214 = vpack.c.bf16 %v210, %v210
    %v215 = vpack.c.bf16 %v211, %v211
    %v216 = vpack.c.bf16 %v212, %v212
    %217 = vst [vmem:[%s3] sm:$0xf] %v213
    %218 = vst [vmem:[%s3 + $0x4] sm:$0xf] %v214
    %219 = vst [vmem:[%s3 + $0x8] sm:$0xf] %v215
    %220 = vst [vmem:[%s3 + $0xc] sm:$0xf] %v216
  $region21: #{nst_forward.11} parent=0 // pred_fallthru
    _
  // Predicated region
  $region22: #{nst_forward.11} parent=0 // pred_check
    _
  $region23: #{nst_forward.11} parent=0 // pred_check_branch
    %222 = sbr.rel (0) target = $region25
  $region24: #{nst_forward.11} parent=0 // pred_region
    _
  $region25: #{nst_forward.11} parent=0 // pred_fallthru
    _
  // Predicated region
  $region26: #{nst_forward.11} parent=0 // pred_check
    _
  $region27: #{nst_forward.11} parent=0 // pred_check_branch
    %224 = sbr.rel (0) target = $region29
  $region28: #{nst_forward.11} parent=0 // pred_region
    _
  $region29: #{nst_forward.11} parent=0 // pred_fallthru
    _

// kernel: nst_forward.13
$region0: #{nst_forward.13}
  #allocation0 [shape = 'u32[]', space=smem, size = 0x4, offset = 0x4, fixed_abs, tag = 'smem constant byte address 0x4 - core index']
  #allocation1 [shape = 'u32[72,128]{1,0:T(1,128)}', space=vmem, size = 0x9000, scoped, tag = 'internal scratch']
  #allocation2 [shape = 'f32[1,128]{1,0:T(1,128)}', space=vmem, size = 0x200, scoped, tag = 'scratch operand']
  #allocation3 [shape = 'f32[1,128]{1,0:T(1,128)}', space=vmem, size = 0x200, scoped, tag = 'scratch operand']
  #allocation4 [shape = 'f32[32,128]{1,0:T(8,128)}', space=vmem, size = 0x4000, scoped, tag = 'scratch operand']
  #allocation5 [shape = 'bf16[32,128]{1,0:T(8,128)(2,1)}', space=vmem, size = 0x2000, scoped, tag = 'scratch operand']
  %s0 = inlined_call_operand.vmem [shape: f32[2,32,1], index: 0, kind: input, shape index: {}]
  %s1 = inlined_call_operand.vmem [shape: f32[2,32,1], index: 1, kind: input, shape index: {}]
  %s2 = inlined_call_operand.vmem [shape: bf16[32,256], index: 2, kind: input, shape index: {}]
  %s3 = inlined_call_operand.vmem [shape: bf16[32,256], index: 3, kind: input, shape index: {}]
  %s4 = inlined_call_operand.vmem [shape: bf16[32,256], index: 4, kind: output, shape index: {}]
  %s5 = sld [smem:[#allocation0]]
  $region176: #{nst_forward.13} parent=0
    _
  %s7 = ssub.s32 1, %s5
  %s8 = scalar_select 0, %s7, %s5
  $region1: #{nst_forward.13} parent=0
    #allocation6 [shape = 'u8[16384]{0}', space=vmem, size = 0x4000, scoped, tag = 'input window, operand 2']
    #allocation7 [shape = 'u8[16384]{0}', space=vmem, size = 0x4000, scoped, tag = 'input window, operand 3']
    #allocation8 [shape = 'u8[16384]{0}', space=vmem, size = 0x4000, scoped, tag = 'output window, operand 0']
    loop: start=0, step=1, limit=4
    $region2: #{nst_forward.13} parent=1 // loop_pre_header
      _
    $region3: #{nst_forward.13} parent=1 // loop_header
      %s10 = sphi 0, %s14
      %p11 = scmp.ge.s32.totalorder %s10, 4
      %s17 = sphi 0, %s36
      %s18 = sphi 0, %s32
      %s19 = sphi 0, %s28
      %s20 = sphi 0, %s17
      %s21 = sphi 0, %s18
      %s22 = sphi 0, %s19
      %s23 = sphi 0, %s20
      %s24 = sphi 0, %s21
      %s25 = sphi 0, %s22
      %s39 = sphi 0, %s41
      %s42 = sphi 0, %s39
      %s43 = sphi 0, %s42
      %s59 = sphi 0, %s43
      %s65 = sphi 0, %s67
      %s68 = sphi 0, %s65
      %s69 = sphi 0, %s68
      %s85 = sphi 0, %s69
      %s93 = sphi 0, %s95
      %s96 = sphi 0, %s93
      %s97 = sphi 0, %s96
      %s113 = sphi 0, %s97
      %s121 = sphi 0, %s123
      %s124 = sphi 0, %s121
      %s125 = sphi 0, %s124
      %s141 = sphi 0, %s125
      %s149 = sphi 0, %s151
      %s152 = sphi 0, %s149
      %s153 = sphi 0, %s152
      %s169 = sphi 0, %s153
    $region4: #{nst_forward.13} parent=1 // loop_header_branch
      %13 = sbr.rel (%p11) target = $region8
    $region5: #{nst_forward.13} parent=1 // loop_body
      %s15 = ssub.s32 %s10, 1
      %s16 = ssub.s32 %s10, 2
      %s26 = sadd.s32 1, %s19
      %p27 = scmp.ge.s32.totalorder %s26, 1
      %s28 = scalar_select %p27, 0, %s26
      %s29 = sadd.s32 1, %s18
      %s30 = scalar_select %p27, %s29, %s18
      %p31 = scmp.ge.s32.totalorder %s30, 1
      %s32 = scalar_select %p31, 0, %s30
      %s33 = sadd.s32 1, %s17
      %s34 = scalar_select %p31, %s33, %s17
      %p35 = scmp.ge.s32.totalorder %s34, 2
      %s36 = scalar_select %p35, 0, %s34
      %s37 = ssub.s32 %s17, %s36
      %p38 = scmp.eq.s32.totalorder %s37, 0
      %s40 = sadd.s32 %s39, 1
      %s41 = scalar_select %p38, %s39, %s40
      %p44 = pneg %p38
      %p45 = scmp.eq.s32.totalorder %s10, 1
      %p46 = por %p44, %p45
      %p47 = scmp.ne.s32.totalorder %s39, %s42
      %p48 = scmp.eq.s32.totalorder %s10, 0
      %p49 = por %p47, %p48
      %p50 = scmp.ne.s32.totalorder %s39, %s42
      %p51 = scmp.eq.s32.totalorder %s15, 1
      %p52 = por %p50, %p51
      %p53 = scmp.ne.s32.totalorder %s42, %s43
      %p54 = scmp.eq.s32.totalorder %s15, 0
      %p55 = por %p53, %p54
      %p56 = scmp.ne.s32.totalorder %s42, %s43
      %p57 = scmp.eq.s32.totalorder %s16, 1
      %p58 = por %p56, %p57
      %p60 = scmp.ne.s32.totalorder %s43, %s59
      %p61 = scmp.eq.s32.totalorder %s16, 0
      %p62 = por %p60, %p61
      %s63 = ssub.s32 %s17, %s36
      %p64 = scmp.eq.s32.totalorder %s63, 0
      %s66 = sadd.s32 %s65, 1
      %s67 = scalar_select %p64, %s65, %s66
      %p70 = pneg %p64
      %p71 = scmp.eq.s32.totalorder %s10, 1
      %p72 = por %p70, %p71
      %p73 = scmp.ne.s32.totalorder %s65, %s68
      %p74 = scmp.eq.s32.totalorder %s10, 0
      %p75 = por %p73, %p74
      %p76 = scmp.ne.s32.totalorder %s65, %s68
      %p77 = scmp.eq.s32.totalorder %s15, 1
      %p78 = por %p76, %p77
      %p79 = scmp.ne.s32.totalorder %s68, %s69
      %p80 = scmp.eq.s32.totalorder %s15, 0
      %p81 = por %p79, %p80
      %p82 = scmp.ne.s32.totalorder %s68, %s69
      %p83 = scmp.eq.s32.totalorder %s16, 1
      %p84 = por %p82, %p83
      %p86 = scmp.ne.s32.totalorder %s69, %s85
      %p87 = scmp.eq.s32.totalorder %s16, 0
      %p88 = por %p86, %p87
      %s89 = sadd.s32 %s17, %s18
      %s90 = sadd.s32 %s36, %s32
      %s91 = ssub.s32 %s89, %s90
      %p92 = scmp.eq.s32.totalorder %s91, 0
      %s94 = sadd.s32 %s93, 1
      %s95 = scalar_select %p92, %s93, %s94
      %p98 = pneg %p92
      %p99 = scmp.eq.s32.totalorder %s10, 1
      %p100 = por %p98, %p99
      %p101 = scmp.ne.s32.totalorder %s93, %s96
      %p102 = scmp.eq.s32.totalorder %s10, 0
      %p103 = por %p101, %p102
      %p104 = scmp.ne.s32.totalorder %s93, %s96
      %p105 = scmp.eq.s32.totalorder %s15, 1
      %p106 = por %p104, %p105
      %p107 = scmp.ne.s32.totalorder %s96, %s97
      %p108 = scmp.eq.s32.totalorder %s15, 0
      %p109 = por %p107, %p108
      %p110 = scmp.ne.s32.totalorder %s96, %s97
      %p111 = scmp.eq.s32.totalorder %s16, 1
      %p112 = por %p110, %p111
      %p114 = scmp.ne.s32.totalorder %s97, %s113
      %p115 = scmp.eq.s32.totalorder %s16, 0
      %p116 = por %p114, %p115
      %s117 = sadd.s32 %s17, %s19
      %s118 = sadd.s32 %s36, %s28
      %s119 = ssub.s32 %s117, %s118
      %p120 = scmp.eq.s32.totalorder %s119, 0
      %s122 = sadd.s32 %s121, 1
      %s123 = scalar_select %p120, %s121, %s122
      %p126 = pneg %p120
      %p127 = scmp.eq.s32.totalorder %s10, 1
      %p128 = por %p126, %p127
      %p129 = scmp.ne.s32.totalorder %s121, %s124
      %p130 = scmp.eq.s32.totalorder %s10, 0
      %p131 = por %p129, %p130
      %p132 = scmp.ne.s32.totalorder %s121, %s124
      %p133 = scmp.eq.s32.totalorder %s15, 1
      %p134 = por %p132, %p133
      %p135 = scmp.ne.s32.totalorder %s124, %s125
      %p136 = scmp.eq.s32.totalorder %s15, 0
      %p137 = por %p135, %p136
      %p138 = scmp.ne.s32.totalorder %s124, %s125
      %p139 = scmp.eq.s32.totalorder %s16, 1
      %p140 = por %p138, %p139
      %p142 = scmp.ne.s32.totalorder %s125, %s141
      %p143 = scmp.eq.s32.totalorder %s16, 0
      %p144 = por %p142, %p143
      %s145 = sadd.s32 %s17, %s18
      %s146 = sadd.s32 %s36, %s32
      %s147 = ssub.s32 %s145, %s146
      %p148 = scmp.eq.s32.totalorder %s147, 0
      %s150 = sadd.s32 %s149, 1
      %s151 = scalar_select %p148, %s149, %s150
      %p154 = pneg %p148
      %p155 = scmp.eq.s32.totalorder %s10, 1
      %p156 = por %p154, %p155
      %p157 = scmp.ne.s32.totalorder %s149, %s152
      %p158 = scmp.eq.s32.totalorder %s10, 0
      %p159 = por %p157, %p158
      %p160 = scmp.ne.s32.totalorder %s149, %s152
      %p161 = scmp.eq.s32.totalorder %s15, 1
      %p162 = por %p160, %p161
      %p163 = scmp.ne.s32.totalorder %s152, %s153
      %p164 = scmp.eq.s32.totalorder %s15, 0
      %p165 = por %p163, %p164
      %p166 = scmp.ne.s32.totalorder %s152, %s153
      %p167 = scmp.eq.s32.totalorder %s16, 1
      %p168 = por %p166, %p167
      %p170 = scmp.ne.s32.totalorder %s153, %s169
      %p171 = scmp.eq.s32.totalorder %s16, 0
      %p172 = por %p170, %p171
      %p173 = scmp.le.s32.totalorder 1, %s10
      %p174 = scmp.lt.s32.totalorder %s10, 3
      %p175 = pnand %p173, %p174
      %p176 = pneg %p175
      // Predicated region
      $region9: #{nst_forward.13} parent=5 // pred_check
        _
      $region10: #{nst_forward.13} parent=5 // pred_check_branch
        %178 = sbr.rel (%p175) target = $region12
      $region11: #{nst_forward.13} parent=5 // pred_region
        %s179 = ssub.s32 %s10, 1
      $region12: #{nst_forward.13} parent=5 // pred_fallthru
        _
      %p180 = scmp.lt.s32.totalorder %s10, 2
      // Predicated region
      $region13: #{nst_forward.13} parent=5 // pred_check
        %p181 = pneg %p180
      $region14: #{nst_forward.13} parent=5 // pred_check_branch
        %183 = sbr.rel (%p181) target = $region16
      $region15: #{nst_forward.13} parent=5 // pred_region
        // Predicated region
        $region17: #{nst_forward.13} parent=15 // pred_check
          %p184 = pneg %p49
        $region18: #{nst_forward.13} parent=15 // pred_check_branch
          %186 = sbr.rel (%p184) target = $region20
        $region19: #{nst_forward.13} parent=15 // pred_region
          %p187 = scmp.lt.s32.totalorder %s17, 1
          %s188 = scalar_select %p187, %s17, 1
          %s189 = smul.addr %s188, 4
          %s190 = smul.addr %s189, 8
          %s191 = scalar_lea.vmem %s0, %s190
        $region20: #{nst_forward.13} parent=15 // pred_fallthru
          _
        // Predicated region
        $region21: #{nst_forward.13} parent=15 // pred_check
          %p192 = pneg %p75
        $region22: #{nst_forward.13} parent=15 // pred_check_branch
          %194 = sbr.rel (%p192) target = $region24
        $region23: #{nst_forward.13} parent=15 // pred_region
          %p195 = scmp.lt.s32.totalorder %s17, 1
          %s196 = scalar_select %p195, %s17, 1
          %s197 = smul.addr %s196, 4
          %s198 = smul.addr %s197, 8
          %s199 = scalar_lea.vmem %s1, %s198
        $region24: #{nst_forward.13} parent=15 // pred_fallthru
          _
        // Predicated region
        $region25: #{nst_forward.13} parent=15 // pred_check
          %p200 = pneg %p103
        $region26: #{nst_forward.13} parent=15 // pred_check_branch
          %202 = sbr.rel (%p200) target = $region28
        $region27: #{nst_forward.13} parent=15 // pred_region
          %s203 = sand.u32 %s93, 1
          %s204 = sand.u32 %s93, 1
          %s205 = smul.addr %s204, 16
          %s206 = scalar_lea.vmem [#allocation6], %s205
          %s207 = sadd.s32 %s17, %s18
          %s208 = smul.addr %s207, 4
          %s209 = scalar_lea.vmem %s2, %s208
          // Predicated region
          $region29: #{nst_forward.13} parent=27 // pred_check
            _
          $region30: #{nst_forward.13} parent=27 // pred_check_branch
            %211 = sbr.rel (0) target = $region32
          $region31: #{nst_forward.13} parent=27 // pred_region
            // Predicated region
            $region33: #{nst_forward.13} parent=31 // pred_check
              _
            $region34: #{nst_forward.13} parent=31 // pred_check_branch
              %213 = sbr.rel target = $region36
            $region35: #{nst_forward.13} parent=31 // pred_region
              // Predicated region
              $region48: #{nst_forward.13} parent=35 // pred_check
                _
              $region49: #{nst_forward.13} parent=35 // pred_check_branch
                %235 = sbr.rel (0) target = $region51
              $region50: #{nst_forward.13} parent=35 // pred_region
                loop: start=0, step=1, limit=1
                $region52: #{nst_forward.13} parent=50 // loop_pre_header
                  _
                $region53: #{nst_forward.13} parent=50 // loop_header
                  %s237 = sphi 0, %s241
                  %p238 = scmp.ge.s32.totalorder %s237, 1
                  %s242 = sphi %s209, %s209
                  %s243 = sphi %s206, %s206
                $region54: #{nst_forward.13} parent=50 // loop_header_branch
                  %240 = sbr.rel (%p238) target = $region58
                $region55: #{nst_forward.13} parent=50 // loop_body
                  _
                $region56: #{nst_forward.13} parent=50 // loop_footer
                  %s241 = sadd.s32 1, %s237
                $region57: #{nst_forward.13} parent=50 // loop_footer_branch
                  %236 = sbr.rel target = $region53
                $region58: #{nst_forward.13} parent=50 // loop_exit
                  _
                %s245 = ssub.s32 16, 1
                loop: start=0, step=1, limit=1
                $region59: #{nst_forward.13} parent=50 // loop_pre_header
                  _
                $region60: #{nst_forward.13} parent=50 // loop_header
                  %s247 = sphi 0, %s251
                  %p248 = scmp.ge.s32.totalorder %s247, 1
                  %s252 = sphi %s209, %s209
                  %s253 = sphi %s206, %s206
                $region61: #{nst_forward.13} parent=50 // loop_header_branch
                  %250 = sbr.rel (%p248) target = $region65
                $region62: #{nst_forward.13} parent=50 // loop_body
                  %v254 = vld [vmem:[%s252] sm:%s245]
                  %255 = vst [vmem:[%s253] sm:%s245] %v254
                  %v256 = vld [vmem:[%s252 + $0x8] sm:%s245]
                  %257 = vst [vmem:[%s253 + $0x4] sm:%s245] %v256
                  %v258 = vld [vmem:[%s252 + $0x10] sm:%s245]
                  %259 = vst [vmem:[%s253 + $0x8] sm:%s245] %v258
                  %v260 = vld [vmem:[%s252 + $0x18] sm:%s245]
                  %261 = vst [vmem:[%s253 + $0xc] sm:%s245] %v260
                $region63: #{nst_forward.13} parent=50 // loop_footer
                  %s251 = sadd.s32 1, %s247
                $region64: #{nst_forward.13} parent=50 // loop_footer_branch
                  %246 = sbr.rel target = $region60
                $region65: #{nst_forward.13} parent=50 // loop_exit
                  _
              $region51: #{nst_forward.13} parent=35 // pred_fallthru
                _
            $region36: #{nst_forward.13} parent=31 // pred_fallthru
              _
            // Predicated region
            $region37: #{nst_forward.13} parent=31 // pred_check
              _
            $region38: #{nst_forward.13} parent=31 // pred_check_branch
              %215 = sbr.rel (0) target = $region40
            $region39: #{nst_forward.13} parent=31 // pred_region
              %s217 = ssub.s32 16, 1
              loop: start=0, step=1, limit=1
              $region41: #{nst_forward.13} parent=39 // loop_pre_header
                _
              $region42: #{nst_forward.13} parent=39 // loop_header
                %s219 = sphi 0, %s223
                %p220 = scmp.ge.s32.totalorder %s219, 1
                %s224 = sphi %s209, %s209
                %s225 = sphi %s206, %s206
              $region43: #{nst_forward.13} parent=39 // loop_header_branch
                %222 = sbr.rel (%p220) target = $region47
              $region44: #{nst_forward.13} parent=39 // loop_body
                %v226 = vld [vmem:[%s224] sm:%s217]
                %227 = vst [vmem:[%s225] sm:%s217] %v226
                %v228 = vld [vmem:[%s224 + $0x8] sm:%s217]
                %229 = vst [vmem:[%s225 + $0x4] sm:%s217] %v228
                %v230 = vld [vmem:[%s224 + $0x10] sm:%s217]
                %231 = vst [vmem:[%s225 + $0x8] sm:%s217] %v230
                %v232 = vld [vmem:[%s224 + $0x18] sm:%s217]
                %233 = vst [vmem:[%s225 + $0xc] sm:%s217] %v232
              $region45: #{nst_forward.13} parent=39 // loop_footer
                %s223 = sadd.s32 1, %s219
              $region46: #{nst_forward.13} parent=39 // loop_footer_branch
                %218 = sbr.rel target = $region42
              $region47: #{nst_forward.13} parent=39 // loop_exit
                _
            $region40: #{nst_forward.13} parent=31 // pred_fallthru
              _
          $region32: #{nst_forward.13} parent=27 // pred_fallthru
            _
          %262 = vnop
        $region28: #{nst_forward.13} parent=15 // pred_fallthru
          _
        // Predicated region
        $region66: #{nst_forward.13} parent=15 // pred_check
          %p263 = pneg %p131
        $region67: #{nst_forward.13} parent=15 // pred_check_branch
          %265 = sbr.rel (%p263) target = $region69
        $region68: #{nst_forward.13} parent=15 // pred_region
          %s266 = sand.u32 %s121, 1
          %s267 = sand.u32 %s121, 1
          %s268 = smul.addr %s267, 16
          %s269 = scalar_lea.vmem [#allocation7], %s268
          %s270 = sadd.s32 %s17, %s19
          %s271 = smul.addr %s270, 4
          %s272 = scalar_lea.vmem %s3, %s271
          // Predicated region
          $region70: #{nst_forward.13} parent=68 // pred_check
            _
          $region71: #{nst_forward.13} parent=68 // pred_check_branch
            %274 = sbr.rel (0) target = $region73
          $region72: #{nst_forward.13} parent=68 // pred_region
            // Predicated region
            $region74: #{nst_forward.13} parent=72 // pred_check
              _
            $region75: #{nst_forward.13} parent=72 // pred_check_branch
              %276 = sbr.rel target = $region77
            $region76: #{nst_forward.13} parent=72 // pred_region
              // Predicated region
              $region89: #{nst_forward.13} parent=76 // pred_check
                _
              $region90: #{nst_forward.13} parent=76 // pred_check_branch
                %298 = sbr.rel (0) target = $region92
              $region91: #{nst_forward.13} parent=76 // pred_region
                loop: start=0, step=1, limit=1
                $region93: #{nst_forward.13} parent=91 // loop_pre_header
                  _
                $region94: #{nst_forward.13} parent=91 // loop_header
                  %s300 = sphi 0, %s304
                  %p301 = scmp.ge.s32.totalorder %s300, 1
                  %s305 = sphi %s272, %s272
                  %s306 = sphi %s269, %s269
                $region95: #{nst_forward.13} parent=91 // loop_header_branch
                  %303 = sbr.rel (%p301) target = $region99
                $region96: #{nst_forward.13} parent=91 // loop_body
                  _
                $region97: #{nst_forward.13} parent=91 // loop_footer
                  %s304 = sadd.s32 1, %s300
                $region98: #{nst_forward.13} parent=91 // loop_footer_branch
                  %299 = sbr.rel target = $region94
                $region99: #{nst_forward.13} parent=91 // loop_exit
                  _
                %s308 = ssub.s32 16, 1
                loop: start=0, step=1, limit=1
                $region100: #{nst_forward.13} parent=91 // loop_pre_header
                  _
                $region101: #{nst_forward.13} parent=91 // loop_header
                  %s310 = sphi 0, %s314
                  %p311 = scmp.ge.s32.totalorder %s310, 1
                  %s315 = sphi %s272, %s272
                  %s316 = sphi %s269, %s269
                $region102: #{nst_forward.13} parent=91 // loop_header_branch
                  %313 = sbr.rel (%p311) target = $region106
                $region103: #{nst_forward.13} parent=91 // loop_body
                  %v317 = vld [vmem:[%s315] sm:%s308]
                  %318 = vst [vmem:[%s316] sm:%s308] %v317
                  %v319 = vld [vmem:[%s315 + $0x8] sm:%s308]
                  %320 = vst [vmem:[%s316 + $0x4] sm:%s308] %v319
                  %v321 = vld [vmem:[%s315 + $0x10] sm:%s308]
                  %322 = vst [vmem:[%s316 + $0x8] sm:%s308] %v321
                  %v323 = vld [vmem:[%s315 + $0x18] sm:%s308]
                  %324 = vst [vmem:[%s316 + $0xc] sm:%s308] %v323
                $region104: #{nst_forward.13} parent=91 // loop_footer
                  %s314 = sadd.s32 1, %s310
                $region105: #{nst_forward.13} parent=91 // loop_footer_branch
                  %309 = sbr.rel target = $region101
                $region106: #{nst_forward.13} parent=91 // loop_exit
                  _
              $region92: #{nst_forward.13} parent=76 // pred_fallthru
                _
            $region77: #{nst_forward.13} parent=72 // pred_fallthru
              _
            // Predicated region
            $region78: #{nst_forward.13} parent=72 // pred_check
              _
            $region79: #{nst_forward.13} parent=72 // pred_check_branch
              %278 = sbr.rel (0) target = $region81
            $region80: #{nst_forward.13} parent=72 // pred_region
              %s280 = ssub.s32 16, 1
              loop: start=0, step=1, limit=1
              $region82: #{nst_forward.13} parent=80 // loop_pre_header
                _
              $region83: #{nst_forward.13} parent=80 // loop_header
                %s282 = sphi 0, %s286
                %p283 = scmp.ge.s32.totalorder %s282, 1
                %s287 = sphi %s272, %s272
                %s288 = sphi %s269, %s269
              $region84: #{nst_forward.13} parent=80 // loop_header_branch
                %285 = sbr.rel (%p283) target = $region88
              $region85: #{nst_forward.13} parent=80 // loop_body
                %v289 = vld [vmem:[%s287] sm:%s280]
                %290 = vst [vmem:[%s288] sm:%s280] %v289
                %v291 = vld [vmem:[%s287 + $0x8] sm:%s280]
                %292 = vst [vmem:[%s288 + $0x4] sm:%s280] %v291
                %v293 = vld [vmem:[%s287 + $0x10] sm:%s280]
                %294 = vst [vmem:[%s288 + $0x8] sm:%s280] %v293
                %v295 = vld [vmem:[%s287 + $0x18] sm:%s280]
                %296 = vst [vmem:[%s288 + $0xc] sm:%s280] %v295
              $region86: #{nst_forward.13} parent=80 // loop_footer
                %s286 = sadd.s32 1, %s282
              $region87: #{nst_forward.13} parent=80 // loop_footer_branch
                %281 = sbr.rel target = $region83
              $region88: #{nst_forward.13} parent=80 // loop_exit
                _
            $region81: #{nst_forward.13} parent=72 // pred_fallthru
              _
          $region73: #{nst_forward.13} parent=68 // pred_fallthru
            _
          %325 = vnop
        $region69: #{nst_forward.13} parent=15 // pred_fallthru
          _
      $region16: #{nst_forward.13} parent=5 // pred_fallthru
        _
      %p326 = scmp.le.s32.totalorder 1, %s10
      %p327 = scmp.lt.s32.totalorder %s10, 3
      %p328 = pnand %p326, %p327
      %p329 = pneg %p328
      // Predicated region
      $region107: #{nst_forward.13} parent=5 // pred_check
        _
      $region108: #{nst_forward.13} parent=5 // pred_check_branch
        %331 = sbr.rel (%p328) target = $region110
      $region109: #{nst_forward.13} parent=5 // pred_region
        %s332 = ssub.s32 %s10, 1
        %s333 = sand.u32 %s96, 1
        %s334 = sand.u32 %s96, 1
        %s335 = smul.addr %s334, 16
        %s336 = scalar_lea.vmem [#allocation6], %s335
        // Predicated region
        $region111: #{nst_forward.13} parent=109 // pred_check
          %p337 = pneg %p109
        $region112: #{nst_forward.13} parent=109 // pred_check_branch
          %339 = sbr.rel (%p337) target = $region114
        $region113: #{nst_forward.13} parent=109 // pred_region
          _
        $region114: #{nst_forward.13} parent=109 // pred_fallthru
          _
        %s340 = sand.u32 %s124, 1
        %s341 = sand.u32 %s124, 1
        %s342 = smul.addr %s341, 16
        %s343 = scalar_lea.vmem [#allocation7], %s342
        // Predicated region
        $region115: #{nst_forward.13} parent=109 // pred_check
          %p344 = pneg %p137
        $region116: #{nst_forward.13} parent=109 // pred_check_branch
          %346 = sbr.rel (%p344) target = $region118
        $region117: #{nst_forward.13} parent=109 // pred_region
          _
        $region118: #{nst_forward.13} parent=109 // pred_fallthru
          _
        %p347 = scmp.lt.s32.totalorder %s20, 1
        %s348 = scalar_select %p347, %s20, 1
        %s349 = smul.addr %s348, 4
        %s350 = smul.addr %s349, 8
        %s351 = scalar_lea.vmem %s0, %s350
        %p352 = pneg %p55
        %p353 = pneg %p52
        %p354 = scmp.lt.s32.totalorder %s20, 1
        %s355 = scalar_select %p354, %s20, 1
        %s356 = smul.addr %s355, 4
        %s357 = smul.addr %s356, 8
        %s358 = scalar_lea.vmem %s1, %s357
        %p359 = pneg %p81
        %p360 = pneg %p78
        %s361 = sand.u32 %s96, 1
        %s362 = sand.u32 %s96, 1
        %s363 = smul.addr %s362, 16
        %s364 = scalar_lea.vmem [#allocation6], %s363
        %p365 = pneg %p109
        %p366 = pneg %p106
        %s367 = sand.u32 %s124, 1
        %s368 = sand.u32 %s124, 1
        %s369 = smul.addr %s368, 16
        %s370 = scalar_lea.vmem [#allocation7], %s369
        %p371 = pneg %p137
        %p372 = pneg %p134
        %p373 = pneg %p165
        %p374 = pneg %p162
        %s375 = sand.u32 %s152, 1
        %s376 = sand.u32 %s152, 1
        %s377 = smul.addr %s376, 16
        %s378 = scalar_lea.vmem [#allocation8], %s377
        %p379 = scmp.lt.s32.totalorder %s20, 1
        %s380 = scalar_select %p379, %s20, 1
        %s381 = smul.addr %s380, 4
        %s382 = smul.addr %s381, 8
        %s383 = scalar_lea.vmem %s0, %s382
        %p384 = scmp.lt.s32.totalorder %s20, 1
        %s385 = scalar_select %p384, %s20, 1
        %s386 = smul.addr %s385, 4
        %s387 = smul.addr %s386, 8
        %s388 = scalar_lea.vmem %s1, %s387
        %s389 = sadd.s32 %s20, %s21
        %s390 = sadd.s32 %s20, %s22
        %s391 = sadd.s32 %s20, %s21
        %p393 = scmp.eq.s32.totalorder %s22, 0
        // Predicated region
        $region119: #{nst_forward.13} parent=109 // pred_check
          %p394 = pneg %p393
        $region120: #{nst_forward.13} parent=109 // pred_check_branch
          %396 = sbr.rel (%p394) target = $region122
        $region121: #{nst_forward.13} parent=109 // pred_region
          %397 = vst [vmem:[#allocation2] sm:$0x1] -inf
          %398 = vst [vmem:[#allocation3] sm:$0x1] 0.0
          %399 = vst [vmem:[#allocation4] sm:$0xff] 0.0
          %400 = vst [vmem:[#allocation4 + $0x8] sm:$0xff] 0.0
          %401 = vst [vmem:[#allocation4 + $0x10] sm:$0xff] 0.0
          %402 = vst [vmem:[#allocation4 + $0x18] sm:$0xff] 0.0
          %v403 = vld [vmem:[%s336] sm:$0xf]
          %v404 = vld [vmem:[%s336 + $0x4] sm:$0xf]
          %v405 = vld [vmem:[%s336 + $0x8] sm:$0xf]
          %v406 = vld [vmem:[%s336 + $0xc] sm:$0xf]
          %v407 = vunpack.c.l.bf16 %v403
          %v408 = vunpack.c.l.bf16 %v404
          %v409 = vunpack.c.l.bf16 %v405
          %v410 = vunpack.c.l.bf16 %v406
          %v411 = vld [vmem:[%s383] sm:$0xff]
          %v412 = vld [vmem:[%s383 + $0x8] sm:$0xff]
          %v413 = vld [vmem:[%s383 + $0x10] sm:$0xff]
          %v414 = vld [vmem:[%s383 + $0x18] sm:$0xff]
          %416 = vset.pattern.permute.xlu0 0
          %417 = vperm.xlu0 %416, %v411
          %v418 = vpop.permute.xlu0 %417
          %421 = vset.pattern.permute.xlu0 0
          %422 = vperm.xlu0 %421, %v412
          %v423 = vpop.permute.xlu0 %422
          %426 = vset.pattern.permute.xlu0 0
          %427 = vperm.xlu0 %426, %v413
          %v428 = vpop.permute.xlu0 %427
          %431 = vset.pattern.permute.xlu0 0
          %432 = vperm.xlu0 %431, %v414
          %v433 = vpop.permute.xlu0 %432
          %v435 = vsub.f32 %v407, %v418
          %v436 = vsub.f32 %v408, %v423
          %v437 = vsub.f32 %v409, %v428
          %v438 = vsub.f32 %v410, %v433
          %v439 = vmul.f32 %v435, %v435
          %v440 = vmul.f32 %v436, %v436
          %v441 = vmul.f32 %v437, %v437
          %v442 = vmul.f32 %v438, %v438
          %v443 = vadd.f32 %v439, %v440
          %v444 = vadd.f32 %v443, %v441
          %v445 = vadd.f32 %v444, %v442
          %v446 = vrot.slane %v445, 4
          %v447 = vadd.f32 %v445, %v446
          %v448 = vrot.slane %v447, 2
          %v449 = vadd.f32 %v447, %v448
          %v450 = vrot.slane %v449, 1
          %v451 = vadd.f32 %v449, %v450
          %v452 = vadd.f32 %v451, 1e-05
          %v453 = vrsqrt.pop %v452
          %v454 = vmul.f32 %v453, %v452
          %v455 = vmul.f32 %v454, %v453
          %v456 = vmul.f32 0.5, %v455
          %v457 = vsub.f32 1.5, %v456
          %v458 = vmul.f32 %v453, %v457
          %vm459 = vweird.f32 %v452
          %vm460 = vweird.f32 %v453
          %vm461 = vmor %vm459, %vm460
          %v462 = vsel %vm461, %v453, %v458
          %v463 = vmul.f32 %v435, %v462
          %v464 = vmul.f32 %v436, %v462
          %v465 = vmul.f32 %v437, %v462
          %v466 = vmul.f32 %v438, %v462
          %v467 = vpack.c.bf16 %v463, %v463
          %v468 = vpack.c.bf16 %v464, %v464
          %v469 = vpack.c.bf16 %v465, %v465
          %v470 = vpack.c.bf16 %v466, %v466
          %471 = vst [vmem:[#allocation5] sm:$0xf] %v467
          %472 = vst [vmem:[#allocation5 + $0x4] sm:$0xf] %v468
          %473 = vst [vmem:[#allocation5 + $0x8] sm:$0xf] %v469
          %474 = vst [vmem:[#allocation5 + $0xc] sm:$0xf] %v470
        $region122: #{nst_forward.13} parent=109 // pred_fallthru
          _
        %v475 = vld [vmem:[%s343] sm:$0xf]
        %v476 = vld [vmem:[%s343 + $0x4] sm:$0xf]
        %v477 = vld [vmem:[%s343 + $0x8] sm:$0xf]
        %v478 = vld [vmem:[%s343 + $0xc] sm:$0xf]
        %v479 = vunpack.c.l.bf16 %v475
        %v480 = vunpack.c.l.bf16 %v476
        %v481 = vunpack.c.l.bf16 %v477
        %v482 = vunpack.c.l.bf16 %v478
        %v483 = vld [vmem:[%s388] sm:$0xff]
        %v484 = vld [vmem:[%s388 + $0x8] sm:$0xff]
        %v485 = vld [vmem:[%s388 + $0x10] sm:$0xff]
        %v486 = vld [vmem:[%s388 + $0x18] sm:$0xff]
        %488 = vset.pattern.permute.xlu0 0
        %489 = vperm.xlu0 %488, %v483
        %v490 = vpop.permute.xlu0 %489
        %493 = vset.pattern.permute.xlu0 0
        %494 = vperm.xlu0 %493, %v484
        %v495 = vpop.permute.xlu0 %494
        %498 = vset.pattern.permute.xlu0 0
        %499 = vperm.xlu0 %498, %v485
        %v500 = vpop.permute.xlu0 %499
        %503 = vset.pattern.permute.xlu0 0
        %504 = vperm.xlu0 %503, %v486
        %v505 = vpop.permute.xlu0 %504
        %v507 = vsub.f32 %v479, %v490
        %v508 = vsub.f32 %v480, %v495
        %v509 = vsub.f32 %v481, %v500
        %v510 = vsub.f32 %v482, %v505
        %v511 = vmul.f32 %v507, %v507
        %v512 = vmul.f32 %v508, %v508
        %v513 = vmul.f32 %v509, %v509
        %v514 = vmul.f32 %v510, %v510
        %v515 = vadd.f32 %v511, %v512
        %v516 = vadd.f32 %v515, %v513
        %v517 = vadd.f32 %v516, %v514
        %v518 = vrot.slane %v517, 4
        %v519 = vadd.f32 %v517, %v518
        %v520 = vrot.slane %v519, 2
        %v521 = vadd.f32 %v519, %v520
        %v522 = vrot.slane %v521, 1
        %v523 = vadd.f32 %v521, %v522
        %v524 = vadd.f32 %v523, 1e-05
        %v525 = vrsqrt.pop %v524
        %v526 = vmul.f32 %v525, %v524
        %v527 = vmul.f32 %v526, %v525
        %v528 = vmul.f32 0.5, %v527
        %v529 = vsub.f32 1.5, %v528
        %v530 = vmul.f32 %v525, %v529
        %vm531 = vweird.f32 %v524
        %vm532 = vweird.f32 %v525
        %vm533 = vmor %vm531, %vm532
        %v534 = vsel %vm533, %v525, %v530
        %v535 = vmul.f32 %v507, %v534
        %v536 = vmul.f32 %v508, %v534
        %v537 = vmul.f32 %v509, %v534
        %v538 = vmul.f32 %v510, %v534
        %v539 = vpack.c.bf16 %v536, %v535
        %v540 = vpack.c.bf16 %v538, %v537
        %v541 = vld [vmem:[#allocation5] sm:$0xf]
        %v542 = vld [vmem:[#allocation5 + $0x4] sm:$0xf]
        %v543 = vld [vmem:[#allocation5 + $0x8] sm:$0xf]
        %v544 = vld [vmem:[#allocation5 + $0xc] sm:$0xf]
        %545 = vxpose.xlu0.c.b16.start [1/8] %v539, 128
        %546 = vxpose.xlu0.c.b16.cont [2/8] %v540, 128
        %547 = vxpose.xlu0.c.b16.cont [3/8] 0, 128
        %548 = vxpose.xlu0.c.b16.cont [4/8] 0, 128
        %549 = vxpose.xlu0.c.b16.cont [5/8] 0, 128
        %550 = vxpose.xlu0.c.b16.cont [6/8] 0, 128
        %551 = vxpose.xlu0.c.b16.cont [7/8] 0, 128
        %552 = vxpose.xlu0.c.b16.end [8/8] 0, 128
        %v553 = vpop.trf.xlu0
        %v554 = vpop.trf.xlu0
        %v555 = vpop.trf.xlu0
        %v556 = vpop.trf.xlu0
        %v557 = vpop.trf.xlu0
        %v558 = vpop.trf.xlu0
        %v559 = vpop.trf.xlu0
        %v560 = vpop.trf.xlu0
        %v565 = vunpack.c.l.b16 %v541
        %v566 = vunpack.c.l.b16 %v542
        %v567 = vunpack.c.l.b16 %v543
        %v568 = vunpack.c.l.b16 %v544
        %v569 = vpack.c.b16 %v566, %v565
        %v570 = vpack.c.b16 %v568, %v567
        %vm573 = vcmask 261120
        %v575 = vsel %vm573, %v553, 0
        %v578 = vsel %vm573, %v554, 0
        %v581 = vsel %vm573, %v555, 0
        %v584 = vsel %vm573, %v556, 0
        %v587 = vsel %vm573, %v557, 0
        %v590 = vsel %vm573, %v558, 0
        %v593 = vsel %vm573, %v559, 0
        %v596 = vsel %vm573, %v560, 0
        %598 = vmatpush.bf16.msra.mxu0 0
        %599 = vmatpush.bf16.msra.mxu0 0
        %600 = vmatpush.bf16.msra.mxu0 0
        %601 = vmatpush.bf16.msra.mxu0 0
        %602 = vmatpush.bf16.msra.mxu0 0
        %603 = vmatpush.bf16.msra.mxu0 0
        %604 = vmatpush.bf16.msra.mxu0 %v570
        %605 = vmatpush.bf16.msra.mxu0 %v569
        %606 = vmatmul.bf16.gmra.mxu0 %v575
        %v607 = vpop.f32.mrf.mxu0
        %v608 = vadd.f32 0.0, %v607
        %v609 = vpop.f32.mrf.mxu0
        %v610 = vadd.f32 0.0, %v609
        %611 = vmatmul.bf16.gmra.mxu0 %v578
        %v612 = vpop.f32.mrf.mxu0
        %v613 = vadd.f32 0.0, %v612
        %v614 = vpop.f32.mrf.mxu0
        %v615 = vadd.f32 0.0, %v614
        %616 = vmatmul.bf16.gmra.mxu0 %v581
        %v617 = vpop.f32.mrf.mxu0
        %v618 = vadd.f32 0.0, %v617
        %v619 = vpop.f32.mrf.mxu0
        %v620 = vadd.f32 0.0, %v619
        %621 = vmatmul.bf16.gmra.mxu0 %v584
        %v622 = vpop.f32.mrf.mxu0
        %v623 = vadd.f32 0.0, %v622
        %v624 = vpop.f32.mrf.mxu0
        %v625 = vadd.f32 0.0, %v624
        %626 = vmatmul.bf16.gmra.mxu0 %v587
        %v627 = vpop.f32.mrf.mxu0
        %v628 = vadd.f32 0.0, %v627
        %v629 = vpop.f32.mrf.mxu0
        %v630 = vadd.f32 0.0, %v629
        %631 = vmatmul.bf16.gmra.mxu0 %v590
        %v632 = vpop.f32.mrf.mxu0
        %v633 = vadd.f32 0.0, %v632
        %v634 = vpop.f32.mrf.mxu0
        %v635 = vadd.f32 0.0, %v634
        %636 = vmatmul.bf16.gmra.mxu0 %v593
        %v637 = vpop.f32.mrf.mxu0
        %v638 = vadd.f32 0.0, %v637
        %v639 = vpop.f32.mrf.mxu0
        %v640 = vadd.f32 0.0, %v639
        %641 = vmatmul.bf16.gmra.mxu0 %v596
        %v642 = vpop.f32.mrf.mxu0
        %v643 = vadd.f32 0.0, %v642
        %v644 = vpop.f32.mrf.mxu0
        %v645 = vadd.f32 0.0, %v644
        %646 = vdwg.mxu0
        %v647 = vlaneseq
        %v648 = vshrl.u32 %v647, 7
        %v649 = vadd.s32 %v648, 8
        %v650 = vadd.s32 %v648, 16
        %v651 = vadd.s32 %v648, 24
        %v652 = vadd.s32 %v648, 32
        %v653 = vadd.s32 %v648, 40
        %v654 = vadd.s32 %v648, 48
        %v655 = vadd.s32 %v648, 56
        %v656 = vadd.s32 %v648, 64
        %v657 = vadd.s32 %v648, 72
        %v658 = vadd.s32 %v648, 80
        %v659 = vadd.s32 %v648, 88
        %v660 = vadd.s32 %v648, 96
        %v661 = vadd.s32 %v648, 104
        %v662 = vadd.s32 %v648, 112
        %v663 = vadd.s32 %v648, 120
        %s664 = smul.u32 %s22, 128
        %v665 = vstv %s664
        %v666 = vadd.s32 %v648, %v665
        %v667 = vadd.s32 %v649, %v665
        %v668 = vadd.s32 %v650, %v665
        %v669 = vadd.s32 %v651, %v665
        %v670 = vadd.s32 %v652, %v665
        %v671 = vadd.s32 %v653, %v665
        %v672 = vadd.s32 %v654, %v665
        %v673 = vadd.s32 %v655, %v665
        %v674 = vadd.s32 %v656, %v665
        %v675 = vadd.s32 %v657, %v665
        %v676 = vadd.s32 %v658, %v665
        %v677 = vadd.s32 %v659, %v665
        %v678 = vadd.s32 %v660, %v665
        %v679 = vadd.s32 %v661, %v665
        %v680 = vadd.s32 %v662, %v665
        %v681 = vadd.s32 %v663, %v665
        %vm682 = vcmp.lt.s32.totalorder %v666, 64
        %vm683 = vcmp.lt.s32.totalorder %v667, 64
        %vm684 = vcmp.lt.s32.totalorder %v668, 64
        %vm685 = vcmp.lt.s32.totalorder %v669, 64
        %vm686 = vcmp.lt.s32.totalorder %v670, 64
        %vm687 = vcmp.lt.s32.totalorder %v671, 64
        %vm688 = vcmp.lt.s32.totalorder %v672, 64
        %vm689 = vcmp.lt.s32.totalorder %v673, 64
        %vm690 = vcmp.lt.s32.totalorder %v674, 64
        %vm691 = vcmp.lt.s32.totalorder %v675, 64
        %vm692 = vcmp.lt.s32.totalorder %v676, 64
        %vm693 = vcmp.lt.s32.totalorder %v677, 64
        %vm694 = vcmp.lt.s32.totalorder %v678, 64
        %vm695 = vcmp.lt.s32.totalorder %v679, 64
        %vm696 = vcmp.lt.s32.totalorder %v680, 64
        %vm697 = vcmp.lt.s32.totalorder %v681, 64
        %v698 = vsel %vm682, 1, 0
        %v699 = vsel %vm683, 1, 0
        %v700 = vsel %vm684, 1, 0
        %v701 = vsel %vm685, 1, 0
        %v702 = vsel %vm686, 1, 0
        %v703 = vsel %vm687, 1, 0
        %v704 = vsel %vm688, 1, 0
        %v705 = vsel %vm689, 1, 0
        %v706 = vsel %vm690, 1, 0
        %v707 = vsel %vm691, 1, 0
        %v708 = vsel %vm692, 1, 0
        %v709 = vsel %vm693, 1, 0
        %v710 = vsel %vm694, 1, 0
        %v711 = vsel %vm695, 1, 0
        %v712 = vsel %vm696, 1, 0
        %v713 = vsel %vm697, 1, 0
        %vm714 = vcmp.eq.s32.totalorder %v698, 1
        %vm715 = vcmp.eq.s32.totalorder %v699, 1
        %vm716 = vcmp.eq.s32.totalorder %v700, 1
        %vm717 = vcmp.eq.s32.totalorder %v701, 1
        %vm718 = vcmp.eq.s32.totalorder %v702, 1
        %vm719 = vcmp.eq.s32.totalorder %v703, 1
        %vm720 = vcmp.eq.s32.totalorder %v704, 1
        %vm721 = vcmp.eq.s32.totalorder %v705, 1
        %vm722 = vcmp.eq.s32.totalorder %v706, 1
        %vm723 = vcmp.eq.s32.totalorder %v707, 1
        %vm724 = vcmp.eq.s32.totalorder %v708, 1
        %vm725 = vcmp.eq.s32.totalorder %v709, 1
        %vm726 = vcmp.eq.s32.totalorder %v710, 1
        %vm727 = vcmp.eq.s32.totalorder %v711, 1
        %vm728 = vcmp.eq.s32.totalorder %v712, 1
        %vm729 = vcmp.eq.s32.totalorder %v713, 1
        %v730 = vsel %vm714, %v608, -inf
        %v731 = vsel %vm715, %v610, -inf
        %v732 = vsel %vm716, %v613, -inf
        %v733 = vsel %vm717, %v615, -inf
        %v734 = vsel %vm718, %v618, -inf
        %v735 = vsel %vm719, %v620, -inf
        %v736 = vsel %vm720, %v623, -inf
        %v737 = vsel %vm721, %v625, -inf
        %v738 = vsel %vm722, %v628, -inf
        %v739 = vsel %vm723, %v630, -inf
        %v740 = vsel %vm724, %v633, -inf
        %v741 = vsel %vm725, %v635, -inf
        %v742 = vsel %vm726, %v638, -inf
        %v743 = vsel %vm727, %v640, -inf
        %v744 = vsel %vm728, %v643, -inf
        %v745 = vsel %vm729, %v645, -inf
        %v746 = vld [vmem:[#allocation2] sm:$0x1]
        %v747 = vmax.f32 %v730, %v734
        %v748 = vmax.f32 %v731, %v735
        %v749 = vmax.f32 %v732, %v736
        %v750 = vmax.f32 %v733, %v737
        %v751 = vmax.f32 %v747, %v738
        %v752 = vmax.f32 %v748, %v739
        %v753 = vmax.f32 %v749, %v740
        %v754 = vmax.f32 %v750, %v741
        %v755 = vmax.f32 %v751, %v742
        %v756 = vmax.f32 %v752, %v743
        %v757 = vmax.f32 %v753, %v744
        %v758 = vmax.f32 %v754, %v745
        %v759 = vmax.f32 %v755, %v756
        %v760 = vmax.f32 %v757, %v758
        %v761 = vmax.f32 %v759, %v760
        %v762 = vrot.slane %v761, 4
        %v763 = vmax.f32 %v761, %v762
        %v764 = vrot.slane %v763, 2
        %v765 = vmax.f32 %v763, %v764
        %v766 = vrot.slane %v765, 1
        %v767 = vmax.f32 %v765, %v766
        %v768 = vmax.f32 %v746, %v767
        %v769 = vsub.f32 %v746, %v768
        %v770 = vmul.f32 %v769, 1.442695
        %v771 = vpow.pop %v770
        %v773 = vperm.slane %v768, 0
        %v775 = vsub.f32 %v730, %v773
        %v776 = vsub.f32 %v731, %v773
        %v777 = vsub.f32 %v732, %v773
        %v778 = vsub.f32 %v733, %v773
        %v779 = vsub.f32 %v734, %v773
        %v780 = vsub.f32 %v735, %v773
        %v781 = vsub.f32 %v736, %v773
        %v782 = vsub.f32 %v737, %v773
        %v783 = vsub.f32 %v738, %v773
        %v784 = vsub.f32 %v739, %v773
        %v785 = vsub.f32 %v740, %v773
        %v786 = vsub.f32 %v741, %v773
        %v787 = vsub.f32 %v742, %v773
        %v788 = vsub.f32 %v743, %v773
        %v789 = vsub.f32 %v744, %v773
        %v790 = vsub.f32 %v745, %v773
        %v791 = vmul.f32 %v775, 1.442695
        %v792 = vpow.pop %v791
        %v793 = vmul.f32 %v776, 1.442695
        %v794 = vpow.pop %v793
        %v795 = vmul.f32 %v777, 1.442695
        %v796 = vpow.pop %v795
        %v797 = vmul.f32 %v778, 1.442695
        %v798 = vpow.pop %v797
        %v799 = vmul.f32 %v779, 1.442695
        %v800 = vpow.pop %v799
        %v801 = vmul.f32 %v780, 1.442695
        %v802 = vpow.pop %v801
        %v803 = vmul.f32 %v781, 1.442695
        %v804 = vpow.pop %v803
        %v805 = vmul.f32 %v782, 1.442695
        %v806 = vpow.pop %v805
        %v807 = vmul.f32 %v783, 1.442695
        %v808 = vpow.pop %v807
        %v809 = vmul.f32 %v784, 1.442695
        %v810 = vpow.pop %v809
        %v811 = vmul.f32 %v785, 1.442695
        %v812 = vpow.pop %v811
        %v813 = vmul.f32 %v786, 1.442695
        %v814 = vpow.pop %v813
        %v815 = vmul.f32 %v787, 1.442695
        %v816 = vpow.pop %v815
        %v817 = vmul.f32 %v788, 1.442695
        %v818 = vpow.pop %v817
        %v819 = vmul.f32 %v789, 1.442695
        %v820 = vpow.pop %v819
        %v821 = vmul.f32 %v790, 1.442695
        %v822 = vpow.pop %v821
        %v823 = vld [vmem:[#allocation3] sm:$0x1]
        %v824 = vmul.f32 %v771, %v823
        %v825 = vadd.f32 %v792, %v794
        %v826 = vadd.f32 %v825, %v796
        %v827 = vadd.f32 %v826, %v798
        %v828 = vadd.f32 %v827, %v800
        %v829 = vadd.f32 %v828, %v802
        %v830 = vadd.f32 %v829, %v804
        %v831 = vadd.f32 %v830, %v806
        %v832 = vadd.f32 %v831, %v808
        %v833 = vadd.f32 %v832, %v810
        %v834 = vadd.f32 %v833, %v812
        %v835 = vadd.f32 %v834, %v814
        %v836 = vadd.f32 %v835, %v816
        %v837 = vadd.f32 %v836, %v818
        %v838 = vadd.f32 %v837, %v820
        %v839 = vadd.f32 %v838, %v822
        %v840 = vrot.slane %v839, 4
        %v841 = vadd.f32 %v839, %v840
        %v842 = vrot.slane %v841, 2
        %v843 = vadd.f32 %v841, %v842
        %v844 = vrot.slane %v843, 1
        %v845 = vadd.f32 %v843, %v844
        %v846 = vadd.f32 %v824, %v845
        %847 = vst [vmem:[#allocation3] sm:$0x1] %v846
        %v848 = vld [vmem:[#allocation4] sm:$0xff]
        %v849 = vld [vmem:[#allocation4 + $0x8] sm:$0xff]
        %v850 = vld [vmem:[#allocation4 + $0x10] sm:$0xff]
        %v851 = vld [vmem:[#allocation4 + $0x18] sm:$0xff]
        %v853 = vperm.slane %v771, 0
        %v855 = vmul.f32 %v853, %v848
        %v856 = vmul.f32 %v853, %v849
        %v857 = vmul.f32 %v853, %v850
        %v858 = vmul.f32 %v853, %v851
        %v859 = vld [vmem:[%s343] sm:$0xf]
        %v860 = vld [vmem:[%s343 + $0x4] sm:$0xf]
        %v861 = vld [vmem:[%s343 + $0x8] sm:$0xf]
        %v862 = vld [vmem:[%s343 + $0xc] sm:$0xf]
        %v863 = vpack.c.bf16 %v794, %v792
        %v864 = vpack.c.bf16 %v798, %v796
        %v865 = vpack.c.bf16 %v802, %v800
        %v866 = vpack.c.bf16 %v806, %v804
        %v867 = vpack.c.bf16 %v810, %v808
        %v868 = vpack.c.bf16 %v814, %v812
        %v869 = vpack.c.bf16 %v818, %v816
        %v870 = vpack.c.bf16 %v822, %v820
        %v875 = vunpack.c.l.b16 %v859
        %v876 = vunpack.c.l.b16 %v860
        %v877 = vunpack.c.l.b16 %v861
        %v878 = vunpack.c.l.b16 %v862
        %v879 = vpack.c.b16 %v876, %v875
        %v880 = vpack.c.b16 %v878, %v877
        %883 = vmatpush.bf16.msra.mxu0 %v870
        %884 = vmatpush.bf16.msra.mxu0 %v869
        %885 = vmatpush.bf16.msra.mxu0 %v868
        %886 = vmatpush.bf16.msra.mxu0 %v867
        %887 = vmatpush.bf16.msra.mxu0 %v866
        %888 = vmatpush.bf16.msra.mxu0 %v865
        %889 = vmatpush.bf16.msra.mxu0 %v864
        %890 = vmatpush.bf16.msra.mxu0 %v863
        %891 = vmatmul.bf16.gmra.mxu0 %v879
        %v892 = vpop.f32.mrf.mxu0
        %v893 = vadd.f32 0.0, %v892
        %v894 = vpop.f32.mrf.mxu0
        %v895 = vadd.f32 0.0, %v894
        %896 = vmatmul.bf16.gmra.mxu0 %v880
        %v897 = vpop.f32.mrf.mxu0
        %v898 = vadd.f32 0.0, %v897
        %v899 = vpop.f32.mrf.mxu0
        %v900 = vadd.f32 0.0, %v899
        %901 = vdwg.mxu0
        %v902 = vadd.f32 %v855, %v893
        %v903 = vadd.f32 %v856, %v895
        %v904 = vadd.f32 %v857, %v898
        %v905 = vadd.f32 %v858, %v900
        %906 = vst [vmem:[#allocation4] sm:$0xff] %v902
        %907 = vst [vmem:[#allocation4 + $0x8] sm:$0xff] %v903
        %908 = vst [vmem:[#allocation4 + $0x10] sm:$0xff] %v904
        %909 = vst [vmem:[#allocation4 + $0x18] sm:$0xff] %v905
        %910 = vst [vmem:[#allocation2] sm:$0x1] %v768
        // Predicated region
        $region123: #{nst_forward.13} parent=109 // pred_check
          %p911 = pneg %p393
        $region124: #{nst_forward.13} parent=109 // pred_check_branch
          %913 = sbr.rel (%p911) target = $region126
        $region125: #{nst_forward.13} parent=109 // pred_region
          %v914 = vld [vmem:[#allocation4] sm:$0xff]
          %v915 = vld [vmem:[#allocation4 + $0x8] sm:$0xff]
          %v916 = vld [vmem:[#allocation4 + $0x10] sm:$0xff]
          %v917 = vld [vmem:[#allocation4 + $0x18] sm:$0xff]
          %v918 = vld [vmem:[#allocation3] sm:$0x1]
          %v919 = vrcp.pop %v918
          %v921 = vperm.slane %v919, 0
          %v923 = vmul.f32 %v914, %v921
          %v924 = vmul.f32 %v915, %v921
          %v925 = vmul.f32 %v916, %v921
          %v926 = vmul.f32 %v917, %v921
          %v927 = vmul.f32 %v923, 0.6
          %v928 = vmul.f32 %v924, 0.6
          %v929 = vmul.f32 %v925, 0.6
          %v930 = vmul.f32 %v926, 0.6
          %v931 = vld [vmem:[%s336] sm:$0xf]
          %v932 = vld [vmem:[%s336 + $0x4] sm:$0xf]
          %v933 = vld [vmem:[%s336 + $0x8] sm:$0xf]
          %v934 = vld [vmem:[%s336 + $0xc] sm:$0xf]
          %v935 = vunpack.c.l.bf16 %v931
          %v936 = vunpack.c.l.bf16 %v932
          %v937 = vunpack.c.l.bf16 %v933
          %v938 = vunpack.c.l.bf16 %v934
          %v939 = vmul.f32 %v935, 0.4
          %v940 = vmul.f32 %v936, 0.4
          %v941 = vmul.f32 %v937, 0.4
          %v942 = vmul.f32 %v938, 0.4
          %v943 = vadd.f32 %v927, %v939
          %v944 = vadd.f32 %v928, %v940
          %v945 = vadd.f32 %v929, %v941
          %v946 = vadd.f32 %v930, %v942
          %v947 = vpack.c.bf16 %v943, %v943
          %v948 = vpack.c.bf16 %v944, %v944
          %v949 = vpack.c.bf16 %v945, %v945
          %v950 = vpack.c.bf16 %v946, %v946
          %951 = vst [vmem:[%s378] sm:$0xf] %v947
          %952 = vst [vmem:[%s378 + $0x4] sm:$0xf] %v948
          %953 = vst [vmem:[%s378 + $0x8] sm:$0xf] %v949
          %954 = vst [vmem:[%s378 + $0xc] sm:$0xf] %v950
        $region126: #{nst_forward.13} parent=109 // pred_fallthru
          _
        %s955 = sand.u32 %s152, 1
        %s956 = sand.u32 %s152, 1
        %s957 = smul.addr %s956, 16
        %s958 = scalar_lea.vmem [#allocation8], %s957
        // Predicated region
        $region127: #{nst_forward.13} parent=109 // pred_check
          %p959 = pneg %p162
        $region128: #{nst_forward.13} parent=109 // pred_check_branch
          %961 = sbr.rel (%p959) target = $region130
        $region129: #{nst_forward.13} parent=109 // pred_region
          %s962 = sadd.s32 %s20, %s21
          %s963 = smul.addr %s962, 4
          %s964 = scalar_lea.vmem %s4, %s963
          // Predicated region
          $region131: #{nst_forward.13} parent=129 // pred_check
            _
          $region132: #{nst_forward.13} parent=129 // pred_check_branch
            %966 = sbr.rel (0) target = $region134
          $region133: #{nst_forward.13} parent=129 // pred_region
            // Predicated region
            $region135: #{nst_forward.13} parent=133 // pred_check
              _
            $region136: #{nst_forward.13} parent=133 // pred_check_branch
              %968 = sbr.rel target = $region138
            $region137: #{nst_forward.13} parent=133 // pred_region
              // Predicated region
              $region150: #{nst_forward.13} parent=137 // pred_check
                _
              $region151: #{nst_forward.13} parent=137 // pred_check_branch
                %990 = sbr.rel (0) target = $region153
              $region152: #{nst_forward.13} parent=137 // pred_region
                loop: start=0, step=1, limit=1
                $region154: #{nst_forward.13} parent=152 // loop_pre_header
                  _
                $region155: #{nst_forward.13} parent=152 // loop_header
                  %s992 = sphi 0, %s996
                  %p993 = scmp.ge.s32.totalorder %s992, 1
                  %s997 = sphi %s958, %s958
                  %s998 = sphi %s964, %s964
                $region156: #{nst_forward.13} parent=152 // loop_header_branch
                  %995 = sbr.rel (%p993) target = $region160
                $region157: #{nst_forward.13} parent=152 // loop_body
                  _
                $region158: #{nst_forward.13} parent=152 // loop_footer
                  %s996 = sadd.s32 1, %s992
                $region159: #{nst_forward.13} parent=152 // loop_footer_branch
                  %991 = sbr.rel target = $region155
                $region160: #{nst_forward.13} parent=152 // loop_exit
                  _
                %s1000 = ssub.s32 16, 1
                loop: start=0, step=1, limit=1
                $region161: #{nst_forward.13} parent=152 // loop_pre_header
                  _
                $region162: #{nst_forward.13} parent=152 // loop_header
                  %s1002 = sphi 0, %s1006
                  %p1003 = scmp.ge.s32.totalorder %s1002, 1
                  %s1007 = sphi %s958, %s958
                  %s1008 = sphi %s964, %s964
                $region163: #{nst_forward.13} parent=152 // loop_header_branch
                  %1005 = sbr.rel (%p1003) target = $region167
                $region164: #{nst_forward.13} parent=152 // loop_body
                  %v1009 = vld [vmem:[%s1007] sm:%s1000]
                  %1010 = vst [vmem:[%s1008] sm:%s1000] %v1009
                  %v1011 = vld [vmem:[%s1007 + $0x4] sm:%s1000]
                  %1012 = vst [vmem:[%s1008 + $0x8] sm:%s1000] %v1011
                  %v1013 = vld [vmem:[%s1007 + $0x8] sm:%s1000]
                  %1014 = vst [vmem:[%s1008 + $0x10] sm:%s1000] %v1013
                  %v1015 = vld [vmem:[%s1007 + $0xc] sm:%s1000]
                  %1016 = vst [vmem:[%s1008 + $0x18] sm:%s1000] %v1015
                $region165: #{nst_forward.13} parent=152 // loop_footer
                  %s1006 = sadd.s32 1, %s1002
                $region166: #{nst_forward.13} parent=152 // loop_footer_branch
                  %1001 = sbr.rel target = $region162
                $region167: #{nst_forward.13} parent=152 // loop_exit
                  _
              $region153: #{nst_forward.13} parent=137 // pred_fallthru
                _
            $region138: #{nst_forward.13} parent=133 // pred_fallthru
              _
            // Predicated region
            $region139: #{nst_forward.13} parent=133 // pred_check
              _
            $region140: #{nst_forward.13} parent=133 // pred_check_branch
              %970 = sbr.rel (0) target = $region142
            $region141: #{nst_forward.13} parent=133 // pred_region
              %s972 = ssub.s32 16, 1
              loop: start=0, step=1, limit=1
              $region143: #{nst_forward.13} parent=141 // loop_pre_header
                _
              $region144: #{nst_forward.13} parent=141 // loop_header
                %s974 = sphi 0, %s978
                %p975 = scmp.ge.s32.totalorder %s974, 1
                %s979 = sphi %s958, %s958
                %s980 = sphi %s964, %s964
              $region145: #{nst_forward.13} parent=141 // loop_header_branch
                %977 = sbr.rel (%p975) target = $region149
              $region146: #{nst_forward.13} parent=141 // loop_body
                %v981 = vld [vmem:[%s979] sm:%s972]
                %982 = vst [vmem:[%s980] sm:%s972] %v981
                %v983 = vld [vmem:[%s979 + $0x4] sm:%s972]
                %984 = vst [vmem:[%s980 + $0x8] sm:%s972] %v983
                %v985 = vld [vmem:[%s979 + $0x8] sm:%s972]
                %986 = vst [vmem:[%s980 + $0x10] sm:%s972] %v985
                %v987 = vld [vmem:[%s979 + $0xc] sm:%s972]
                %988 = vst [vmem:[%s980 + $0x18] sm:%s972] %v987
              $region147: #{nst_forward.13} parent=141 // loop_footer
                %s978 = sadd.s32 1, %s974
              $region148: #{nst_forward.13} parent=141 // loop_footer_branch
                %973 = sbr.rel target = $region144
              $region149: #{nst_forward.13} parent=141 // loop_exit
                _
            $region142: #{nst_forward.13} parent=133 // pred_fallthru
              _
          $region134: #{nst_forward.13} parent=129 // pred_fallthru
            _
          %1017 = vnop
        $region130: #{nst_forward.13} parent=109 // pred_fallthru
          _
      $region110: #{nst_forward.13} parent=5 // pred_fallthru
        _
      %p1018 = scmp.le.s32.totalorder 2, %s10
      // Predicated region
      $region168: #{nst_forward.13} parent=5 // pred_check
        %p1019 = pneg %p1018
      $region169: #{nst_forward.13} parent=5 // pred_check_branch
        %1021 = sbr.rel (%p1019) target = $region171
      $region170: #{nst_forward.13} parent=5 // pred_region
        %s1022 = ssub.s32 %s10, 2
        // Predicated region
        $region172: #{nst_forward.13} parent=170 // pred_check
          %p1023 = pneg %p168
        $region173: #{nst_forward.13} parent=170 // pred_check_branch
          %1025 = sbr.rel (%p1023) target = $region175
        $region174: #{nst_forward.13} parent=170 // pred_region
          %s1026 = sand.u32 %s153, 1
          %s1027 = sand.u32 %s153, 1
          %s1028 = smul.addr %s1027, 16
          %s1029 = scalar_lea.vmem [#allocation8], %s1028
        $region175: #{nst_forward.13} parent=170 // pred_fallthru
          _
      $region171: #{nst_forward.13} parent=5 // pred_fallthru
        _
    $region6: #{nst_forward.13} parent=1 // loop_footer
      %s14 = sadd.s32 1, %s10
    $region7: #{nst_forward.13} parent=1 // loop_footer_branch
      %9 = sbr.rel target = $region3
    $region8: #{nst_forward.13} parent=1 // loop_exit
      _

// kernel: nst_forward.14
$region0: #{nst_forward.14}
  #allocation0 [shape = 'u32[]', space=smem, size = 0x4, offset = 0x4, fixed_abs, tag = 'smem constant byte address 0x4 - core index']
  #allocation1 [shape = 'u32[72,128]{1,0:T(1,128)}', space=vmem, size = 0x9000, scoped, tag = 'internal scratch']
  #allocation2 [shape = 'f32[16,128]{1,0:T(8,128)}', space=vmem, size = 0x2000, scoped, tag = 'scratch operand']
  %s0 = inlined_call_operand.vmem [shape: bf16[16,288], index: 0, kind: input, shape index: {}]
  %s1 = inlined_call_operand.vmem [shape: bf16[288,128], index: 1, kind: input, shape index: {}]
  %s2 = inlined_call_operand.vmem [shape: f32[16,1], index: 2, kind: input, shape index: {}]
  %s3 = inlined_call_operand.vmem [shape: bf16[16,128], index: 3, kind: output, shape index: {}]
  %s4 = sld [smem:[#allocation0]]
  $region30: #{nst_forward.14} parent=0
    _
  %s6 = ssub.s32 1, %s4
  %s7 = scalar_select 0, %s6, %s4
  // Predicated region
  $region2: #{nst_forward.14} parent=0 // pred_check
    _
  $region3: #{nst_forward.14} parent=0 // pred_check_branch
    %9 = sbr.rel (0) target = $region5
  $region4: #{nst_forward.14} parent=0 // pred_region
    _
  $region5: #{nst_forward.14} parent=0 // pred_fallthru
    _
  // Predicated region
  $region6: #{nst_forward.14} parent=0 // pred_check
    _
  $region7: #{nst_forward.14} parent=0 // pred_check_branch
    %11 = sbr.rel (0) target = $region9
  $region8: #{nst_forward.14} parent=0 // pred_region
    _
  $region9: #{nst_forward.14} parent=0 // pred_fallthru
    _
  // Predicated region
  $region10: #{nst_forward.14} parent=0 // pred_check
    _
  $region11: #{nst_forward.14} parent=0 // pred_check_branch
    %13 = sbr.rel (0) target = $region13
  $region12: #{nst_forward.14} parent=0 // pred_region
    _
  $region13: #{nst_forward.14} parent=0 // pred_fallthru
    _
  %p15 = scmp.eq.s32.totalorder 0, 0
  // Predicated region
  $region14: #{nst_forward.14} parent=0 // pred_check
    %p16 = pneg %p15
  $region15: #{nst_forward.14} parent=0 // pred_check_branch
    %18 = sbr.rel (%p16) target = $region17
  $region16: #{nst_forward.14} parent=0 // pred_region
    %19 = vst [vmem:[#allocation2] sm:$0xff] 0.0
    %20 = vst [vmem:[#allocation2 + $0x8] sm:$0xff] 0.0
  $region17: #{nst_forward.14} parent=0 // pred_fallthru
    _
  %v21 = vld [vmem:[#allocation2] sm:$0xff]
  %v22 = vld [vmem:[#allocation2 + $0x8] sm:$0xff]
  %v23 = vld [vmem:[%s0] sm:$0xff]
  %v24 = vld [vmem:[%s0 + $0x8] sm:$0xf]
  %v25 = vld [vmem:[%s0 + $0xc] sm:$0xff]
  %v26 = vld [vmem:[%s0 + $0x14] sm:$0xf]
  %v27 = vld [vmem:[%s1] sm:$0xf]
  %v28 = vld [vmem:[%s1 + $0x4] sm:$0xf]
  %v29 = vld [vmem:[%s1 + $0x8] sm:$0xf]
  %v30 = vld [vmem:[%s1 + $0xc] sm:$0xf]
  %v31 = vld [vmem:[%s1 + $0x10] sm:$0xf]
  %v32 = vld [vmem:[%s1 + $0x14] sm:$0xf]
  %v33 = vld [vmem:[%s1 + $0x18] sm:$0xf]
  %v34 = vld [vmem:[%s1 + $0x1c] sm:$0xf]
  %v35 = vld [vmem:[%s1 + $0x20] sm:$0xf]
  %v36 = vld [vmem:[%s1 + $0x24] sm:$0xf]
  %v37 = vld [vmem:[%s1 + $0x28] sm:$0xf]
  %v38 = vld [vmem:[%s1 + $0x2c] sm:$0xf]
  %v39 = vld [vmem:[%s1 + $0x30] sm:$0xf]
  %v40 = vld [vmem:[%s1 + $0x34] sm:$0xf]
  %v41 = vld [vmem:[%s1 + $0x38] sm:$0xf]
  %v42 = vld [vmem:[%s1 + $0x3c] sm:$0xf]
  %v43 = vld [vmem:[%s1 + $0x40] sm:$0xf]
  %v44 = vld [vmem:[%s1 + $0x44] sm:$0xf]
  %v45 = vld [vmem:[%s1 + $0x48] sm:$0xf]
  %v46 = vld [vmem:[%s1 + $0x4c] sm:$0xf]
  %v47 = vld [vmem:[%s1 + $0x50] sm:$0xf]
  %v48 = vld [vmem:[%s1 + $0x54] sm:$0xf]
  %v49 = vld [vmem:[%s1 + $0x58] sm:$0xf]
  %v50 = vld [vmem:[%s1 + $0x5c] sm:$0xf]
  %v51 = vld [vmem:[%s1 + $0x60] sm:$0xf]
  %v52 = vld [vmem:[%s1 + $0x64] sm:$0xf]
  %v53 = vld [vmem:[%s1 + $0x68] sm:$0xf]
  %v54 = vld [vmem:[%s1 + $0x6c] sm:$0xf]
  %v55 = vld [vmem:[%s1 + $0x70] sm:$0xf]
  %v56 = vld [vmem:[%s1 + $0x74] sm:$0xf]
  %v57 = vld [vmem:[%s1 + $0x78] sm:$0xf]
  %v58 = vld [vmem:[%s1 + $0x7c] sm:$0xf]
  %v59 = vld [vmem:[%s1 + $0x80] sm:$0xf]
  %v60 = vld [vmem:[%s1 + $0x84] sm:$0xf]
  %v61 = vld [vmem:[%s1 + $0x88] sm:$0xf]
  %v62 = vld [vmem:[%s1 + $0x8c] sm:$0xf]
  %v67 = vunpack.c.l.b16 %v23
  %v68 = vunpack.c.h.b16 %v23
  %v69 = vunpack.c.l.b16 %v24
  %v70 = vunpack.c.l.b16 %v25
  %v71 = vunpack.c.h.b16 %v25
  %v72 = vunpack.c.l.b16 %v26
  %v73 = vpack.c.b16 %v70, %v67
  %v74 = vpack.c.b16 %v71, %v68
  %v75 = vpack.c.b16 %v72, %v69
  %v114 = vunpack.c.l.b16 %v27
  %v115 = vunpack.c.l.b16 %v28
  %v116 = vunpack.c.l.b16 %v29
  %v117 = vunpack.c.l.b16 %v30
  %v118 = vunpack.c.l.b16 %v31
  %v119 = vunpack.c.l.b16 %v32
  %v120 = vunpack.c.l.b16 %v33
  %v121 = vunpack.c.l.b16 %v34
  %v122 = vunpack.c.l.b16 %v35
  %v123 = vunpack.c.l.b16 %v36
  %v124 = vunpack.c.l.b16 %v37
  %v125 = vunpack.c.l.b16 %v38
  %v126 = vunpack.c.l.b16 %v39
  %v127 = vunpack.c.l.b16 %v40
  %v128 = vunpack.c.l.b16 %v41
  %v129 = vunpack.c.l.b16 %v42
  %v130 = vunpack.c.l.b16 %v43
  %v131 = vunpack.c.l.b16 %v44
  %v132 = vunpack.c.l.b16 %v45
  %v133 = vunpack.c.l.b16 %v46
  %v134 = vunpack.c.l.b16 %v47
  %v135 = vunpack.c.l.b16 %v48
  %v136 = vunpack.c.l.b16 %v49
  %v137 = vunpack.c.l.b16 %v50
  %v138 = vunpack.c.l.b16 %v51
  %v139 = vunpack.c.l.b16 %v52
  %v140 = vunpack.c.l.b16 %v53
  %v141 = vunpack.c.l.b16 %v54
  %v142 = vunpack.c.l.b16 %v55
  %v143 = vunpack.c.l.b16 %v56
  %v144 = vunpack.c.l.b16 %v57
  %v145 = vunpack.c.l.b16 %v58
  %v146 = vunpack.c.l.b16 %v59
  %v147 = vunpack.c.l.b16 %v60
  %v148 = vunpack.c.l.b16 %v61
  %v149 = vunpack.c.l.b16 %v62
  %v150 = vpack.c.b16 %v115, %v114
  %v151 = vpack.c.b16 %v117, %v116
  %v152 = vpack.c.b16 %v119, %v118
  %v153 = vpack.c.b16 %v121, %v120
  %v154 = vpack.c.b16 %v123, %v122
  %v155 = vpack.c.b16 %v125, %v124
  %v156 = vpack.c.b16 %v127, %v126
  %v157 = vpack.c.b16 %v129, %v128
  %v158 = vpack.c.b16 %v131, %v130
  %v159 = vpack.c.b16 %v133, %v132
  %v160 = vpack.c.b16 %v135, %v134
  %v161 = vpack.c.b16 %v137, %v136
  %v162 = vpack.c.b16 %v139, %v138
  %v163 = vpack.c.b16 %v141, %v140
  %v164 = vpack.c.b16 %v143, %v142
  %v165 = vpack.c.b16 %v145, %v144
  %v166 = vpack.c.b16 %v147, %v146
  %v167 = vpack.c.b16 %v149, %v148
  %vm186 = vcmask 261120
  %v188 = vsel %vm186, %v75, 0
  %190 = vmatpush.bf16.msra.mxu0 %v157
  %191 = vmatpush.bf16.msra.mxu0 %v156
  %192 = vmatpush.bf16.msra.mxu0 %v155
  %193 = vmatpush.bf16.msra.mxu0 %v154
  %194 = vmatpush.bf16.msra.mxu0 %v153
  %195 = vmatpush.bf16.msra.mxu0 %v152
  %196 = vmatpush.bf16.msra.mxu0 %v151
  %197 = vmatpush.bf16.msra.mxu0 %v150
  %198 = vmatmul.bf16.gmra.mxu0 %v73
  %v199 = vpop.f32.mrf.mxu0
  %v200 = vadd.f32 0.0, %v199
  %v201 = vpop.f32.mrf.mxu0
  %v202 = vadd.f32 0.0, %v201
  %203 = vdwg.mxu0
  %204 = vmatpush.bf16.msra.mxu0 %v165
  %205 = vmatpush.bf16.msra.mxu0 %v164
  %206 = vmatpush.bf16.msra.mxu0 %v163
  %207 = vmatpush.bf16.msra.mxu0 %v162
  %208 = vmatpush.bf16.msra.mxu0 %v161
  %209 = vmatpush.bf16.msra.mxu0 %v160
  %210 = vmatpush.bf16.msra.mxu0 %v159
  %211 = vmatpush.bf16.msra.mxu0 %v158
  %212 = vmatmul.bf16.gmra.mxu0 %v74
  %v213 = vpop.f32.mrf.mxu0
  %v214 = vadd.f32 %v200, %v213
  %v215 = vpop.f32.mrf.mxu0
  %v216 = vadd.f32 %v202, %v215
  %217 = vdwg.mxu0
  %218 = vmatpush.bf16.msra.mxu0 0
  %219 = vmatpush.bf16.msra.mxu0 0
  %220 = vmatpush.bf16.msra.mxu0 0
  %221 = vmatpush.bf16.msra.mxu0 0
  %222 = vmatpush.bf16.msra.mxu0 0
  %223 = vmatpush.bf16.msra.mxu0 0
  %224 = vmatpush.bf16.msra.mxu0 %v167
  %225 = vmatpush.bf16.msra.mxu0 %v166
  %226 = vmatmul.bf16.gmra.mxu0 %v188
  %v227 = vpop.f32.mrf.mxu0
  %v228 = vadd.f32 %v214, %v227
  %v229 = vpop.f32.mrf.mxu0
  %v230 = vadd.f32 %v216, %v229
  %231 = vdwg.mxu0
  %v232 = vadd.f32 %v21, %v228
  %v233 = vadd.f32 %v22, %v230
  %234 = vst [vmem:[#allocation2] sm:$0xff] %v232
  %235 = vst [vmem:[#allocation2 + $0x8] sm:$0xff] %v233
  // Predicated region
  $region18: #{nst_forward.14} parent=0 // pred_check
    %p236 = pneg %p15
  $region19: #{nst_forward.14} parent=0 // pred_check_branch
    %238 = sbr.rel (%p236) target = $region21
  $region20: #{nst_forward.14} parent=0 // pred_region
    %v239 = vld [vmem:[#allocation2] sm:$0xff]
    %v240 = vld [vmem:[#allocation2 + $0x8] sm:$0xff]
    %v241 = vld [vmem:[%s2] sm:$0xff]
    %v242 = vld [vmem:[%s2 + $0x8] sm:$0xff]
    %244 = vset.pattern.permute.xlu0 0
    %245 = vperm.xlu0 %244, %v241
    %v246 = vpop.permute.xlu0 %245
    %249 = vset.pattern.permute.xlu0 0
    %250 = vperm.xlu0 %249, %v242
    %v251 = vpop.permute.xlu0 %250
    %v253 = vadd.f32 %v239, %v246
    %v254 = vadd.f32 %v240, %v251
    %v255 = vmax.f32 %v253, 0.0
    %v256 = vmax.f32 %v254, 0.0
    %v257 = vpack.c.bf16 %v255, %v255
    %v258 = vpack.c.bf16 %v256, %v256
    %259 = vst [vmem:[%s3] sm:$0xf] %v257
    %260 = vst [vmem:[%s3 + $0x4] sm:$0xf] %v258
  $region21: #{nst_forward.14} parent=0 // pred_fallthru
    _
  // Predicated region
  $region22: #{nst_forward.14} parent=0 // pred_check
    _
  $region23: #{nst_forward.14} parent=0 // pred_check_branch
    %262 = sbr.rel (0) target = $region25
  $region24: #{nst_forward.14} parent=0 // pred_region
    _
  $region25: #{nst_forward.14} parent=0 // pred_fallthru
    _
  // Predicated region
  $region26: #{nst_forward.14} parent=0 // pred_check
    _
  $region27: #{nst_forward.14} parent=0 // pred_check_branch
    %264 = sbr.rel (0) target = $region29
  $region28: #{nst_forward.14} parent=0 // pred_region
    _
  $region29: #{nst_forward.14} parent=0 // pred_fallthru
    _

// kernel: nst_forward.12
$region0: #{nst_forward.12}
  #allocation0 [shape = 'u32[]', space=smem, size = 0x4, offset = 0x4, fixed_abs, tag = 'smem constant byte address 0x4 - core index']
  #allocation1 [shape = 'u32[72,128]{1,0:T(1,128)}', space=vmem, size = 0x9000, scoped, tag = 'internal scratch']
  #allocation2 [shape = 'f32[1,128]{1,0:T(1,128)}', space=vmem, size = 0x200, scoped, tag = 'scratch operand']
  #allocation3 [shape = 'f32[1,128]{1,0:T(1,128)}', space=vmem, size = 0x200, scoped, tag = 'scratch operand']
  #allocation4 [shape = 'f32[16,128]{1,0:T(8,128)}', space=vmem, size = 0x2000, scoped, tag = 'scratch operand']
  #allocation5 [shape = 'bf16[16,128]{1,0:T(8,128)(2,1)}', space=vmem, size = 0x1000, scoped, tag = 'scratch operand']
  %s0 = inlined_call_operand.vmem [shape: f32[2,16,1], index: 0, kind: input, shape index: {}]
  %s1 = inlined_call_operand.vmem [shape: f32[2,16,1], index: 1, kind: input, shape index: {}]
  %s2 = inlined_call_operand.vmem [shape: bf16[16,512], index: 2, kind: input, shape index: {}]
  %s3 = inlined_call_operand.vmem [shape: bf16[16,512], index: 3, kind: input, shape index: {}]
  %s4 = inlined_call_operand.vmem [shape: bf16[16,512], index: 4, kind: output, shape index: {}]
  %s5 = sld [smem:[#allocation0]]
  $region173: #{nst_forward.12} parent=0
    _
  %s7 = ssub.s32 1, %s5
  %s8 = scalar_select 0, %s7, %s5
  $region1: #{nst_forward.12} parent=0
    #allocation6 [shape = 'u8[8192]{0}', space=vmem, size = 0x2000, scoped, tag = 'input window, operand 2']
    #allocation7 [shape = 'u8[16384]{0}', space=vmem, size = 0x4000, scoped, tag = 'input window, operand 3']
    #allocation8 [shape = 'u8[8192]{0}', space=vmem, size = 0x2000, scoped, tag = 'output window, operand 0']
    loop: start=0, step=1, limit=6
    $region2: #{nst_forward.12} parent=1 // loop_pre_header
      _
    $region3: #{nst_forward.12} parent=1 // loop_header
      %s10 = sphi 0, %s14
      %p11 = scmp.ge.s32.totalorder %s10, 6
      %s17 = sphi 0, %s36
      %s18 = sphi 0, %s32
      %s19 = sphi 0, %s28
      %s20 = sphi 0, %s17
      %s21 = sphi 0, %s18
      %s22 = sphi 0, %s19
      %s23 = sphi 0, %s20
      %s24 = sphi 0, %s21
      %s25 = sphi 0, %s22
      %s39 = sphi 0, %s41
      %s42 = sphi 0, %s39
      %s43 = sphi 0, %s42
      %s59 = sphi 0, %s43
      %s65 = sphi 0, %s67
      %s68 = sphi 0, %s65
      %s69 = sphi 0, %s68
      %s85 = sphi 0, %s69
      %s95 = sphi 0, %s97
      %s98 = sphi 0, %s95
      %s99 = sphi 0, %s98
      %s115 = sphi 0, %s99
      %s123 = sphi 0, %s125
      %s126 = sphi 0, %s123
      %s127 = sphi 0, %s126
      %s143 = sphi 0, %s127
      %s153 = sphi 0, %s155
      %s156 = sphi 0, %s153
      %s157 = sphi 0, %s156
      %s173 = sphi 0, %s157
    $region4: #{nst_forward.12} parent=1 // loop_header_branch
      %13 = sbr.rel (%p11) target = $region8
    $region5: #{nst_forward.12} parent=1 // loop_body
      %s15 = ssub.s32 %s10, 1
      %s16 = ssub.s32 %s10, 2
      %s26 = sadd.s32 1, %s19
      %p27 = scmp.ge.s32.totalorder %s26, 1
      %s28 = scalar_select %p27, 0, %s26
      %s29 = sadd.s32 1, %s18
      %s30 = scalar_select %p27, %s29, %s18
      %p31 = scmp.ge.s32.totalorder %s30, 2
      %s32 = scalar_select %p31, 0, %s30
      %s33 = sadd.s32 1, %s17
      %s34 = scalar_select %p31, %s33, %s17
      %p35 = scmp.ge.s32.totalorder %s34, 2
      %s36 = scalar_select %p35, 0, %s34
      %s37 = ssub.s32 %s17, %s36
      %p38 = scmp.eq.s32.totalorder %s37, 0
      %s40 = sadd.s32 %s39, 1
      %s41 = scalar_select %p38, %s39, %s40
      %p44 = pneg %p38
      %p45 = scmp.eq.s32.totalorder %s10, 3
      %p46 = por %p44, %p45
      %p47 = scmp.ne.s32.totalorder %s39, %s42
      %p48 = scmp.eq.s32.totalorder %s10, 0
      %p49 = por %p47, %p48
      %p50 = scmp.ne.s32.totalorder %s39, %s42
      %p51 = scmp.eq.s32.totalorder %s15, 3
      %p52 = por %p50, %p51
      %p53 = scmp.ne.s32.totalorder %s42, %s43
      %p54 = scmp.eq.s32.totalorder %s15, 0
      %p55 = por %p53, %p54
      %p56 = scmp.ne.s32.totalorder %s42, %s43
      %p57 = scmp.eq.s32.totalorder %s16, 3
      %p58 = por %p56, %p57
      %p60 = scmp.ne.s32.totalorder %s43, %s59
      %p61 = scmp.eq.s32.totalorder %s16, 0
      %p62 = por %p60, %p61
      %s63 = ssub.s32 %s17, %s36
      %p64 = scmp.eq.s32.totalorder %s63, 0
      %s66 = sadd.s32 %s65, 1
      %s67 = scalar_select %p64, %s65, %s66
      %p70 = pneg %p64
      %p71 = scmp.eq.s32.totalorder %s10, 3
      %p72 = por %p70, %p71
      %p73 = scmp.ne.s32.totalorder %s65, %s68
      %p74 = scmp.eq.s32.totalorder %s10, 0
      %p75 = por %p73, %p74
      %p76 = scmp.ne.s32.totalorder %s65, %s68
      %p77 = scmp.eq.s32.totalorder %s15, 3
      %p78 = por %p76, %p77
      %p79 = scmp.ne.s32.totalorder %s68, %s69
      %p80 = scmp.eq.s32.totalorder %s15, 0
      %p81 = por %p79, %p80
      %p82 = scmp.ne.s32.totalorder %s68, %s69
      %p83 = scmp.eq.s32.totalorder %s16, 3
      %p84 = por %p82, %p83
      %p86 = scmp.ne.s32.totalorder %s69, %s85
      %p87 = scmp.eq.s32.totalorder %s16, 0
      %p88 = por %p86, %p87
      %s89 = smul.u32 %s17, 2
      %s90 = sadd.s32 %s89, %s18
      %s91 = smul.u32 %s36, 2
      %s92 = sadd.s32 %s91, %s32
      %s93 = ssub.s32 %s90, %s92
      %p94 = scmp.eq.s32.totalorder %s93, 0
      %s96 = sadd.s32 %s95, 1
      %s97 = scalar_select %p94, %s95, %s96
      %p100 = pneg %p94
      %p101 = scmp.eq.s32.totalorder %s10, 3
      %p102 = por %p100, %p101
      %p103 = scmp.ne.s32.totalorder %s95, %s98
      %p104 = scmp.eq.s32.totalorder %s10, 0
      %p105 = por %p103, %p104
      %p106 = scmp.ne.s32.totalorder %s95, %s98
      %p107 = scmp.eq.s32.totalorder %s15, 3
      %p108 = por %p106, %p107
      %p109 = scmp.ne.s32.totalorder %s98, %s99
      %p110 = scmp.eq.s32.totalorder %s15, 0
      %p111 = por %p109, %p110
      %p112 = scmp.ne.s32.totalorder %s98, %s99
      %p113 = scmp.eq.s32.totalorder %s16, 3
      %p114 = por %p112, %p113
      %p116 = scmp.ne.s32.totalorder %s99, %s115
      %p117 = scmp.eq.s32.totalorder %s16, 0
      %p118 = por %p116, %p117
      %s119 = sadd.s32 %s17, %s19
      %s120 = sadd.s32 %s36, %s28
      %s121 = ssub.s32 %s119, %s120
      %p122 = scmp.eq.s32.totalorder %s121, 0
      %s124 = sadd.s32 %s123, 1
      %s125 = scalar_select %p122, %s123, %s124
      %p128 = pneg %p122
      %p129 = scmp.eq.s32.totalorder %s10, 3
      %p130 = por %p128, %p129
      %p131 = scmp.ne.s32.totalorder %s123, %s126
      %p132 = scmp.eq.s32.totalorder %s10, 0
      %p133 = por %p131, %p132
      %p134 = scmp.ne.s32.totalorder %s123, %s126
      %p135 = scmp.eq.s32.totalorder %s15, 3
      %p136 = por %p134, %p135
      %p137 = scmp.ne.s32.totalorder %s126, %s127
      %p138 = scmp.eq.s32.totalorder %s15, 0
      %p139 = por %p137, %p138
      %p140 = scmp.ne.s32.totalorder %s126, %s127
      %p141 = scmp.eq.s32.totalorder %s16, 3
      %p142 = por %p140, %p141
      %p144 = scmp.ne.s32.totalorder %s127, %s143
      %p145 = scmp.eq.s32.totalorder %s16, 0
      %p146 = por %p144, %p145
      %s147 = smul.u32 %s17, 2
      %s148 = sadd.s32 %s147, %s18
      %s149 = smul.u32 %s36, 2
      %s150 = sadd.s32 %s149, %s32
      %s151 = ssub.s32 %s148, %s150
      %p152 = scmp.eq.s32.totalorder %s151, 0
      %s154 = sadd.s32 %s153, 1
      %s155 = scalar_select %p152, %s153, %s154
      %p158 = pneg %p152
      %p159 = scmp.eq.s32.totalorder %s10, 3
      %p160 = por %p158, %p159
      %p161 = scmp.ne.s32.totalorder %s153, %s156
      %p162 = scmp.eq.s32.totalorder %s10, 0
      %p163 = por %p161, %p162
      %p164 = scmp.ne.s32.totalorder %s153, %s156
      %p165 = scmp.eq.s32.totalorder %s15, 3
      %p166 = por %p164, %p165
      %p167 = scmp.ne.s32.totalorder %s156, %s157
      %p168 = scmp.eq.s32.totalorder %s15, 0
      %p169 = por %p167, %p168
      %p170 = scmp.ne.s32.totalorder %s156, %s157
      %p171 = scmp.eq.s32.totalorder %s16, 3
      %p172 = por %p170, %p171
      %p174 = scmp.ne.s32.totalorder %s157, %s173
      %p175 = scmp.eq.s32.totalorder %s16, 0
      %p176 = por %p174, %p175
      %p177 = scmp.le.s32.totalorder 1, %s10
      %p178 = scmp.lt.s32.totalorder %s10, 5
      %p179 = pnand %p177, %p178
      %p180 = pneg %p179
      // Predicated region
      $region9: #{nst_forward.12} parent=5 // pred_check
        _
      $region10: #{nst_forward.12} parent=5 // pred_check_branch
        %182 = sbr.rel (%p179) target = $region12
      $region11: #{nst_forward.12} parent=5 // pred_region
        %s183 = ssub.s32 %s10, 1
      $region12: #{nst_forward.12} parent=5 // pred_fallthru
        _
      %p184 = scmp.lt.s32.totalorder %s10, 4
      // Predicated region
      $region13: #{nst_forward.12} parent=5 // pred_check
        %p185 = pneg %p184
      $region14: #{nst_forward.12} parent=5 // pred_check_branch
        %187 = sbr.rel (%p185) target = $region16
      $region15: #{nst_forward.12} parent=5 // pred_region
        // Predicated region
        $region17: #{nst_forward.12} parent=15 // pred_check
          %p188 = pneg %p49
        $region18: #{nst_forward.12} parent=15 // pred_check_branch
          %190 = sbr.rel (%p188) target = $region20
        $region19: #{nst_forward.12} parent=15 // pred_region
          %p191 = scmp.lt.s32.totalorder %s17, 1
          %s192 = scalar_select %p191, %s17, 1
          %s193 = smul.addr %s192, 2
          %s194 = smul.addr %s193, 8
          %s195 = scalar_lea.vmem %s0, %s194
        $region20: #{nst_forward.12} parent=15 // pred_fallthru
          _
        // Predicated region
        $region21: #{nst_forward.12} parent=15 // pred_check
          %p196 = pneg %p75
        $region22: #{nst_forward.12} parent=15 // pred_check_branch
          %198 = sbr.rel (%p196) target = $region24
        $region23: #{nst_forward.12} parent=15 // pred_region
          %p199 = scmp.lt.s32.totalorder %s17, 1
          %s200 = scalar_select %p199, %s17, 1
          %s201 = smul.addr %s200, 2
          %s202 = smul.addr %s201, 8
          %s203 = scalar_lea.vmem %s1, %s202
        $region24: #{nst_forward.12} parent=15 // pred_fallthru
          _
        // Predicated region
        $region25: #{nst_forward.12} parent=15 // pred_check
          %p204 = pneg %p105
        $region26: #{nst_forward.12} parent=15 // pred_check_branch
          %206 = sbr.rel (%p204) target = $region28
        $region27: #{nst_forward.12} parent=15 // pred_region
          %s207 = sand.u32 %s95, 1
          %s208 = sand.u32 %s95, 1
          %s209 = smul.addr %s208, 8
          %s210 = scalar_lea.vmem [#allocation6], %s209
          %s211 = smul.u32 %s17, 2
          %s212 = sadd.s32 %s211, %s18
          %s213 = smul.addr %s212, 4
          %s214 = scalar_lea.vmem %s2, %s213
          // Predicated region
          $region29: #{nst_forward.12} parent=27 // pred_check
            _
          $region30: #{nst_forward.12} parent=27 // pred_check_branch
            %216 = sbr.rel (0) target = $region32
          $region31: #{nst_forward.12} parent=27 // pred_region
            // Predicated region
            $region33: #{nst_forward.12} parent=31 // pred_check
              _
            $region34: #{nst_forward.12} parent=31 // pred_check_branch
              %218 = sbr.rel target = $region36
            $region35: #{nst_forward.12} parent=31 // pred_region
              // Predicated region
              $region48: #{nst_forward.12} parent=35 // pred_check
                _
              $region49: #{nst_forward.12} parent=35 // pred_check_branch
                %236 = sbr.rel (0) target = $region51
              $region50: #{nst_forward.12} parent=35 // pred_region
                loop: start=0, step=1, limit=1
                $region52: #{nst_forward.12} parent=50 // loop_pre_header
                  _
                $region53: #{nst_forward.12} parent=50 // loop_header
                  %s238 = sphi 0, %s242
                  %p239 = scmp.ge.s32.totalorder %s238, 1
                  %s243 = sphi %s214, %s214
                  %s244 = sphi %s210, %s210
                $region54: #{nst_forward.12} parent=50 // loop_header_branch
                  %241 = sbr.rel (%p239) target = $region58
                $region55: #{nst_forward.12} parent=50 // loop_body
                  _
                $region56: #{nst_forward.12} parent=50 // loop_footer
                  %s242 = sadd.s32 1, %s238
                $region57: #{nst_forward.12} parent=50 // loop_footer_branch
                  %237 = sbr.rel target = $region53
                $region58: #{nst_forward.12} parent=50 // loop_exit
                  _
                %s246 = ssub.s32 16, 1
                loop: start=0, step=1, limit=1
                $region59: #{nst_forward.12} parent=50 // loop_pre_header
                  _
                $region60: #{nst_forward.12} parent=50 // loop_header
                  %s248 = sphi 0, %s252
                  %p249 = scmp.ge.s32.totalorder %s248, 1
                  %s253 = sphi %s214, %s214
                  %s254 = sphi %s210, %s210
                $region61: #{nst_forward.12} parent=50 // loop_header_branch
                  %251 = sbr.rel (%p249) target = $region65
                $region62: #{nst_forward.12} parent=50 // loop_body
                  %v255 = vld [vmem:[%s253] sm:%s246]
                  %256 = vst [vmem:[%s254] sm:%s246] %v255
                  %v257 = vld [vmem:[%s253 + $0x10] sm:%s246]
                  %258 = vst [vmem:[%s254 + $0x4] sm:%s246] %v257
                $region63: #{nst_forward.12} parent=50 // loop_footer
                  %s252 = sadd.s32 1, %s248
                $region64: #{nst_forward.12} parent=50 // loop_footer_branch
                  %247 = sbr.rel target = $region60
                $region65: #{nst_forward.12} parent=50 // loop_exit
                  _
              $region51: #{nst_forward.12} parent=35 // pred_fallthru
                _
            $region36: #{nst_forward.12} parent=31 // pred_fallthru
              _
            // Predicated region
            $region37: #{nst_forward.12} parent=31 // pred_check
              _
            $region38: #{nst_forward.12} parent=31 // pred_check_branch
              %220 = sbr.rel (0) target = $region40
            $region39: #{nst_forward.12} parent=31 // pred_region
              %s222 = ssub.s32 16, 1
              loop: start=0, step=1, limit=1
              $region41: #{nst_forward.12} parent=39 // loop_pre_header
                _
              $region42: #{nst_forward.12} parent=39 // loop_header
                %s224 = sphi 0, %s228
                %p225 = scmp.ge.s32.totalorder %s224, 1
                %s229 = sphi %s214, %s214
                %s230 = sphi %s210, %s210
              $region43: #{nst_forward.12} parent=39 // loop_header_branch
                %227 = sbr.rel (%p225) target = $region47
              $region44: #{nst_forward.12} parent=39 // loop_body
                %v231 = vld [vmem:[%s229] sm:%s222]
                %232 = vst [vmem:[%s230] sm:%s222] %v231
                %v233 = vld [vmem:[%s229 + $0x10] sm:%s222]
                %234 = vst [vmem:[%s230 + $0x4] sm:%s222] %v233
              $region45: #{nst_forward.12} parent=39 // loop_footer
                %s228 = sadd.s32 1, %s224
              $region46: #{nst_forward.12} parent=39 // loop_footer_branch
                %223 = sbr.rel target = $region42
              $region47: #{nst_forward.12} parent=39 // loop_exit
                _
            $region40: #{nst_forward.12} parent=31 // pred_fallthru
              _
          $region32: #{nst_forward.12} parent=27 // pred_fallthru
            _
          %259 = vnop
        $region28: #{nst_forward.12} parent=15 // pred_fallthru
          _
        // Predicated region
        $region66: #{nst_forward.12} parent=15 // pred_check
          %p260 = pneg %p133
        $region67: #{nst_forward.12} parent=15 // pred_check_branch
          %262 = sbr.rel (%p260) target = $region69
        $region68: #{nst_forward.12} parent=15 // pred_region
          %s263 = sand.u32 %s123, 1
          %s264 = sand.u32 %s123, 1
          %s265 = smul.addr %s264, 16
          %s266 = scalar_lea.vmem [#allocation7], %s265
          %s267 = sadd.s32 %s17, %s19
          %s268 = smul.u32 2, %s267
          %s269 = smul.addr %s268, 4
          %s270 = scalar_lea.vmem %s3, %s269
          // Predicated region
          $region70: #{nst_forward.12} parent=68 // pred_check
            _
          $region71: #{nst_forward.12} parent=68 // pred_check_branch
            %272 = sbr.rel (0) target = $region73
          $region72: #{nst_forward.12} parent=68 // pred_region
            // Predicated region
            $region74: #{nst_forward.12} parent=72 // pred_check
              _
            $region75: #{nst_forward.12} parent=72 // pred_check_branch
              %274 = sbr.rel (0) target = $region77
            $region76: #{nst_forward.12} parent=72 // pred_region
              // Predicated region
              $region89: #{nst_forward.12} parent=76 // pred_check
                _
              $region90: #{nst_forward.12} parent=76 // pred_check_branch
                %292 = sbr.rel (0) target = $region92
              $region91: #{nst_forward.12} parent=76 // pred_region
                loop: start=0, step=1, limit=1
                $region93: #{nst_forward.12} parent=91 // loop_pre_header
                  _
                $region94: #{nst_forward.12} parent=91 // loop_header
                  %s294 = sphi 0, %s298
                  %p295 = scmp.ge.s32.totalorder %s294, 1
                  %s299 = sphi %s270, %s270
                  %s300 = sphi %s266, %s266
                $region95: #{nst_forward.12} parent=91 // loop_header_branch
                  %297 = sbr.rel (%p295) target = $region99
                $region96: #{nst_forward.12} parent=91 // loop_body
                  %v301 = vld [vmem:[%s299] sm:$0xff]
                  %302 = vst [vmem:[%s300] sm:$0xff] %v301
                  %v303 = vld [vmem:[%s299 + $0x10] sm:$0xff]
                  %304 = vst [vmem:[%s300 + $0x8] sm:$0xff] %v303
                $region97: #{nst_forward.12} parent=91 // loop_footer
                  %s298 = sadd.s32 1, %s294
                $region98: #{nst_forward.12} parent=91 // loop_footer_branch
                  %293 = sbr.rel target = $region94
                $region99: #{nst_forward.12} parent=91 // loop_exit
                  _
              $region92: #{nst_forward.12} parent=76 // pred_fallthru
                _
              // Predicated region
              $region100: #{nst_forward.12} parent=76 // pred_check
                _
              $region101: #{nst_forward.12} parent=76 // pred_check_branch
                %306 = sbr.rel target = $region103
              $region102: #{nst_forward.12} parent=76 // pred_region
                _
              $region103: #{nst_forward.12} parent=76 // pred_fallthru
                _
            $region77: #{nst_forward.12} parent=72 // pred_fallthru
              _
            // Predicated region
            $region78: #{nst_forward.12} parent=72 // pred_check
              _
            $region79: #{nst_forward.12} parent=72 // pred_check_branch
              %276 = sbr.rel target = $region81
            $region80: #{nst_forward.12} parent=72 // pred_region
              %s278 = ssub.s32 256, 1
              loop: start=0, step=1, limit=1
              $region82: #{nst_forward.12} parent=80 // loop_pre_header
                _
              $region83: #{nst_forward.12} parent=80 // loop_header
                %s280 = sphi 0, %s284
                %p281 = scmp.ge.s32.totalorder %s280, 1
                %s285 = sphi %s270, %s270
                %s286 = sphi %s266, %s266
              $region84: #{nst_forward.12} parent=80 // loop_header_branch
                %283 = sbr.rel (%p281) target = $region88
              $region85: #{nst_forward.12} parent=80 // loop_body
                %v287 = vld [vmem:[%s285] sm:%s278]
                %288 = vst [vmem:[%s286] sm:%s278] %v287
                %v289 = vld [vmem:[%s285 + $0x10] sm:%s278]
                %290 = vst [vmem:[%s286 + $0x8] sm:%s278] %v289
              $region86: #{nst_forward.12} parent=80 // loop_footer
                %s284 = sadd.s32 1, %s280
              $region87: #{nst_forward.12} parent=80 // loop_footer_branch
                %279 = sbr.rel target = $region83
              $region88: #{nst_forward.12} parent=80 // loop_exit
                _
            $region81: #{nst_forward.12} parent=72 // pred_fallthru
              _
          $region73: #{nst_forward.12} parent=68 // pred_fallthru
            _
          %307 = vnop
        $region69: #{nst_forward.12} parent=15 // pred_fallthru
          _
      $region16: #{nst_forward.12} parent=5 // pred_fallthru
        _
      %p308 = scmp.le.s32.totalorder 1, %s10
      %p309 = scmp.lt.s32.totalorder %s10, 5
      %p310 = pnand %p308, %p309
      %p311 = pneg %p310
      // Predicated region
      $region104: #{nst_forward.12} parent=5 // pred_check
        _
      $region105: #{nst_forward.12} parent=5 // pred_check_branch
        %313 = sbr.rel (%p310) target = $region107
      $region106: #{nst_forward.12} parent=5 // pred_region
        %s314 = ssub.s32 %s10, 1
        %s315 = sand.u32 %s98, 1
        %s316 = sand.u32 %s98, 1
        %s317 = smul.addr %s316, 8
        %s318 = scalar_lea.vmem [#allocation6], %s317
        // Predicated region
        $region108: #{nst_forward.12} parent=106 // pred_check
          %p319 = pneg %p111
        $region109: #{nst_forward.12} parent=106 // pred_check_branch
          %321 = sbr.rel (%p319) target = $region111
        $region110: #{nst_forward.12} parent=106 // pred_region
          _
        $region111: #{nst_forward.12} parent=106 // pred_fallthru
          _
        %s322 = sand.u32 %s126, 1
        %s323 = sand.u32 %s126, 1
        %s324 = smul.addr %s323, 16
        %s325 = scalar_lea.vmem [#allocation7], %s324
        // Predicated region
        $region112: #{nst_forward.12} parent=106 // pred_check
          %p326 = pneg %p139
        $region113: #{nst_forward.12} parent=106 // pred_check_branch
          %328 = sbr.rel (%p326) target = $region115
        $region114: #{nst_forward.12} parent=106 // pred_region
          _
        $region115: #{nst_forward.12} parent=106 // pred_fallthru
          _
        %p329 = scmp.lt.s32.totalorder %s20, 1
        %s330 = scalar_select %p329, %s20, 1
        %s331 = smul.addr %s330, 2
        %s332 = smul.addr %s331, 8
        %s333 = scalar_lea.vmem %s0, %s332
        %p334 = pneg %p55
        %p335 = pneg %p52
        %p336 = scmp.lt.s32.totalorder %s20, 1
        %s337 = scalar_select %p336, %s20, 1
        %s338 = smul.addr %s337, 2
        %s339 = smul.addr %s338, 8
        %s340 = scalar_lea.vmem %s1, %s339
        %p341 = pneg %p81
        %p342 = pneg %p78
        %s343 = sand.u32 %s98, 1
        %s344 = sand.u32 %s98, 1
        %s345 = smul.addr %s344, 8
        %s346 = scalar_lea.vmem [#allocation6], %s345
        %p347 = pneg %p111
        %p348 = pneg %p108
        %s349 = sand.u32 %s126, 1
        %s350 = sand.u32 %s126, 1
        %s351 = smul.addr %s350, 16
        %s352 = scalar_lea.vmem [#allocation7], %s351
        %p353 = pneg %p139
        %p354 = pneg %p136
        %p355 = pneg %p169
        %p356 = pneg %p166
        %s357 = sand.u32 %s156, 1
        %s358 = sand.u32 %s156, 1
        %s359 = smul.addr %s358, 8
        %s360 = scalar_lea.vmem [#allocation8], %s359
        %p361 = scmp.lt.s32.totalorder %s20, 1
        %s362 = scalar_select %p361, %s20, 1
        %s363 = smul.addr %s362, 2
        %s364 = smul.addr %s363, 8
        %s365 = scalar_lea.vmem %s0, %s364
        %p366 = scmp.lt.s32.totalorder %s20, 1
        %s367 = scalar_select %p366, %s20, 1
        %s368 = smul.addr %s367, 2
        %s369 = smul.addr %s368, 8
        %s370 = scalar_lea.vmem %s1, %s369
        %s371 = smul.u32 %s20, 2
        %s372 = sadd.s32 %s371, %s21
        %s373 = sadd.s32 %s20, %s22
        %s374 = smul.u32 2, %s373
        %s375 = smul.u32 %s20, 2
        %s376 = sadd.s32 %s375, %s21
        %p378 = scmp.eq.s32.totalorder %s22, 0
        // Predicated region
        $region116: #{nst_forward.12} parent=106 // pred_check
          %p379 = pneg %p378
        $region117: #{nst_forward.12} parent=106 // pred_check_branch
          %381 = sbr.rel (%p379) target = $region119
        $region118: #{nst_forward.12} parent=106 // pred_region
          %382 = vst [vmem:[#allocation2] sm:$0x1] -inf
          %383 = vst [vmem:[#allocation3] sm:$0x1] 0.0
          %384 = vst [vmem:[#allocation4] sm:$0xff] 0.0
          %385 = vst [vmem:[#allocation4 + $0x8] sm:$0xff] 0.0
          %v386 = vld [vmem:[%s318] sm:$0xf]
          %v387 = vld [vmem:[%s318 + $0x4] sm:$0xf]
          %v388 = vunpack.c.l.bf16 %v386
          %v389 = vunpack.c.l.bf16 %v387
          %v390 = vld [vmem:[%s365] sm:$0xff]
          %v391 = vld [vmem:[%s365 + $0x8] sm:$0xff]
          %393 = vset.pattern.permute.xlu0 0
          %394 = vperm.xlu0 %393, %v390
          %v395 = vpop.permute.xlu0 %394
          %398 = vset.pattern.permute.xlu0 0
          %399 = vperm.xlu0 %398, %v391
          %v400 = vpop.permute.xlu0 %399
          %v402 = vsub.f32 %v388, %v395
          %v403 = vsub.f32 %v389, %v400
          %v404 = vmul.f32 %v402, %v402
          %v405 = vmul.f32 %v403, %v403
          %v406 = vadd.f32 %v404, %v405
          %v407 = vrot.slane %v406, 4
          %v408 = vadd.f32 %v406, %v407
          %v409 = vrot.slane %v408, 2
          %v410 = vadd.f32 %v408, %v409
          %v411 = vrot.slane %v410, 1
          %v412 = vadd.f32 %v410, %v411
          %v413 = vadd.f32 %v412, 1e-05
          %v414 = vrsqrt.pop %v413
          %v415 = vmul.f32 %v414, %v413
          %v416 = vmul.f32 %v415, %v414
          %v417 = vmul.f32 0.5, %v416
          %v418 = vsub.f32 1.5, %v417
          %v419 = vmul.f32 %v414, %v418
          %vm420 = vweird.f32 %v413
          %vm421 = vweird.f32 %v414
          %vm422 = vmor %vm420, %vm421
          %v423 = vsel %vm422, %v414, %v419
          %v424 = vmul.f32 %v402, %v423
          %v425 = vmul.f32 %v403, %v423
          %v426 = vpack.c.bf16 %v424, %v424
          %v427 = vpack.c.bf16 %v425, %v425
          %428 = vst [vmem:[#allocation5] sm:$0xf] %v426
          %429 = vst [vmem:[#allocation5 + $0x4] sm:$0xf] %v427
        $region119: #{nst_forward.12} parent=106 // pred_fallthru
          _
        %v430 = vld [vmem:[%s325] sm:$0xff]
        %v431 = vld [vmem:[%s325 + $0x8] sm:$0xff]
        %v432 = vunpack.c.l.bf16 %v430
        %v433 = vunpack.c.h.bf16 %v430
        %v434 = vunpack.c.l.bf16 %v431
        %v435 = vunpack.c.h.bf16 %v431
        %v436 = vld [vmem:[%s370] sm:$0xff]
        %v437 = vld [vmem:[%s370 + $0x8] sm:$0xff]
        %439 = vset.pattern.permute.xlu0 0
        %440 = vperm.xlu0 %439, %v436
        %v441 = vpop.permute.xlu0 %440
        %444 = vset.pattern.permute.xlu0 0
        %445 = vperm.xlu0 %444, %v437
        %v446 = vpop.permute.xlu0 %445
        %v448 = vsub.f32 %v432, %v441
        %v449 = vsub.f32 %v433, %v441
        %v450 = vsub.f32 %v434, %v446
        %v451 = vsub.f32 %v435, %v446
        %v452 = vmul.f32 %v448, %v448
        %v453 = vmul.f32 %v449, %v449
        %v454 = vmul.f32 %v450, %v450
        %v455 = vmul.f32 %v451, %v451
        %v456 = vadd.f32 %v452, %v454
        %v457 = vrot.slane %v456, 4
        %v458 = vadd.f32 %v456, %v457
        %v459 = vrot.slane %v458, 2
        %v460 = vadd.f32 %v458, %v459
        %v461 = vrot.slane %v460, 1
        %v462 = vadd.f32 %v460, %v461
        %v463 = vadd.f32 %v453, %v455
        %v464 = vrot.slane %v463, 4
        %v465 = vadd.f32 %v463, %v464
        %v466 = vrot.slane %v465, 2
        %v467 = vadd.f32 %v465, %v466
        %v468 = vrot.slane %v467, 1
        %v469 = vadd.f32 %v467, %v468
        %v470 = vadd.f32 %v462, 1e-05
        %v471 = vadd.f32 %v469, 1e-05
        %v472 = vrsqrt.pop %v470
        %v473 = vmul.f32 %v472, %v470
        %v474 = vmul.f32 %v473, %v472
        %v475 = vmul.f32 0.5, %v474
        %v476 = vsub.f32 1.5, %v475
        %v477 = vmul.f32 %v472, %v476
        %vm478 = vweird.f32 %v470
        %vm479 = vweird.f32 %v472
        %vm480 = vmor %vm478, %vm479
        %v481 = vsel %vm480, %v472, %v477
        %v482 = vrsqrt.pop %v471
        %v483 = vmul.f32 %v482, %v471
        %v484 = vmul.f32 %v483, %v482
        %v485 = vmul.f32 0.5, %v484
        %v486 = vsub.f32 1.5, %v485
        %v487 = vmul.f32 %v482, %v486
        %vm488 = vweird.f32 %v471
        %vm489 = vweird.f32 %v482
        %vm490 = vmor %vm488, %vm489
        %v491 = vsel %vm490, %v482, %v487
        %v492 = vmul.f32 %v448, %v481
        %v493 = vmul.f32 %v449, %v491
        %v494 = vmul.f32 %v450, %v481
        %v495 = vmul.f32 %v451, %v491
        %v496 = vpack.c.bf16 %v494, %v492
        %v497 = vpack.c.bf16 %v495, %v493
        %v498 = vld [vmem:[#allocation5] sm:$0xf]
        %v499 = vld [vmem:[#allocation5 + $0x4] sm:$0xf]
        %500 = vxpose.binary.xlu0.c.b16.start [1/16] %v497, %v496, 128
        %501 = vxpose.binary.xlu0.c.b16.cont [2/16] 0, 0, 128
        %502 = vxpose.binary.xlu0.c.b16.cont [3/16] 0, 0, 128
        %503 = vxpose.binary.xlu0.c.b16.cont [4/16] 0, 0, 128
        %504 = vxpose.binary.xlu0.c.b16.cont [5/16] 0, 0, 128
        %505 = vxpose.binary.xlu0.c.b16.cont [6/16] 0, 0, 128
        %506 = vxpose.binary.xlu0.c.b16.cont [7/16] 0, 0, 128
        %507 = vxpose.binary.xlu0.c.b16.end [8/16] 0, 0, 128
        %v508 = vpop.trf.xlu0
        %v509 = vpop.trf.xlu0
        %v510 = vpop.trf.xlu0
        %v511 = vpop.trf.xlu0
        %v512 = vpop.trf.xlu0
        %v513 = vpop.trf.xlu0
        %v514 = vpop.trf.xlu0
        %v515 = vpop.trf.xlu0
        %v516 = vpop.trf.xlu0
        %v517 = vpop.trf.xlu0
        %v518 = vpop.trf.xlu0
        %v519 = vpop.trf.xlu0
        %v520 = vpop.trf.xlu0
        %v521 = vpop.trf.xlu0
        %v522 = vpop.trf.xlu0
        %v523 = vpop.trf.xlu0
        %v526 = vunpack.c.l.b16 %v498
        %v527 = vunpack.c.l.b16 %v499
        %v528 = vpack.c.b16 %v527, %v526
        %vm530 = vcmask 130048
        %v532 = vsel %vm530, %v508, 0
        %v535 = vsel %vm530, %v510, 0
        %v538 = vsel %vm530, %v512, 0
        %v541 = vsel %vm530, %v514, 0
        %v544 = vsel %vm530, %v516, 0
        %v547 = vsel %vm530, %v518, 0
        %v550 = vsel %vm530, %v520, 0
        %v553 = vsel %vm530, %v522, 0
        %v556 = vsel %vm530, %v509, 0
        %v559 = vsel %vm530, %v511, 0
        %v562 = vsel %vm530, %v513, 0
        %v565 = vsel %vm530, %v515, 0
        %v568 = vsel %vm530, %v517, 0
        %v571 = vsel %vm530, %v519, 0
        %v574 = vsel %vm530, %v521, 0
        %v577 = vsel %vm530, %v523, 0
        %579 = vmatpush.bf16.msra.mxu0 0
        %580 = vmatpush.bf16.msra.mxu0 0
        %581 = vmatpush.bf16.msra.mxu0 0
        %582 = vmatpush.bf16.msra.mxu0 0
        %583 = vmatpush.bf16.msra.mxu0 0
        %584 = vmatpush.bf16.msra.mxu0 0
        %585 = vmatpush.bf16.msra.mxu0 0
        %586 = vmatpush.bf16.msra.mxu0 %v528
        %587 = vmatmul.bf16.gmra.mxu0 %v532
        %v588 = vpop.f32.mrf.mxu0
        %v589 = vadd.f32 0.0, %v588
        %v590 = vpop.f32.mrf.mxu0
        %v591 = vadd.f32 0.0, %v590
        %592 = vmatmul.bf16.gmra.mxu0 %v535
        %v593 = vpop.f32.mrf.mxu0
        %v594 = vadd.f32 0.0, %v593
        %v595 = vpop.f32.mrf.mxu0
        %v596 = vadd.f32 0.0, %v595
        %597 = vmatmul.bf16.gmra.mxu0 %v538
        %v598 = vpop.f32.mrf.mxu0
        %v599 = vadd.f32 0.0, %v598
        %v600 = vpop.f32.mrf.mxu0
        %v601 = vadd.f32 0.0, %v600
        %602 = vmatmul.bf16.gmra.mxu0 %v541
        %v603 = vpop.f32.mrf.mxu0
        %v604 = vadd.f32 0.0, %v603
        %v605 = vpop.f32.mrf.mxu0
        %v606 = vadd.f32 0.0, %v605
        %607 = vmatmul.bf16.gmra.mxu0 %v544
        %v608 = vpop.f32.mrf.mxu0
        %v609 = vadd.f32 0.0, %v608
        %v610 = vpop.f32.mrf.mxu0
        %v611 = vadd.f32 0.0, %v610
        %612 = vmatmul.bf16.gmra.mxu0 %v547
        %v613 = vpop.f32.mrf.mxu0
        %v614 = vadd.f32 0.0, %v613
        %v615 = vpop.f32.mrf.mxu0
        %v616 = vadd.f32 0.0, %v615
        %617 = vmatmul.bf16.gmra.mxu0 %v550
        %v618 = vpop.f32.mrf.mxu0
        %v619 = vadd.f32 0.0, %v618
        %v620 = vpop.f32.mrf.mxu0
        %v621 = vadd.f32 0.0, %v620
        %622 = vmatmul.bf16.gmra.mxu0 %v553
        %v623 = vpop.f32.mrf.mxu0
        %v624 = vadd.f32 0.0, %v623
        %v625 = vpop.f32.mrf.mxu0
        %v626 = vadd.f32 0.0, %v625
        %627 = vmatmul.bf16.gmra.mxu0 %v556
        %v628 = vpop.f32.mrf.mxu0
        %v629 = vadd.f32 0.0, %v628
        %v630 = vpop.f32.mrf.mxu0
        %v631 = vadd.f32 0.0, %v630
        %632 = vmatmul.bf16.gmra.mxu0 %v559
        %v633 = vpop.f32.mrf.mxu0
        %v634 = vadd.f32 0.0, %v633
        %v635 = vpop.f32.mrf.mxu0
        %v636 = vadd.f32 0.0, %v635
        %637 = vmatmul.bf16.gmra.mxu0 %v562
        %v638 = vpop.f32.mrf.mxu0
        %v639 = vadd.f32 0.0, %v638
        %v640 = vpop.f32.mrf.mxu0
        %v641 = vadd.f32 0.0, %v640
        %642 = vmatmul.bf16.gmra.mxu0 %v565
        %v643 = vpop.f32.mrf.mxu0
        %v644 = vadd.f32 0.0, %v643
        %v645 = vpop.f32.mrf.mxu0
        %v646 = vadd.f32 0.0, %v645
        %647 = vmatmul.bf16.gmra.mxu0 %v568
        %v648 = vpop.f32.mrf.mxu0
        %v649 = vadd.f32 0.0, %v648
        %v650 = vpop.f32.mrf.mxu0
        %v651 = vadd.f32 0.0, %v650
        %652 = vmatmul.bf16.gmra.mxu0 %v571
        %v653 = vpop.f32.mrf.mxu0
        %v654 = vadd.f32 0.0, %v653
        %v655 = vpop.f32.mrf.mxu0
        %v656 = vadd.f32 0.0, %v655
        %657 = vmatmul.bf16.gmra.mxu0 %v574
        %v658 = vpop.f32.mrf.mxu0
        %v659 = vadd.f32 0.0, %v658
        %v660 = vpop.f32.mrf.mxu0
        %v661 = vadd.f32 0.0, %v660
        %662 = vmatmul.bf16.gmra.mxu0 %v577
        %v663 = vpop.f32.mrf.mxu0
        %v664 = vadd.f32 0.0, %v663
        %v665 = vpop.f32.mrf.mxu0
        %v666 = vadd.f32 0.0, %v665
        %667 = vdwg.mxu0
        %v668 = vld [vmem:[#allocation2] sm:$0x1]
        %v669 = vmax.f32 %v589, %v599
        %v670 = vmax.f32 %v591, %v601
        %v671 = vmax.f32 %v594, %v604
        %v672 = vmax.f32 %v596, %v606
        %v673 = vmax.f32 %v669, %v609
        %v674 = vmax.f32 %v670, %v611
        %v675 = vmax.f32 %v671, %v614
        %v676 = vmax.f32 %v672, %v616
        %v677 = vmax.f32 %v673, %v619
        %v678 = vmax.f32 %v674, %v621
        %v679 = vmax.f32 %v675, %v624
        %v680 = vmax.f32 %v676, %v626
        %v681 = vmax.f32 %v677, %v629
        %v682 = vmax.f32 %v678, %v631
        %v683 = vmax.f32 %v679, %v634
        %v684 = vmax.f32 %v680, %v636
        %v685 = vmax.f32 %v681, %v639
        %v686 = vmax.f32 %v682, %v641
        %v687 = vmax.f32 %v683, %v644
        %v688 = vmax.f32 %v684, %v646
        %v689 = vmax.f32 %v685, %v649
        %v690 = vmax.f32 %v686, %v651
        %v691 = vmax.f32 %v687, %v654
        %v692 = vmax.f32 %v688, %v656
        %v693 = vmax.f32 %v689, %v659
        %v694 = vmax.f32 %v690, %v661
        %v695 = vmax.f32 %v691, %v664
        %v696 = vmax.f32 %v692, %v666
        %v697 = vmax.f32 %v693, %v694
        %v698 = vmax.f32 %v695, %v696
        %v699 = vmax.f32 %v697, %v698
        %v700 = vrot.slane %v699, 4
        %v701 = vmax.f32 %v699, %v700
        %v702 = vrot.slane %v701, 2
        %v703 = vmax.f32 %v701, %v702
        %v704 = vrot.slane %v703, 1
        %v705 = vmax.f32 %v703, %v704
        %v706 = vmax.f32 %v668, %v705
        %v707 = vsub.f32 %v668, %v706
        %v708 = vmul.f32 %v707, 1.442695
        %v709 = vpow.pop %v708
        %v711 = vperm.slane %v706, 0
        %v713 = vsub.f32 %v589, %v711
        %v714 = vsub.f32 %v591, %v711
        %v715 = vsub.f32 %v594, %v711
        %v716 = vsub.f32 %v596, %v711
        %v717 = vsub.f32 %v599, %v711
        %v718 = vsub.f32 %v601, %v711
        %v719 = vsub.f32 %v604, %v711
        %v720 = vsub.f32 %v606, %v711
        %v721 = vsub.f32 %v609, %v711
        %v722 = vsub.f32 %v611, %v711
        %v723 = vsub.f32 %v614, %v711
        %v724 = vsub.f32 %v616, %v711
        %v725 = vsub.f32 %v619, %v711
        %v726 = vsub.f32 %v621, %v711
        %v727 = vsub.f32 %v624, %v711
        %v728 = vsub.f32 %v626, %v711
        %v729 = vsub.f32 %v629, %v711
        %v730 = vsub.f32 %v631, %v711
        %v731 = vsub.f32 %v634, %v711
        %v732 = vsub.f32 %v636, %v711
        %v733 = vsub.f32 %v639, %v711
        %v734 = vsub.f32 %v641, %v711
        %v735 = vsub.f32 %v644, %v711
        %v736 = vsub.f32 %v646, %v711
        %v737 = vsub.f32 %v649, %v711
        %v738 = vsub.f32 %v651, %v711
        %v739 = vsub.f32 %v654, %v711
        %v740 = vsub.f32 %v656, %v711
        %v741 = vsub.f32 %v659, %v711
        %v742 = vsub.f32 %v661, %v711
        %v743 = vsub.f32 %v664, %v711
        %v744 = vsub.f32 %v666, %v711
        %v745 = vmul.f32 %v713, 1.442695
        %v746 = vpow.pop %v745
        %v747 = vmul.f32 %v714, 1.442695
        %v748 = vpow.pop %v747
        %v749 = vmul.f32 %v715, 1.442695
        %v750 = vpow.pop %v749
        %v751 = vmul.f32 %v716, 1.442695
        %v752 = vpow.pop %v751
        %v753 = vmul.f32 %v717, 1.442695
        %v754 = vpow.pop %v753
        %v755 = vmul.f32 %v718, 1.442695
        %v756 = vpow.pop %v755
        %v757 = vmul.f32 %v719, 1.442695
        %v758 = vpow.pop %v757
        %v759 = vmul.f32 %v720, 1.442695
        %v760 = vpow.pop %v759
        %v761 = vmul.f32 %v721, 1.442695
        %v762 = vpow.pop %v761
        %v763 = vmul.f32 %v722, 1.442695
        %v764 = vpow.pop %v763
        %v765 = vmul.f32 %v723, 1.442695
        %v766 = vpow.pop %v765
        %v767 = vmul.f32 %v724, 1.442695
        %v768 = vpow.pop %v767
        %v769 = vmul.f32 %v725, 1.442695
        %v770 = vpow.pop %v769
        %v771 = vmul.f32 %v726, 1.442695
        %v772 = vpow.pop %v771
        %v773 = vmul.f32 %v727, 1.442695
        %v774 = vpow.pop %v773
        %v775 = vmul.f32 %v728, 1.442695
        %v776 = vpow.pop %v775
        %v777 = vmul.f32 %v729, 1.442695
        %v778 = vpow.pop %v777
        %v779 = vmul.f32 %v730, 1.442695
        %v780 = vpow.pop %v779
        %v781 = vmul.f32 %v731, 1.442695
        %v782 = vpow.pop %v781
        %v783 = vmul.f32 %v732, 1.442695
        %v784 = vpow.pop %v783
        %v785 = vmul.f32 %v733, 1.442695
        %v786 = vpow.pop %v785
        %v787 = vmul.f32 %v734, 1.442695
        %v788 = vpow.pop %v787
        %v789 = vmul.f32 %v735, 1.442695
        %v790 = vpow.pop %v789
        %v791 = vmul.f32 %v736, 1.442695
        %v792 = vpow.pop %v791
        %v793 = vmul.f32 %v737, 1.442695
        %v794 = vpow.pop %v793
        %v795 = vmul.f32 %v738, 1.442695
        %v796 = vpow.pop %v795
        %v797 = vmul.f32 %v739, 1.442695
        %v798 = vpow.pop %v797
        %v799 = vmul.f32 %v740, 1.442695
        %v800 = vpow.pop %v799
        %v801 = vmul.f32 %v741, 1.442695
        %v802 = vpow.pop %v801
        %v803 = vmul.f32 %v742, 1.442695
        %v804 = vpow.pop %v803
        %v805 = vmul.f32 %v743, 1.442695
        %v806 = vpow.pop %v805
        %v807 = vmul.f32 %v744, 1.442695
        %v808 = vpow.pop %v807
        %v809 = vld [vmem:[#allocation3] sm:$0x1]
        %v810 = vmul.f32 %v709, %v809
        %v811 = vadd.f32 %v746, %v748
        %v812 = vadd.f32 %v811, %v750
        %v813 = vadd.f32 %v812, %v752
        %v814 = vadd.f32 %v813, %v754
        %v815 = vadd.f32 %v814, %v756
        %v816 = vadd.f32 %v815, %v758
        %v817 = vadd.f32 %v816, %v760
        %v818 = vadd.f32 %v817, %v762
        %v819 = vadd.f32 %v818, %v764
        %v820 = vadd.f32 %v819, %v766
        %v821 = vadd.f32 %v820, %v768
        %v822 = vadd.f32 %v821, %v770
        %v823 = vadd.f32 %v822, %v772
        %v824 = vadd.f32 %v823, %v774
        %v825 = vadd.f32 %v824, %v776
        %v826 = vadd.f32 %v825, %v778
        %v827 = vadd.f32 %v826, %v780
        %v828 = vadd.f32 %v827, %v782
        %v829 = vadd.f32 %v828, %v784
        %v830 = vadd.f32 %v829, %v786
        %v831 = vadd.f32 %v830, %v788
        %v832 = vadd.f32 %v831, %v790
        %v833 = vadd.f32 %v832, %v792
        %v834 = vadd.f32 %v833, %v794
        %v835 = vadd.f32 %v834, %v796
        %v836 = vadd.f32 %v835, %v798
        %v837 = vadd.f32 %v836, %v800
        %v838 = vadd.f32 %v837, %v802
        %v839 = vadd.f32 %v838, %v804
        %v840 = vadd.f32 %v839, %v806
        %v841 = vadd.f32 %v840, %v808
        %v842 = vrot.slane %v841, 4
        %v843 = vadd.f32 %v841, %v842
        %v844 = vrot.slane %v843, 2
        %v845 = vadd.f32 %v843, %v844
        %v846 = vrot.slane %v845, 1
        %v847 = vadd.f32 %v845, %v846
        %v848 = vadd.f32 %v810, %v847
        %849 = vst [vmem:[#allocation3] sm:$0x1] %v848
        %v850 = vld [vmem:[#allocation4] sm:$0xff]
        %v851 = vld [vmem:[#allocation4 + $0x8] sm:$0xff]
        %v853 = vperm.slane %v709, 0
        %v855 = vmul.f32 %v853, %v850
        %v856 = vmul.f32 %v853, %v851
        %v857 = vld [vmem:[%s325] sm:$0xff]
        %v858 = vld [vmem:[%s325 + $0x8] sm:$0xff]
        %v859 = vpack.c.bf16 %v748, %v746
        %v860 = vpack.c.bf16 %v752, %v750
        %v861 = vpack.c.bf16 %v756, %v754
        %v862 = vpack.c.bf16 %v760, %v758
        %v863 = vpack.c.bf16 %v764, %v762
        %v864 = vpack.c.bf16 %v768, %v766
        %v865 = vpack.c.bf16 %v772, %v770
        %v866 = vpack.c.bf16 %v776, %v774
        %v867 = vpack.c.bf16 %v780, %v778
        %v868 = vpack.c.bf16 %v784, %v782
        %v869 = vpack.c.bf16 %v788, %v786
        %v870 = vpack.c.bf16 %v792, %v790
        %v871 = vpack.c.bf16 %v796, %v794
        %v872 = vpack.c.bf16 %v800, %v798
        %v873 = vpack.c.bf16 %v804, %v802
        %v874 = vpack.c.bf16 %v808, %v806
        %v877 = vunpack.c.l.b16 %v857
        %v878 = vunpack.c.h.b16 %v857
        %v879 = vunpack.c.l.b16 %v858
        %v880 = vunpack.c.h.b16 %v858
        %v881 = vpack.c.b16 %v879, %v877
        %v882 = vpack.c.b16 %v880, %v878
        %885 = vmatpush.bf16.msra.mxu0 %v866
        %886 = vmatpush.bf16.msra.mxu0 %v865
        %887 = vmatpush.bf16.msra.mxu0 %v864
        %888 = vmatpush.bf16.msra.mxu0 %v863
        %889 = vmatpush.bf16.msra.mxu0 %v862
        %890 = vmatpush.bf16.msra.mxu0 %v861
        %891 = vmatpush.bf16.msra.mxu0 %v860
        %892 = vmatpush.bf16.msra.mxu0 %v859
        %893 = vmatmul.bf16.gmra.mxu0 %v881
        %v894 = vpop.f32.mrf.mxu0
        %v895 = vadd.f32 0.0, %v894
        %v896 = vpop.f32.mrf.mxu0
        %v897 = vadd.f32 0.0, %v896
        %898 = vdwg.mxu0
        %899 = vmatpush.bf16.msra.mxu0 %v874
        %900 = vmatpush.bf16.msra.mxu0 %v873
        %901 = vmatpush.bf16.msra.mxu0 %v872
        %902 = vmatpush.bf16.msra.mxu0 %v871
        %903 = vmatpush.bf16.msra.mxu0 %v870
        %904 = vmatpush.bf16.msra.mxu0 %v869
        %905 = vmatpush.bf16.msra.mxu0 %v868
        %906 = vmatpush.bf16.msra.mxu0 %v867
        %907 = vmatmul.bf16.gmra.mxu0 %v882
        %v908 = vpop.f32.mrf.mxu0
        %v909 = vadd.f32 %v895, %v908
        %v910 = vpop.f32.mrf.mxu0
        %v911 = vadd.f32 %v897, %v910
        %912 = vdwg.mxu0
        %v913 = vadd.f32 %v855, %v909
        %v914 = vadd.f32 %v856, %v911
        %915 = vst [vmem:[#allocation4] sm:$0xff] %v913
        %916 = vst [vmem:[#allocation4 + $0x8] sm:$0xff] %v914
        %917 = vst [vmem:[#allocation2] sm:$0x1] %v706
        // Predicated region
        $region120: #{nst_forward.12} parent=106 // pred_check
          %p918 = pneg %p378
        $region121: #{nst_forward.12} parent=106 // pred_check_branch
          %920 = sbr.rel (%p918) target = $region123
        $region122: #{nst_forward.12} parent=106 // pred_region
          %v921 = vld [vmem:[#allocation4] sm:$0xff]
          %v922 = vld [vmem:[#allocation4 + $0x8] sm:$0xff]
          %v923 = vld [vmem:[#allocation3] sm:$0x1]
          %v924 = vrcp.pop %v923
          %v926 = vperm.slane %v924, 0
          %v928 = vmul.f32 %v921, %v926
          %v929 = vmul.f32 %v922, %v926
          %v930 = vmul.f32 %v928, 0.6
          %v931 = vmul.f32 %v929, 0.6
          %v932 = vld [vmem:[%s318] sm:$0xf]
          %v933 = vld [vmem:[%s318 + $0x4] sm:$0xf]
          %v934 = vunpack.c.l.bf16 %v932
          %v935 = vunpack.c.l.bf16 %v933
          %v936 = vmul.f32 %v934, 0.4
          %v937 = vmul.f32 %v935, 0.4
          %v938 = vadd.f32 %v930, %v936
          %v939 = vadd.f32 %v931, %v937
          %v940 = vpack.c.bf16 %v938, %v938
          %v941 = vpack.c.bf16 %v939, %v939
          %942 = vst [vmem:[%s360] sm:$0xf] %v940
          %943 = vst [vmem:[%s360 + $0x4] sm:$0xf] %v941
        $region123: #{nst_forward.12} parent=106 // pred_fallthru
          _
        %s944 = sand.u32 %s156, 1
        %s945 = sand.u32 %s156, 1
        %s946 = smul.addr %s945, 8
        %s947 = scalar_lea.vmem [#allocation8], %s946
        // Predicated region
        $region124: #{nst_forward.12} parent=106 // pred_check
          %p948 = pneg %p166
        $region125: #{nst_forward.12} parent=106 // pred_check_branch
          %950 = sbr.rel (%p948) target = $region127
        $region126: #{nst_forward.12} parent=106 // pred_region
          %s951 = smul.u32 %s20, 2
          %s952 = sadd.s32 %s951, %s21
          %s953 = smul.addr %s952, 4
          %s954 = scalar_lea.vmem %s4, %s953
          // Predicated region
          $region128: #{nst_forward.12} parent=126 // pred_check
            _
          $region129: #{nst_forward.12} parent=126 // pred_check_branch
            %956 = sbr.rel (0) target = $region131
          $region130: #{nst_forward.12} parent=126 // pred_region
            // Predicated region
            $region132: #{nst_forward.12} parent=130 // pred_check
              _
            $region133: #{nst_forward.12} parent=130 // pred_check_branch
              %958 = sbr.rel target = $region135
            $region134: #{nst_forward.12} parent=130 // pred_region
              // Predicated region
              $region147: #{nst_forward.12} parent=134 // pred_check
                _
              $region148: #{nst_forward.12} parent=134 // pred_check_branch
                %976 = sbr.rel (0) target = $region150
              $region149: #{nst_forward.12} parent=134 // pred_region
                loop: start=0, step=1, limit=1
                $region151: #{nst_forward.12} parent=149 // loop_pre_header
                  _
                $region152: #{nst_forward.12} parent=149 // loop_header
                  %s978 = sphi 0, %s982
                  %p979 = scmp.ge.s32.totalorder %s978, 1
                  %s983 = sphi %s947, %s947
                  %s984 = sphi %s954, %s954
                $region153: #{nst_forward.12} parent=149 // loop_header_branch
                  %981 = sbr.rel (%p979) target = $region157
                $region154: #{nst_forward.12} parent=149 // loop_body
                  _
                $region155: #{nst_forward.12} parent=149 // loop_footer
                  %s982 = sadd.s32 1, %s978
                $region156: #{nst_forward.12} parent=149 // loop_footer_branch
                  %977 = sbr.rel target = $region152
                $region157: #{nst_forward.12} parent=149 // loop_exit
                  _
                %s986 = ssub.s32 16, 1
                loop: start=0, step=1, limit=1
                $region158: #{nst_forward.12} parent=149 // loop_pre_header
                  _
                $region159: #{nst_forward.12} parent=149 // loop_header
                  %s988 = sphi 0, %s992
                  %p989 = scmp.ge.s32.totalorder %s988, 1
                  %s993 = sphi %s947, %s947
                  %s994 = sphi %s954, %s954
                $region160: #{nst_forward.12} parent=149 // loop_header_branch
                  %991 = sbr.rel (%p989) target = $region164
                $region161: #{nst_forward.12} parent=149 // loop_body
                  %v995 = vld [vmem:[%s993] sm:%s986]
                  %996 = vst [vmem:[%s994] sm:%s986] %v995
                  %v997 = vld [vmem:[%s993 + $0x4] sm:%s986]
                  %998 = vst [vmem:[%s994 + $0x10] sm:%s986] %v997
                $region162: #{nst_forward.12} parent=149 // loop_footer
                  %s992 = sadd.s32 1, %s988
                $region163: #{nst_forward.12} parent=149 // loop_footer_branch
                  %987 = sbr.rel target = $region159
                $region164: #{nst_forward.12} parent=149 // loop_exit
                  _
              $region150: #{nst_forward.12} parent=134 // pred_fallthru
                _
            $region135: #{nst_forward.12} parent=130 // pred_fallthru
              _
            // Predicated region
            $region136: #{nst_forward.12} parent=130 // pred_check
              _
            $region137: #{nst_forward.12} parent=130 // pred_check_branch
              %960 = sbr.rel (0) target = $region139
            $region138: #{nst_forward.12} parent=130 // pred_region
              %s962 = ssub.s32 16, 1
              loop: start=0, step=1, limit=1
              $region140: #{nst_forward.12} parent=138 // loop_pre_header
                _
              $region141: #{nst_forward.12} parent=138 // loop_header
                %s964 = sphi 0, %s968
                %p965 = scmp.ge.s32.totalorder %s964, 1
                %s969 = sphi %s947, %s947
                %s970 = sphi %s954, %s954
              $region142: #{nst_forward.12} parent=138 // loop_header_branch
                %967 = sbr.rel (%p965) target = $region146
              $region143: #{nst_forward.12} parent=138 // loop_body
                %v971 = vld [vmem:[%s969] sm:%s962]
                %972 = vst [vmem:[%s970] sm:%s962] %v971
                %v973 = vld [vmem:[%s969 + $0x4] sm:%s962]
                %974 = vst [vmem:[%s970 + $0x10] sm:%s962] %v973
              $region144: #{nst_forward.12} parent=138 // loop_footer
                %s968 = sadd.s32 1, %s964
              $region145: #{nst_forward.12} parent=138 // loop_footer_branch
                %963 = sbr.rel target = $region141
              $region146: #{nst_forward.12} parent=138 // loop_exit
                _
            $region139: #{nst_forward.12} parent=130 // pred_fallthru
              _
          $region131: #{nst_forward.12} parent=126 // pred_fallthru
            _
          %999 = vnop
        $region127: #{nst_forward.12} parent=106 // pred_fallthru
          _
      $region107: #{nst_forward.12} parent=5 // pred_fallthru
        _
      %p1000 = scmp.le.s32.totalorder 2, %s10
      // Predicated region
      $region165: #{nst_forward.12} parent=5 // pred_check
        %p1001 = pneg %p1000
      $region166: #{nst_forward.12} parent=5 // pred_check_branch
        %1003 = sbr.rel (%p1001) target = $region168
      $region167: #{nst_forward.12} parent=5 // pred_region
        %s1004 = ssub.s32 %s10, 2
        // Predicated region
        $region169: #{nst_forward.12} parent=167 // pred_check
          %p1005 = pneg %p172
        $region170: #{nst_forward.12} parent=167 // pred_check_branch
          %1007 = sbr.rel (%p1005) target = $region172
        $region171: #{nst_forward.12} parent=167 // pred_region
          %s1008 = sand.u32 %s157, 1
          %s1009 = sand.u32 %s157, 1
          %s1010 = smul.addr %s1009, 8
          %s1011 = scalar_lea.vmem [#allocation8], %s1010
        $region172: #{nst_forward.12} parent=167 // pred_fallthru
          _
      $region168: #{nst_forward.12} parent=5 // pred_fallthru
        _
    $region6: #{nst_forward.12} parent=1 // loop_footer
      %s14 = sadd.s32 1, %s10
    $region7: #{nst_forward.12} parent=1 // loop_footer_branch
      %9 = sbr.rel target = $region3
    $region8: #{nst_forward.12} parent=1 // loop_exit
      _

// kernel: nst_forward.15
$region0: #{nst_forward.15}
  #allocation0 [shape = 'u32[]', space=smem, size = 0x4, offset = 0x4, fixed_abs, tag = 'smem constant byte address 0x4 - core index']
  #allocation1 [shape = 'u32[72,128]{1,0:T(1,128)}', space=vmem, size = 0x9000, scoped, tag = 'internal scratch']
  #allocation2 [shape = 'f32[3,256]{1,0:T(4,128)}', space=vmem, size = 0x1000, scoped, tag = 'scratch operand']
  %s0 = inlined_call_operand.vmem [shape: bf16[3,144], index: 0, kind: input, shape index: {}]
  %s1 = inlined_call_operand.vmem [shape: bf16[144,512], index: 1, kind: input, shape index: {}]
  %s2 = inlined_call_operand.vmem [shape: f32[3,1], index: 2, kind: input, shape index: {}]
  %s3 = inlined_call_operand.vmem [shape: f32[3,512], index: 3, kind: output, shape index: {}]
  %s4 = sld [smem:[#allocation0]]
  $region91: #{nst_forward.15} parent=0
    _
  %s6 = ssub.s32 1, %s4
  %s7 = scalar_select 0, %s6, %s4
  $region1: #{nst_forward.15} parent=0
    #allocation3 [shape = 'u8[147456]{0}', space=vmem, size = 0x24000, scoped, tag = 'input window, operand 1']
    loop: start=0, step=1, limit=4
    $region2: #{nst_forward.15} parent=1 // loop_pre_header
      _
    $region3: #{nst_forward.15} parent=1 // loop_header
      %s9 = sphi 0, %s13
      %p10 = scmp.ge.s32.totalorder %s9, 4
      %s16 = sphi 0, %s28
      %s17 = sphi 0, %s24
      %s18 = sphi 0, %s16
      %s19 = sphi 0, %s17
      %s20 = sphi 0, %s18
      %s21 = sphi 0, %s19
      %s31 = sphi 0, %s33
      %s34 = sphi 0, %s31
      %s35 = sphi 0, %s34
      %s51 = sphi 0, %s35
      %s59 = sphi 0, %s61
      %s62 = sphi 0, %s59
      %s63 = sphi 0, %s62
      %s79 = sphi 0, %s63
      %s83 = sphi 0, %s83
      %s85 = sphi 0, %s83
      %s86 = sphi 0, %s85
      %s100 = sphi 0, %s86
      %s106 = sphi 0, %s108
      %s109 = sphi 0, %s106
      %s110 = sphi 0, %s109
      %s126 = sphi 0, %s110
    $region4: #{nst_forward.15} parent=1 // loop_header_branch
      %12 = sbr.rel (%p10) target = $region8
    $region5: #{nst_forward.15} parent=1 // loop_body
      %s14 = ssub.s32 %s9, 1
      %s15 = ssub.s32 %s9, 2
      %s22 = sadd.s32 1, %s17
      %p23 = scmp.ge.s32.totalorder %s22, 1
      %s24 = scalar_select %p23, 0, %s22
      %s25 = sadd.s32 1, %s16
      %s26 = scalar_select %p23, %s25, %s16
      %p27 = scmp.ge.s32.totalorder %s26, 2
      %s28 = scalar_select %p27, 0, %s26
      %s29 = ssub.s32 %s17, %s24
      %p30 = scmp.eq.s32.totalorder %s29, 0
      %s32 = sadd.s32 %s31, 1
      %s33 = scalar_select %p30, %s31, %s32
      %p36 = pneg %p30
      %p37 = scmp.eq.s32.totalorder %s9, 1
      %p38 = por %p36, %p37
      %p39 = scmp.ne.s32.totalorder %s31, %s34
      %p40 = scmp.eq.s32.totalorder %s9, 0
      %p41 = por %p39, %p40
      %p42 = scmp.ne.s32.totalorder %s31, %s34
      %p43 = scmp.eq.s32.totalorder %s14, 1
      %p44 = por %p42, %p43
      %p45 = scmp.ne.s32.totalorder %s34, %s35
      %p46 = scmp.eq.s32.totalorder %s14, 0
      %p47 = por %p45, %p46
      %p48 = scmp.ne.s32.totalorder %s34, %s35
      %p49 = scmp.eq.s32.totalorder %s15, 1
      %p50 = por %p48, %p49
      %p52 = scmp.ne.s32.totalorder %s35, %s51
      %p53 = scmp.eq.s32.totalorder %s15, 0
      %p54 = por %p52, %p53
      %s55 = ssub.s32 %s17, %s24
      %s56 = ssub.s32 %s16, %s28
      %s57 = sor.u32 %s55, %s56
      %p58 = scmp.eq.s32.totalorder %s57, 0
      %s60 = sadd.s32 %s59, 1
      %s61 = scalar_select %p58, %s59, %s60
      %p64 = pneg %p58
      %p65 = scmp.eq.s32.totalorder %s9, 1
      %p66 = por %p64, %p65
      %p67 = scmp.ne.s32.totalorder %s59, %s62
      %p68 = scmp.eq.s32.totalorder %s9, 0
      %p69 = por %p67, %p68
      %p70 = scmp.ne.s32.totalorder %s59, %s62
      %p71 = scmp.eq.s32.totalorder %s14, 1
      %p72 = por %p70, %p71
      %p73 = scmp.ne.s32.totalorder %s62, %s63
      %p74 = scmp.eq.s32.totalorder %s14, 0
      %p75 = por %p73, %p74
      %p76 = scmp.ne.s32.totalorder %s62, %s63
      %p77 = scmp.eq.s32.totalorder %s15, 1
      %p78 = por %p76, %p77
      %p80 = scmp.ne.s32.totalorder %s63, %s79
      %p81 = scmp.eq.s32.totalorder %s15, 0
      %p82 = por %p80, %p81
      %s84 = sadd.s32 %s83, 1
      %p87 = scmp.eq.s32.totalorder %s9, 1
      %p88 = scmp.ne.s32.totalorder %s83, %s85
      %p89 = scmp.eq.s32.totalorder %s9, 0
      %p90 = por %p88, %p89
      %p91 = scmp.ne.s32.totalorder %s83, %s85
      %p92 = scmp.eq.s32.totalorder %s14, 1
      %p93 = por %p91, %p92
      %p94 = scmp.ne.s32.totalorder %s85, %s86
      %p95 = scmp.eq.s32.totalorder %s14, 0
      %p96 = por %p94, %p95
      %p97 = scmp.ne.s32.totalorder %s85, %s86
      %p98 = scmp.eq.s32.totalorder %s15, 1
      %p99 = por %p97, %p98
      %p101 = scmp.ne.s32.totalorder %s86, %s100
      %p102 = scmp.eq.s32.totalorder %s15, 0
      %p103 = por %p101, %p102
      %s104 = ssub.s32 %s16, %s28
      %p105 = scmp.eq.s32.totalorder %s104, 0
      %s107 = sadd.s32 %s106, 1
      %s108 = scalar_select %p105, %s106, %s107
      %p111 = pneg %p105
      %p112 = scmp.eq.s32.totalorder %s9, 1
      %p113 = por %p111, %p112
      %p114 = scmp.ne.s32.totalorder %s106, %s109
      %p115 = scmp.eq.s32.totalorder %s9, 0
      %p116 = por %p114, %p115
      %p117 = scmp.ne.s32.totalorder %s106, %s109
      %p118 = scmp.eq.s32.totalorder %s14, 1
      %p119 = por %p117, %p118
      %p120 = scmp.ne.s32.totalorder %s109, %s110
      %p121 = scmp.eq.s32.totalorder %s14, 0
      %p122 = por %p120, %p121
      %p123 = scmp.ne.s32.totalorder %s109, %s110
      %p124 = scmp.eq.s32.totalorder %s15, 1
      %p125 = por %p123, %p124
      %p127 = scmp.ne.s32.totalorder %s110, %s126
      %p128 = scmp.eq.s32.totalorder %s15, 0
      %p129 = por %p127, %p128
      %p130 = scmp.le.s32.totalorder 1, %s9
      %p131 = scmp.lt.s32.totalorder %s9, 3
      %p132 = pnand %p130, %p131
      %p133 = pneg %p132
      // Predicated region
      $region9: #{nst_forward.15} parent=5 // pred_check
        _
      $region10: #{nst_forward.15} parent=5 // pred_check_branch
        %135 = sbr.rel (%p132) target = $region12
      $region11: #{nst_forward.15} parent=5 // pred_region
        %s136 = ssub.s32 %s9, 1
        // Predicated region
        $region13: #{nst_forward.15} parent=11 // pred_check
          %p137 = pneg %p47
        $region14: #{nst_forward.15} parent=11 // pred_check_branch
          %139 = sbr.rel (%p137) target = $region16
        $region15: #{nst_forward.15} parent=11 // pred_region
          %s140 = smul.u32 2, %s19
          %p141 = scmp.lt.s32.totalorder %s140, 1
          %s142 = scalar_select %p141, %s140, 1
          %s143 = smul.addr %s142, 2
          %s144 = scalar_lea.vmem %s0, %s143
          %s145 = smul.u32 2, %s19
        $region16: #{nst_forward.15} parent=11 // pred_fallthru
          _
        // Predicated region
        $region17: #{nst_forward.15} parent=11 // pred_check
          %p146 = pneg %p96
        $region18: #{nst_forward.15} parent=11 // pred_check_branch
          %148 = sbr.rel (%p146) target = $region20
        $region19: #{nst_forward.15} parent=11 // pred_region
          _
        $region20: #{nst_forward.15} parent=11 // pred_fallthru
          _
      $region12: #{nst_forward.15} parent=5 // pred_fallthru
        _
      %p149 = scmp.lt.s32.totalorder %s9, 2
      // Predicated region
      $region21: #{nst_forward.15} parent=5 // pred_check
        %p150 = pneg %p149
      $region22: #{nst_forward.15} parent=5 // pred_check_branch
        %152 = sbr.rel (%p150) target = $region24
      $region23: #{nst_forward.15} parent=5 // pred_region
        // Predicated region
        $region25: #{nst_forward.15} parent=23 // pred_check
          %p153 = pneg %p69
        $region26: #{nst_forward.15} parent=23 // pred_check_branch
          %155 = sbr.rel (%p153) target = $region28
        $region27: #{nst_forward.15} parent=23 // pred_region
          %s156 = sand.u32 %s59, 1
          %s157 = sand.u32 %s59, 1
          %s158 = smul.addr %s157, 144
          %s159 = scalar_lea.vmem [#allocation3], %s158
          %s160 = smul.u32 18, %s17
          %s161 = smul.u32 2, %s16
          %s162 = smul.addr %s160, 4
          %s163 = sadd.s32 %s161, %s162
          %s164 = smul.addr %s163, 4
          %s165 = scalar_lea.vmem %s1, %s164
          // Predicated region
          $region29: #{nst_forward.15} parent=27 // pred_check
            _
          $region30: #{nst_forward.15} parent=27 // pred_check_branch
            %167 = sbr.rel (0) target = $region32
          $region31: #{nst_forward.15} parent=27 // pred_region
            // Predicated region
            $region33: #{nst_forward.15} parent=31 // pred_check
              _
            $region34: #{nst_forward.15} parent=31 // pred_check_branch
              %169 = sbr.rel (0) target = $region36
            $region35: #{nst_forward.15} parent=31 // pred_region
              // Predicated region
              $region48: #{nst_forward.15} parent=35 // pred_check
                _
              $region49: #{nst_forward.15} parent=35 // pred_check_branch
                %219 = sbr.rel (0) target = $region51
              $region50: #{nst_forward.15} parent=35 // pred_region
                loop: start=0, step=1, limit=1
                $region52: #{nst_forward.15} parent=50 // loop_pre_header
                  _
                $region53: #{nst_forward.15} parent=50 // loop_header
                  %s221 = sphi 0, %s225
                  %p222 = scmp.ge.s32.totalorder %s221, 1
                  %s226 = sphi %s165, %s165
                  %s227 = sphi %s159, %s159
                $region54: #{nst_forward.15} parent=50 // loop_header_branch
                  %224 = sbr.rel (%p222) target = $region58
                $region55: #{nst_forward.15} parent=50 // loop_body
                  %v228 = vld [vmem:[%s226] sm:$0xff]
                  %229 = vst [vmem:[%s227] sm:$0xff] %v228
                  %v230 = vld [vmem:[%s226 + $0x10] sm:$0xff]
                  %231 = vst [vmem:[%s227 + $0x8] sm:$0xff] %v230
                  %v232 = vld [vmem:[%s226 + $0x20] sm:$0xff]
                  %233 = vst [vmem:[%s227 + $0x10] sm:$0xff] %v232
                  %v234 = vld [vmem:[%s226 + $0x30] sm:$0xff]
                  %235 = vst [vmem:[%s227 + $0x18] sm:$0xff] %v234
                  %v236 = vld [vmem:[%s226 + $0x40] sm:$0xff]
                  %237 = vst [vmem:[%s227 + $0x20] sm:$0xff] %v236
                  %v238 = vld [vmem:[%s226 + $0x50] sm:$0xff]
                  %239 = vst [vmem:[%s227 + $0x28] sm:$0xff] %v238
                  %v240 = vld [vmem:[%s226 + $0x60] sm:$0xff]
                  %241 = vst [vmem:[%s227 + $0x30] sm:$0xff] %v240
                  %v242 = vld [vmem:[%s226 + $0x70] sm:$0xff]
                  %243 = vst [vmem:[%s227 + $0x38] sm:$0xff] %v242
                  %v244 = vld [vmem:[%s226 + $0x80] sm:$0xff]
                  %245 = vst [vmem:[%s227 + $0x40] sm:$0xff] %v244
                  %v246 = vld [vmem:[%s226 + $0x90] sm:$0xff]
                  %247 = vst [vmem:[%s227 + $0x48] sm:$0xff] %v246
                  %v248 = vld [vmem:[%s226 + $0xa0] sm:$0xff]
                  %249 = vst [vmem:[%s227 + $0x50] sm:$0xff] %v248
                  %v250 = vld [vmem:[%s226 + $0xb0] sm:$0xff]
                  %251 = vst [vmem:[%s227 + $0x58] sm:$0xff] %v250
                  %v252 = vld [vmem:[%s226 + $0xc0] sm:$0xff]
                  %253 = vst [vmem:[%s227 + $0x60] sm:$0xff] %v252
                  %v254 = vld [vmem:[%s226 + $0xd0] sm:$0xff]
                  %255 = vst [vmem:[%s227 + $0x68] sm:$0xff] %v254
                  %v256 = vld [vmem:[%s226 + $0xe0] sm:$0xff]
                  %257 = vst [vmem:[%s227 + $0x70] sm:$0xff] %v256
                  %v258 = vld [vmem:[%s226 + $0xf0] sm:$0xff]
                  %259 = vst [vmem:[%s227 + $0x78] sm:$0xff] %v258
                  %v260 = vld [vmem:[%s226 + $0x100] sm:$0xff]
                  %261 = vst [vmem:[%s227 + $0x80] sm:$0xff] %v260
                  %v262 = vld [vmem:[%s226 + $0x110] sm:$0xff]
                  %263 = vst [vmem:[%s227 + $0x88] sm:$0xff] %v262
                $region56: #{nst_forward.15} parent=50 // loop_footer
                  %s225 = sadd.s32 1, %s221
                $region57: #{nst_forward.15} parent=50 // loop_footer_branch
                  %220 = sbr.rel target = $region53
                $region58: #{nst_forward.15} parent=50 // loop_exit
                  _
              $region51: #{nst_forward.15} parent=35 // pred_fallthru
                _
              // Predicated region
              $region59: #{nst_forward.15} parent=35 // pred_check
                _
              $region60: #{nst_forward.15} parent=35 // pred_check_branch
                %265 = sbr.rel target = $region62
              $region61: #{nst_forward.15} parent=35 // pred_region
                _
              $region62: #{nst_forward.15} parent=35 // pred_fallthru
                _
            $region36: #{nst_forward.15} parent=31 // pred_fallthru
              _
            // Predicated region
            $region37: #{nst_forward.15} parent=31 // pred_check
              _
            $region38: #{nst_forward.15} parent=31 // pred_check_branch
              %171 = sbr.rel target = $region40
            $region39: #{nst_forward.15} parent=31 // pred_region
              %s173 = ssub.s32 256, 1
              loop: start=0, step=1, limit=1
              $region41: #{nst_forward.15} parent=39 // loop_pre_header
                _
              $region42: #{nst_forward.15} parent=39 // loop_header
                %s175 = sphi 0, %s179
                %p176 = scmp.ge.s32.totalorder %s175, 1
                %s180 = sphi %s165, %s165
                %s181 = sphi %s159, %s159
              $region43: #{nst_forward.15} parent=39 // loop_header_branch
                %178 = sbr.rel (%p176) target = $region47
              $region44: #{nst_forward.15} parent=39 // loop_body
                %v182 = vld [vmem:[%s180] sm:%s173]
                %183 = vst [vmem:[%s181] sm:%s173] %v182
                %v184 = vld [vmem:[%s180 + $0x10] sm:%s173]
                %185 = vst [vmem:[%s181 + $0x8] sm:%s173] %v184
                %v186 = vld [vmem:[%s180 + $0x20] sm:%s173]
                %187 = vst [vmem:[%s181 + $0x10] sm:%s173] %v186
                %v188 = vld [vmem:[%s180 + $0x30] sm:%s173]
                %189 = vst [vmem:[%s181 + $0x18] sm:%s173] %v188
                %v190 = vld [vmem:[%s180 + $0x40] sm:%s173]
                %191 = vst [vmem:[%s181 + $0x20] sm:%s173] %v190
                %v192 = vld [vmem:[%s180 + $0x50] sm:%s173]
                %193 = vst [vmem:[%s181 + $0x28] sm:%s173] %v192
                %v194 = vld [vmem:[%s180 + $0x60] sm:%s173]
                %195 = vst [vmem:[%s181 + $0x30] sm:%s173] %v194
                %v196 = vld [vmem:[%s180 + $0x70] sm:%s173]
                %197 = vst [vmem:[%s181 + $0x38] sm:%s173] %v196
                %v198 = vld [vmem:[%s180 + $0x80] sm:%s173]
                %199 = vst [vmem:[%s181 + $0x40] sm:%s173] %v198
                %v200 = vld [vmem:[%s180 + $0x90] sm:%s173]
                %201 = vst [vmem:[%s181 + $0x48] sm:%s173] %v200
                %v202 = vld [vmem:[%s180 + $0xa0] sm:%s173]
                %203 = vst [vmem:[%s181 + $0x50] sm:%s173] %v202
                %v204 = vld [vmem:[%s180 + $0xb0] sm:%s173]
                %205 = vst [vmem:[%s181 + $0x58] sm:%s173] %v204
                %v206 = vld [vmem:[%s180 + $0xc0] sm:%s173]
                %207 = vst [vmem:[%s181 + $0x60] sm:%s173] %v206
                %v208 = vld [vmem:[%s180 + $0xd0] sm:%s173]
                %209 = vst [vmem:[%s181 + $0x68] sm:%s173] %v208
                %v210 = vld [vmem:[%s180 + $0xe0] sm:%s173]
                %211 = vst [vmem:[%s181 + $0x70] sm:%s173] %v210
                %v212 = vld [vmem:[%s180 + $0xf0] sm:%s173]
                %213 = vst [vmem:[%s181 + $0x78] sm:%s173] %v212
                %v214 = vld [vmem:[%s180 + $0x100] sm:%s173]
                %215 = vst [vmem:[%s181 + $0x80] sm:%s173] %v214
                %v216 = vld [vmem:[%s180 + $0x110] sm:%s173]
                %217 = vst [vmem:[%s181 + $0x88] sm:%s173] %v216
              $region45: #{nst_forward.15} parent=39 // loop_footer
                %s179 = sadd.s32 1, %s175
              $region46: #{nst_forward.15} parent=39 // loop_footer_branch
                %174 = sbr.rel target = $region42
              $region47: #{nst_forward.15} parent=39 // loop_exit
                _
            $region40: #{nst_forward.15} parent=31 // pred_fallthru
              _
          $region32: #{nst_forward.15} parent=27 // pred_fallthru
            _
          %266 = vnop
        $region28: #{nst_forward.15} parent=23 // pred_fallthru
          _
      $region24: #{nst_forward.15} parent=5 // pred_fallthru
        _
      %p267 = scmp.le.s32.totalorder 1, %s9
      %p268 = scmp.lt.s32.totalorder %s9, 3
      %p269 = pnand %p267, %p268
      %p270 = pneg %p269
      // Predicated region
      $region63: #{nst_forward.15} parent=5 // pred_check
        _
      $region64: #{nst_forward.15} parent=5 // pred_check_branch
        %272 = sbr.rel (%p269) target = $region66
      $region65: #{nst_forward.15} parent=5 // pred_region
        %s273 = ssub.s32 %s9, 1
        %s274 = sand.u32 %s62, 1
        %s275 = sand.u32 %s62, 1
        %s276 = smul.addr %s275, 144
        %s277 = scalar_lea.vmem [#allocation3], %s276
        // Predicated region
        $region67: #{nst_forward.15} parent=65 // pred_check
          %p278 = pneg %p75
        $region68: #{nst_forward.15} parent=65 // pred_check_branch
          %280 = sbr.rel (%p278) target = $region70
        $region69: #{nst_forward.15} parent=65 // pred_region
          _
        $region70: #{nst_forward.15} parent=65 // pred_fallthru
          _
        %s281 = smul.u32 2, %s19
        %p282 = scmp.lt.s32.totalorder %s281, 1
        %s283 = scalar_select %p282, %s281, 1
        %s284 = smul.addr %s283, 2
        %s285 = scalar_lea.vmem %s0, %s284
        %p286 = pneg %p47
        %p287 = pneg %p44
        %s288 = sand.u32 %s62, 1
        %s289 = sand.u32 %s62, 1
        %s290 = smul.addr %s289, 144
        %s291 = scalar_lea.vmem [#allocation3], %s290
        %p292 = pneg %p75
        %p293 = pneg %p72
        %p294 = pneg %p96
        %p295 = pneg %p93
        %p296 = pneg %p122
        %p297 = pneg %p119
        %s298 = smul.u32 2, %s18
        %p299 = scmp.lt.s32.totalorder %s298, 3
        %s300 = scalar_select %p299, %s298, 3
        %s301 = smul.addr %s300, 4
        %s302 = scalar_lea.vmem %s3, %s301
        %s303 = smul.u32 2, %s19
        %p304 = scmp.lt.s32.totalorder %s303, 1
        %s305 = scalar_select %p304, %s303, 1
        %s306 = smul.addr %s305, 2
        %s307 = scalar_lea.vmem %s0, %s306
        %s308 = smul.u32 2, %s19
        %s309 = smul.u32 18, %s19
        %s310 = smul.u32 2, %s18
        %s311 = smul.u32 2, %s18
        %p312 = scmp.lt.s32.totalorder %s311, 3
        %s313 = scalar_select %p312, %s311, 3
        %s314 = smul.addr %s313, 4
        %s315 = scalar_lea.vmem %s3, %s314
        %s316 = smul.u32 2, %s18
        %p318 = scmp.eq.s32.totalorder %s19, 0
        // Predicated region
        $region71: #{nst_forward.15} parent=65 // pred_check
          %p319 = pneg %p318
        $region72: #{nst_forward.15} parent=65 // pred_check_branch
          %321 = sbr.rel (%p319) target = $region74
        $region73: #{nst_forward.15} parent=65 // pred_region
          %322 = vst [vmem:[#allocation2] sm:$0x77] 0.0
        $region74: #{nst_forward.15} parent=65 // pred_fallthru
          _
        %v323 = vld [vmem:[#allocation2] sm:$0x77]
        %v324 = vld [vmem:[%s307] sm:$0xf]
        %v325 = vld [vmem:[%s277] sm:$0xff]
        %v326 = vld [vmem:[%s277 + $0x8] sm:$0xff]
        %v327 = vld [vmem:[%s277 + $0x10] sm:$0xff]
        %v328 = vld [vmem:[%s277 + $0x18] sm:$0xff]
        %v329 = vld [vmem:[%s277 + $0x20] sm:$0xff]
        %v330 = vld [vmem:[%s277 + $0x28] sm:$0xff]
        %v331 = vld [vmem:[%s277 + $0x30] sm:$0xff]
        %v332 = vld [vmem:[%s277 + $0x38] sm:$0xff]
        %v333 = vld [vmem:[%s277 + $0x40] sm:$0xff]
        %v334 = vld [vmem:[%s277 + $0x48] sm:$0xff]
        %v335 = vld [vmem:[%s277 + $0x50] sm:$0xff]
        %v336 = vld [vmem:[%s277 + $0x58] sm:$0xff]
        %v337 = vld [vmem:[%s277 + $0x60] sm:$0xff]
        %v338 = vld [vmem:[%s277 + $0x68] sm:$0xff]
        %v339 = vld [vmem:[%s277 + $0x70] sm:$0xff]
        %v340 = vld [vmem:[%s277 + $0x78] sm:$0xff]
        %v341 = vld [vmem:[%s277 + $0x80] sm:$0xff]
        %v342 = vld [vmem:[%s277 + $0x88] sm:$0xff]
        %344 = vst [vmem:[#allocation1] ss:$4 sm:$0xff] %v324
        %v345 = vld.sshfl [vmem:[#allocation1] sm:$0xff pattern:$0x73625140]
        %v346 = vld.sshfl [vmem:[#allocation1 + $0x8] sm:$0xff pattern:$0x73625140]
        %v366 = vunpack.c.l.b16 %v325
        %v367 = vunpack.c.h.b16 %v325
        %v368 = vunpack.c.l.b16 %v326
        %v369 = vunpack.c.h.b16 %v326
        %v370 = vunpack.c.l.b16 %v327
        %v371 = vunpack.c.h.b16 %v327
        %v372 = vunpack.c.l.b16 %v328
        %v373 = vunpack.c.h.b16 %v328
        %v374 = vunpack.c.l.b16 %v329
        %v375 = vunpack.c.h.b16 %v329
        %v376 = vunpack.c.l.b16 %v330
        %v377 = vunpack.c.h.b16 %v330
        %v378 = vunpack.c.l.b16 %v331
        %v379 = vunpack.c.h.b16 %v331
        %v380 = vunpack.c.l.b16 %v332
        %v381 = vunpack.c.h.b16 %v332
        %v382 = vunpack.c.l.b16 %v333
        %v383 = vunpack.c.h.b16 %v333
        %v384 = vunpack.c.l.b16 %v334
        %v385 = vunpack.c.h.b16 %v334
        %v386 = vunpack.c.l.b16 %v335
        %v387 = vunpack.c.h.b16 %v335
        %v388 = vunpack.c.l.b16 %v336
        %v389 = vunpack.c.h.b16 %v336
        %v390 = vunpack.c.l.b16 %v337
        %v391 = vunpack.c.h.b16 %v337
        %v392 = vunpack.c.l.b16 %v338
        %v393 = vunpack.c.h.b16 %v338
        %v394 = vunpack.c.l.b16 %v339
        %v395 = vunpack.c.h.b16 %v339
        %v396 = vunpack.c.l.b16 %v340
        %v397 = vunpack.c.h.b16 %v340
        %v398 = vunpack.c.l.b16 %v341
        %v399 = vunpack.c.h.b16 %v341
        %v400 = vunpack.c.l.b16 %v342
        %v401 = vunpack.c.h.b16 %v342
        %v402 = vpack.c.b16 %v368, %v366
        %v403 = vpack.c.b16 %v369, %v367
        %v404 = vpack.c.b16 %v372, %v370
        %v405 = vpack.c.b16 %v373, %v371
        %v406 = vpack.c.b16 %v376, %v374
        %v407 = vpack.c.b16 %v377, %v375
        %v408 = vpack.c.b16 %v380, %v378
        %v409 = vpack.c.b16 %v381, %v379
        %v410 = vpack.c.b16 %v384, %v382
        %v411 = vpack.c.b16 %v385, %v383
        %v412 = vpack.c.b16 %v388, %v386
        %v413 = vpack.c.b16 %v389, %v387
        %v414 = vpack.c.b16 %v392, %v390
        %v415 = vpack.c.b16 %v393, %v391
        %v416 = vpack.c.b16 %v396, %v394
        %v417 = vpack.c.b16 %v397, %v395
        %v418 = vpack.c.b16 %v400, %v398
        %v419 = vpack.c.b16 %v401, %v399
        %vm438 = vcmask 130048
        %v439 = vsel %vm438, %v346, 0
        %441 = vmatpush.bf16.msra.mxu0 %v416
        %442 = vmatpush.bf16.msra.mxu0 %v414
        %443 = vmatpush.bf16.msra.mxu0 %v412
        %444 = vmatpush.bf16.msra.mxu0 %v410
        %445 = vmatpush.bf16.msra.mxu0 %v408
        %446 = vmatpush.bf16.msra.mxu0 %v406
        %447 = vmatpush.bf16.msra.mxu0 %v404
        %448 = vmatpush.bf16.msra.mxu0 %v402
        %449 = vmatmul.bf16.gmra.mxu0 %v345
        %v450 = vpop.f32.mrf.mxu0
        %v451 = vadd.f32 0.0, %v450
        %v452 = vpop.f32.mrf.mxu0
        %453 = vdwg.mxu0
        %454 = vmatpush.bf16.msra.mxu0 0
        %455 = vmatpush.bf16.msra.mxu0 0
        %456 = vmatpush.bf16.msra.mxu0 0
        %457 = vmatpush.bf16.msra.mxu0 0
        %458 = vmatpush.bf16.msra.mxu0 0
        %459 = vmatpush.bf16.msra.mxu0 0
        %460 = vmatpush.bf16.msra.mxu0 0
        %461 = vmatpush.bf16.msra.mxu0 %v418
        %462 = vmatmul.bf16.gmra.mxu0 %v439
        %v463 = vpop.f32.mrf.mxu0
        %v464 = vadd.f32 %v451, %v463
        %v465 = vpop.f32.mrf.mxu0
        %466 = vdwg.mxu0
        %467 = vmatpush.bf16.msra.mxu0 %v417
        %468 = vmatpush.bf16.msra.mxu0 %v415
        %469 = vmatpush.bf16.msra.mxu0 %v413
        %470 = vmatpush.bf16.msra.mxu0 %v411
        %471 = vmatpush.bf16.msra.mxu0 %v409
        %472 = vmatpush.bf16.msra.mxu0 %v407
        %473 = vmatpush.bf16.msra.mxu0 %v405
        %474 = vmatpush.bf16.msra.mxu0 %v403
        %475 = vmatmul.bf16.gmra.mxu0 %v345
        %v476 = vpop.f32.mrf.mxu0
        %v477 = vadd.f32 0.0, %v476
        %v478 = vpop.f32.mrf.mxu0
        %479 = vdwg.mxu0
        %480 = vmatpush.bf16.msra.mxu0 0
        %481 = vmatpush.bf16.msra.mxu0 0
        %482 = vmatpush.bf16.msra.mxu0 0
        %483 = vmatpush.bf16.msra.mxu0 0
        %484 = vmatpush.bf16.msra.mxu0 0
        %485 = vmatpush.bf16.msra.mxu0 0
        %486 = vmatpush.bf16.msra.mxu0 0
        %487 = vmatpush.bf16.msra.mxu0 %v419
        %488 = vmatmul.bf16.gmra.mxu0 %v439
        %v489 = vpop.f32.mrf.mxu0
        %v490 = vadd.f32 %v477, %v489
        %v491 = vpop.f32.mrf.mxu0
        %492 = vdwg.mxu0
        %v495 = vrot.slane %v490, 4
        %vm496 = vcmask 1043456
        %v497 = vsel %vm496, %v464, %v495
        %v499 = vadd.f32 %v323, %v497
        %500 = vst [vmem:[#allocation2] sm:$0x77] %v499
        // Predicated region
        $region75: #{nst_forward.15} parent=65 // pred_check
          %p501 = pneg %p318
        $region76: #{nst_forward.15} parent=65 // pred_check_branch
          %503 = sbr.rel (%p501) target = $region78
        $region77: #{nst_forward.15} parent=65 // pred_region
          %v504 = vld [vmem:[#allocation2] sm:$0x77]
          %v505 = vld [vmem:[%s2] sm:$0x7]
          %507 = vset.pattern.permute.xlu0 0
          %508 = vperm.xlu0 %507, %v505
          %v509 = vpop.permute.xlu0 %508
          %v511 = vunpack.c.l.s4 839922192
          %v512 = vunpack.c.0.s8 %v511
          %v513 = vperm.slane %v509, %v512
          %v515 = vadd.f32 %v504, %v513
          %516 = vst [vmem:[%s315] sm:$0x77] %v515
        $region78: #{nst_forward.15} parent=65 // pred_fallthru
          _
        %s517 = smul.u32 2, %s18
        %p518 = scmp.lt.s32.totalorder %s517, 3
        %s519 = scalar_select %p518, %s517, 3
        %s520 = smul.addr %s519, 4
        %s521 = scalar_lea.vmem %s3, %s520
        // Predicated region
        $region79: #{nst_forward.15} parent=65 // pred_check
          %p522 = pneg %p119
        $region80: #{nst_forward.15} parent=65 // pred_check_branch
          %524 = sbr.rel (%p522) target = $region82
        $region81: #{nst_forward.15} parent=65 // pred_region
          %s525 = smul.u32 2, %s18
        $region82: #{nst_forward.15} parent=65 // pred_fallthru
          _
      $region66: #{nst_forward.15} parent=5 // pred_fallthru
        _
      %p526 = scmp.le.s32.totalorder 2, %s9
      // Predicated region
      $region83: #{nst_forward.15} parent=5 // pred_check
        %p527 = pneg %p526
      $region84: #{nst_forward.15} parent=5 // pred_check_branch
        %529 = sbr.rel (%p527) target = $region86
      $region85: #{nst_forward.15} parent=5 // pred_region
        %s530 = ssub.s32 %s9, 2
        // Predicated region
        $region87: #{nst_forward.15} parent=85 // pred_check
          %p531 = pneg %p125
        $region88: #{nst_forward.15} parent=85 // pred_check_branch
          %533 = sbr.rel (%p531) target = $region90
        $region89: #{nst_forward.15} parent=85 // pred_region
          %s534 = smul.u32 2, %s20
          %p535 = scmp.lt.s32.totalorder %s534, 3
          %s536 = scalar_select %p535, %s534, 3
          %s537 = smul.addr %s536, 4
          %s538 = scalar_lea.vmem %s3, %s537
        $region90: #{nst_forward.15} parent=85 // pred_fallthru
          _
      $region86: #{nst_forward.15} parent=5 // pred_fallthru
        _
    $region6: #{nst_forward.15} parent=1 // loop_footer
      %s13 = sadd.s32 1, %s9
    $region7: #{nst_forward.15} parent=1 // loop_footer_branch
      %8 = sbr.rel target = $region3
    $region8: #{nst_forward.15} parent=1 // loop_exit
      _

</llo_original>
